<compile_context>
chip_gen: v7x
topology: tpu7x:2x2x1
jax: 0.10.0
libtpu: 0.0.40
codegen_flags: <defaults>
</compile_context>

<pallas_src>
import jax
import jax.numpy as jnp
from jax.experimental import pallas as pl
from jax.experimental.pallas import tpu as pltpu

C_IN = 4        # channel_in
C_OUT = 6       # channel_out (number of actions)
H = W = 3       # spatial size implied by flatten() -> Linear(in_features=640)
K_IN = 64       # flattened state (36) zero-padded to 64 lanes
OUT_PAD = 128   # lane-dense padded output width (first C_OUT columns are real)


# ----------------------------------------------------------------------------- tiling policy
def _tile_b_cap():
    """Max batch tile: 512 fills the 256-wide MXUs on v6e/v7x; 256 is enough on 128-wide parts."""
    try:
        kind = jax.devices()[0].device_kind.lower()
    except Exception:
        return 512
    if any(t in kind for t in ("v2", "v3", "v4", "v5e", "v5 lite", "v5lite")):
        return 256
    return 512


def _pick_tile_b(batch):
    """Generation-aware tile, clamped so the grid has >=2 steps when the batch allows
    (keeps both v7x TensorCores busy); always a multiple of 128 for MXU/sublane alignment."""
    cap = _tile_b_cap()
    half = -(-batch // 2)                       # ceil(batch / 2)
    t = ((half + 127) // 128) * 128             # round up to multiple of 128
    return max(128, min(cap, t))


# ----------------------------------------------------------------------------- kernel
def dqn_kernel(x_ref,                   # (TILE_B, 64)  bf16   flattened state (zero-padded)
               w0_ref, b0_ref,          # (64, 512) bf16, (1, 512) f32   im2col+conv0 folded
               w1_ref, b1_ref,          # (512, 640) bf16, (1, 640) f32  conv1 as matmul
               wl0_ref, bl0_ref,        # (640, 256) bf16, (1, 256) f32
               wl1_ref, bl1_ref,        # (256, 128) bf16, (1, 128) f32  zero-padded head
               out_ref):                # (TILE_B, 128) bf16
    # conv0 + relu : im2col selection pre-composed into the block-diagonal conv0 weight
    h0 = jnp.dot(x_ref[...], w0_ref[...], preferred_element_type=jnp.float32)
    h0 = jnp.maximum(h0 + b0_ref[...], 0.0).astype(jnp.bfloat16)          # (TILE_B, 512)

    # conv1 + relu : full 2x2 reduction collapsed into a single matmul (== flatten)
    h1 = jnp.dot(h0, w1_ref[...], preferred_element_type=jnp.float32)
    h1 = jnp.maximum(h1 + b1_ref[...], 0.0).astype(jnp.bfloat16)          # (TILE_B, 640)

    # linear0 + relu
    h2 = jnp.dot(h1, wl0_ref[...], preferred_element_type=jnp.float32)
    h2 = jnp.maximum(h2 + bl0_ref[...], 0.0).astype(jnp.bfloat16)         # (TILE_B, 256)

    # linear1 + relu (padded to 128 lanes; pad columns are exactly 0), stored bf16
    h3 = jnp.dot(h2, wl1_ref[...], preferred_element_type=jnp.float32)
    out_ref[...] = jnp.maximum(h3 + bl1_ref[...], 0.0).astype(out_ref.dtype)


# ----------------------------------------------------------------------------- packing
def pack_params(params):
    """One-time weight repacking: im2col folded into conv0, block-diag over the 4 output
    taps, transposes, bf16 cast, and zero-padding of the Q-value head to 128 lanes."""
    w0, b0, w1, b1, wl0, bl0, wl1, bl1 = params

    # conv0 (128, C_IN, 2, 2) folded with the im2col selection:
    #   x_flat index src = ci*9 + (oh+kh)*3 + (ow+kw);  h0 column = s*128 + co, s = oh*2+ow.
    w0_fold = jnp.zeros((K_IN, 4 * 128), jnp.float32)
    for s, (oh, ow) in enumerate(((0, 0), (0, 1), (1, 0), (1, 1))):
        for ci in range(C_IN):
            for kh in range(2):
                for kw in range(2):
                    src = ci * 9 + (oh + kh) * 3 + (ow + kw)
                    w0_fold = w0_fold.at[src, s * 128:(s + 1) * 128].set(w0[:, ci, kh, kw])
    b0t = jnp.tile(b0, 4).reshape(1, 4 * 128)                              # (1, 512)

    # conv1 (640, 128, 2, 2) -> rows ordered (s = kh*2+kw, ci) -> (512, 640)
    w1m = jnp.transpose(w1, (2, 3, 1, 0)).reshape(4 * 128, 640)
    b1r = b1.reshape(1, 640)

    # linear weights: (out, in) -> (in, out); head zero-padded to 128 lanes
    wl0m = jnp.transpose(wl0, (1, 0))                                      # (640, 256)
    bl0r = bl0.reshape(1, 256)
    wl1p = jnp.zeros((256, OUT_PAD), jnp.float32).at[:, :C_OUT].set(jnp.transpose(wl1, (1, 0)))
    bl1p = jnp.zeros((1, OUT_PAD), jnp.float32).at[0, :C_OUT].set(bl1)

    bf16 = lambda a: a.astype(jnp.bfloat16)
    f32 = lambda a: a.astype(jnp.float32)
    return (bf16(w0_fold), f32(b0t), bf16(w1m), f32(b1r),
            bf16(wl0m), f32(bl0r), bf16(wl1p), f32(bl1p))


# ----------------------------------------------------------------------------- forward
@jax.jit
def dqn_forward(x, packed):
    """x: (B, C_IN, 3, 3) f32, packed = pack_params(params). Returns (B, C_OUT) f32."""
    w0f, b0t, w1m, b1r, wl0m, bl0r, wl1p, bl1p = packed
    B = x.shape[0]
    TILE_B = _pick_tile_b(B)
    Bp = pl.cdiv(B, TILE_B) * TILE_B
    grid = (Bp // TILE_B,)

    # Raw flattened state (NCHW flatten order == torch), zero-padded to 64 lanes + batch pad.
    x_flat = x.astype(jnp.float32).reshape(B, C_IN * H * W).astype(jnp.bfloat16)
    x_flat = jnp.pad(x_flat, ((0, Bp - B), (0, K_IN - C_IN * H * W)))      # (Bp, 64)

    flops = 2 * (K_IN * 512 + 512 * 640 + 640 * 256 + 256 * OUT_PAD) * Bp
    weight_bytes = sum(int(a.size) * a.dtype.itemsize
                       for a in (w0f, b0t, w1m, b1r, wl0m, bl0r, wl1p, bl1p))
    bytes_accessed = weight_bytes + Bp * K_IN * 2 + Bp * OUT_PAD * 2

    out = pl.pallas_call(
        dqn_kernel,
        out_shape=jax.ShapeDtypeStruct((Bp, OUT_PAD), jnp.bfloat16),
        grid=grid,
        in_specs=[
            pl.BlockSpec((TILE_B, K_IN), lambda i: (i, 0)),      # activations: tiled over batch
            pl.BlockSpec((K_IN, 512), lambda i: (0, 0)),         # weights: constant block index
            pl.BlockSpec((1, 512), lambda i: (0, 0)),            #   -> copied once per call
            pl.BlockSpec((512, 640), lambda i: (0, 0)),
            pl.BlockSpec((1, 640), lambda i: (0, 0)),
            pl.BlockSpec((640, 256), lambda i: (0, 0)),
            pl.BlockSpec((1, 256), lambda i: (0, 0)),
            pl.BlockSpec((256, OUT_PAD), lambda i: (0, 0)),
            pl.BlockSpec((1, OUT_PAD), lambda i: (0, 0)),
        ],
        out_specs=pl.BlockSpec((TILE_B, OUT_PAD), lambda i: (i, 0)),
        compiler_params=pltpu.CompilerParams(
            dimension_semantics=("parallel",),                    # batch axis -> both TCs on v7x
            vmem_limit_bytes=32 * 1024 * 1024),                   # safe on every generation
        cost_estimate=pl.CostEstimate(flops=flops, transcendentals=0,
                                      bytes_accessed=bytes_accessed),
    )(x_flat, w0f, b0t, w1m, b1r, wl0m, bl0r, wl1p, bl1p)

    return out[:B, :C_OUT].astype(jnp.float32)


def dqn_forward_single(x, packed):
    """Convenience wrapper matching the original module's single-state API."""
    return dqn_forward(x[None], packed)[0]


# ----------------------------------------------------------------------------- reference / init
def init_params(key):
    ks = jax.random.split(key, 8)
    def u(k, shape, fan_in):
        bound = 1.0 / jnp.sqrt(fan_in)
        return jax.random.uniform(k, shape, jnp.float32, -bound, bound)
    w0 = u(ks[0], (128, C_IN, 2, 2), C_IN * 4)
    b0 = u(ks[1], (128,), C_IN * 4)
    w1 = u(ks[2], (640, 128, 2, 2), 128 * 4)
    b1 = u(ks[3], (640,), 128 * 4)
    wl0 = u(ks[4], (256, 640), 640)
    bl0 = u(ks[5], (256,), 640)
    wl1 = u(ks[6], (C_OUT, 256), 256)
    bl1 = u(ks[7], (C_OUT,), 256)
    return (w0, b0, w1, b1, wl0, bl0, wl1, bl1)


def reference_forward(x, params):
    """Independent pure-JAX f32 reference using real conv ops (PyTorch semantics)."""
    w0, b0, w1, b1, wl0, bl0, wl1, bl1 = params
    dn = ('NCHW', 'OIHW', 'NCHW')
    h = jax.lax.conv_general_dilated(x, w0, (1, 1), 'VALID', dimension_numbers=dn)
    h = jnp.maximum(h + b0[None, :, None, None], 0.0)             # (B, 128, 2, 2)
    h = jax.lax.conv_general_dilated(h, w1, (1, 1), 'VALID', dimension_numbers=dn)
    h = jnp.maximum(h + b1[None, :, None, None], 0.0)             # (B, 640, 1, 1)
    h = h.reshape(x.shape[0], -1)                                  # per-sample flatten -> (B, 640)
    h = jnp.maximum(h @ wl0.T + bl0, 0.0)
    h = jnp.maximum(h @ wl1.T + bl1, 0.0)                          # module applies relu after linear1
    return h


if __name__ == "__main__":
    key = jax.random.PRNGKey(0)
    kx, kp = jax.random.split(key)
    B = 300                                                        # -> TILE_B=256, 2 grid steps
    x = jax.random.normal(kx, (B, C_IN, H, W), dtype=jnp.float32)
    params = init_params(kp)
    packed = pack_params(params)                                   # one-time packing (off hot path)

    out = jax.block_until_ready(dqn_forward(x, packed))
    ref = reference_forward(x, params)
    assert out.shape == (B, C_OUT)
    # bf16 weights/activations/output (f32 accumulation) vs pure-f32 reference -> loose tolerance.
    # Note: for near-tied Q-values the argmax action may differ from a pure-f32 DQN.
    assert jnp.allclose(out, ref, atol=3e-2, rtol=3e-2), float(jnp.max(jnp.abs(out - ref)))

    one = jax.block_until_ready(dqn_forward_single(x[0], packed)) # single-state API path
    assert jnp.allclose(one, ref[0], atol=3e-2, rtol=3e-2)
    print("KERNEL_OK")
</pallas_src>

<mosaic_0001>
module attributes {stable_mosaic.version = 11 : i64} {
  func.func @dqn_kernel(%arg0: i32, %arg1: memref<256x64xbf16, #tpu.memory_space<vmem>>, %arg2: memref<64x512xbf16, #tpu.memory_space<vmem>>, %arg3: memref<1x512xf32, #tpu.memory_space<vmem>>, %arg4: memref<512x640xbf16, #tpu.memory_space<vmem>>, %arg5: memref<1x640xf32, #tpu.memory_space<vmem>>, %arg6: memref<640x256xbf16, #tpu.memory_space<vmem>>, %arg7: memref<1x256xf32, #tpu.memory_space<vmem>>, %arg8: memref<256x128xbf16, #tpu.memory_space<vmem>>, %arg9: memref<1x128xf32, #tpu.memory_space<vmem>>, %arg10: memref<256x128xbf16, #tpu.memory_space<vmem>>) attributes {dimension_semantics = [#tpu.dimension_semantics<parallel>], iteration_bounds = array<i64: 2>, scalar_prefetch = 0 : i64, scratch_operands = 0 : i64, tpu.core_type = #tpu.core_type<tc>, window_params = [{transform_indices = @transform_0, window_bounds = array<i64: 256, 64>}, {pipeline_mode = #tpu.pipeline_mode<synchronous>, transform_indices = @transform_1, window_bounds = array<i64: 64, 512>}, {pipeline_mode = #tpu.pipeline_mode<synchronous>, transform_indices = @transform_2, window_bounds = array<i64: 1, 512>}, {pipeline_mode = #tpu.pipeline_mode<synchronous>, transform_indices = @transform_3, window_bounds = array<i64: 512, 640>}, {pipeline_mode = #tpu.pipeline_mode<synchronous>, transform_indices = @transform_4, window_bounds = array<i64: 1, 640>}, {pipeline_mode = #tpu.pipeline_mode<synchronous>, transform_indices = @transform_5, window_bounds = array<i64: 640, 256>}, {pipeline_mode = #tpu.pipeline_mode<synchronous>, transform_indices = @transform_6, window_bounds = array<i64: 1, 256>}, {pipeline_mode = #tpu.pipeline_mode<synchronous>, transform_indices = @transform_7, window_bounds = array<i64: 256, 128>}, {pipeline_mode = #tpu.pipeline_mode<synchronous>, transform_indices = @transform_8, window_bounds = array<i64: 1, 128>}, {transform_indices = @transform_9, window_bounds = array<i64: 256, 128>}]} {
    %c0 = arith.constant 0 : index
    %c0_0 = arith.constant 0 : index
    %0 = vector.load %arg1[%c0, %c0_0] : memref<256x64xbf16, #tpu.memory_space<vmem>>, vector<256x64xbf16>
    %c0_1 = arith.constant 0 : index
    %c0_2 = arith.constant 0 : index
    %1 = vector.load %arg2[%c0_1, %c0_2] : memref<64x512xbf16, #tpu.memory_space<vmem>>, vector<64x512xbf16>
    %cst = arith.constant dense<0.000000e+00> : vector<256x512xf32>
    %2 = tpu.matmul %0, %1, %cst {dimension_numbers = #tpu.dot_dimension_numbers<[1], [0], [0], [1], [0, 0, 1, 1], [], []>} : vector<256x64xbf16>, vector<64x512xbf16>, vector<256x512xf32> -> vector<256x512xf32>
    %c0_3 = arith.constant 0 : index
    %c0_4 = arith.constant 0 : index
    %3 = vector.load %arg3[%c0_3, %c0_4] : memref<1x512xf32, #tpu.memory_space<vmem>>, vector<1x512xf32>
    %4 = vector.broadcast %3 : vector<1x512xf32> to vector<256x512xf32>
    %5 = arith.addf %2, %4 : vector<256x512xf32>
    %cst_5 = arith.constant 0.000000e+00 : f32
    %6 = vector.broadcast %cst_5 : f32 to vector<256x512xf32>
    %7 = arith.maximumf %5, %6 : vector<256x512xf32>
    %8 = arith.truncf %7 : vector<256x512xf32> to vector<256x512xbf16>
    %c0_6 = arith.constant 0 : index
    %c0_7 = arith.constant 0 : index
    %9 = vector.load %arg4[%c0_6, %c0_7] : memref<512x640xbf16, #tpu.memory_space<vmem>>, vector<512x640xbf16>
    %cst_8 = arith.constant dense<0.000000e+00> : vector<256x640xf32>
    %10 = tpu.matmul %8, %9, %cst_8 {dimension_numbers = #tpu.dot_dimension_numbers<[1], [0], [0], [1], [0, 0, 1, 1], [], []>} : vector<256x512xbf16>, vector<512x640xbf16>, vector<256x640xf32> -> vector<256x640xf32>
    %c0_9 = arith.constant 0 : index
    %c0_10 = arith.constant 0 : index
    %11 = vector.load %arg5[%c0_9, %c0_10] : memref<1x640xf32, #tpu.memory_space<vmem>>, vector<1x640xf32>
    %12 = vector.broadcast %11 : vector<1x640xf32> to vector<256x640xf32>
    %13 = arith.addf %10, %12 : vector<256x640xf32>
    %cst_11 = arith.constant 0.000000e+00 : f32
    %14 = vector.broadcast %cst_11 : f32 to vector<256x640xf32>
    %15 = arith.maximumf %13, %14 : vector<256x640xf32>
    %16 = arith.truncf %15 : vector<256x640xf32> to vector<256x640xbf16>
    %c0_12 = arith.constant 0 : index
    %c0_13 = arith.constant 0 : index
    %17 = vector.load %arg6[%c0_12, %c0_13] : memref<640x256xbf16, #tpu.memory_space<vmem>>, vector<640x256xbf16>
    %cst_14 = arith.constant dense<0.000000e+00> : vector<256x256xf32>
    %18 = tpu.matmul %16, %17, %cst_14 {dimension_numbers = #tpu.dot_dimension_numbers<[1], [0], [0], [1], [0, 0, 1, 1], [], []>} : vector<256x640xbf16>, vector<640x256xbf16>, vector<256x256xf32> -> vector<256x256xf32>
    %c0_15 = arith.constant 0 : index
    %c0_16 = arith.constant 0 : index
    %19 = vector.load %arg7[%c0_15, %c0_16] : memref<1x256xf32, #tpu.memory_space<vmem>>, vector<1x256xf32>
    %20 = vector.broadcast %19 : vector<1x256xf32> to vector<256x256xf32>
    %21 = arith.addf %18, %20 : vector<256x256xf32>
    %cst_17 = arith.constant 0.000000e+00 : f32
    %22 = vector.broadcast %cst_17 : f32 to vector<256x256xf32>
    %23 = arith.maximumf %21, %22 : vector<256x256xf32>
    %24 = arith.truncf %23 : vector<256x256xf32> to vector<256x256xbf16>
    %c0_18 = arith.constant 0 : index
    %c0_19 = arith.constant 0 : index
    %25 = vector.load %arg8[%c0_18, %c0_19] : memref<256x128xbf16, #tpu.memory_space<vmem>>, vector<256x128xbf16>
    %cst_20 = arith.constant dense<0.000000e+00> : vector<256x128xf32>
    %26 = tpu.matmul %24, %25, %cst_20 {dimension_numbers = #tpu.dot_dimension_numbers<[1], [0], [0], [1], [0, 0, 1, 1], [], []>} : vector<256x256xbf16>, vector<256x128xbf16>, vector<256x128xf32> -> vector<256x128xf32>
    %c0_21 = arith.constant 0 : index
    %c0_22 = arith.constant 0 : index
    %27 = vector.load %arg9[%c0_21, %c0_22] : memref<1x128xf32, #tpu.memory_space<vmem>>, vector<1x128xf32>
    %28 = vector.broadcast %27 : vector<1x128xf32> to vector<256x128xf32>
    %29 = arith.addf %26, %28 : vector<256x128xf32>
    %cst_23 = arith.constant 0.000000e+00 : f32
    %30 = vector.broadcast %cst_23 : f32 to vector<256x128xf32>
    %31 = arith.maximumf %29, %30 : vector<256x128xf32>
    %32 = arith.truncf %31 : vector<256x128xf32> to vector<256x128xbf16>
    %c0_24 = arith.constant 0 : index
    %c0_25 = arith.constant 0 : index
    %33 = vector.load %arg10[%c0_24, %c0_25] : memref<256x128xbf16, #tpu.memory_space<vmem>>, vector<256x128xbf16>
    tpu.vector_store %arg10[%c0_24, %c0_25], %32 {strides = array<i32>} : memref<256x128xbf16, #tpu.memory_space<vmem>>, vector<256x128xbf16>,
    return
  }
  func.func @transform_0(%arg0: i32) -> (i32, i32) {
    %c0_i32 = arith.constant 0 : i32
    %c0_i32_0 = arith.constant 0 : i32
    return %arg0, %c0_i32 : i32, i32
  }
  func.func @transform_1(%arg0: i32) -> (i32, i32) {
    %c0_i32 = arith.constant 0 : i32
    %c0_i32_0 = arith.constant 0 : i32
    %c0_i32_1 = arith.constant 0 : i32
    return %c0_i32, %c0_i32_0 : i32, i32
  }
  func.func @transform_2(%arg0: i32) -> (i32, i32) {
    %c0_i32 = arith.constant 0 : i32
    %c0_i32_0 = arith.constant 0 : i32
    %c0_i32_1 = arith.constant 0 : i32
    return %c0_i32, %c0_i32_0 : i32, i32
  }
  func.func @transform_3(%arg0: i32) -> (i32, i32) {
    %c0_i32 = arith.constant 0 : i32
    %c0_i32_0 = arith.constant 0 : i32
    %c0_i32_1 = arith.constant 0 : i32
    return %c0_i32, %c0_i32_0 : i32, i32
  }
  func.func @transform_4(%arg0: i32) -> (i32, i32) {
    %c0_i32 = arith.constant 0 : i32
    %c0_i32_0 = arith.constant 0 : i32
    %c0_i32_1 = arith.constant 0 : i32
    return %c0_i32, %c0_i32_0 : i32, i32
  }
  func.func @transform_5(%arg0: i32) -> (i32, i32) {
    %c0_i32 = arith.constant 0 : i32
    %c0_i32_0 = arith.constant 0 : i32
    %c0_i32_1 = arith.constant 0 : i32
    return %c0_i32, %c0_i32_0 : i32, i32
  }
  func.func @transform_6(%arg0: i32) -> (i32, i32) {
    %c0_i32 = arith.constant 0 : i32
    %c0_i32_0 = arith.constant 0 : i32
    %c0_i32_1 = arith.constant 0 : i32
    return %c0_i32, %c0_i32_0 : i32, i32
  }
  func.func @transform_7(%arg0: i32) -> (i32, i32) {
    %c0_i32 = arith.constant 0 : i32
    %c0_i32_0 = arith.constant 0 : i32
    %c0_i32_1 = arith.constant 0 : i32
    return %c0_i32, %c0_i32_0 : i32, i32
  }
  func.func @transform_8(%arg0: i32) -> (i32, i32) {
    %c0_i32 = arith.constant 0 : i32
    %c0_i32_0 = arith.constant 0 : i32
    %c0_i32_1 = arith.constant 0 : i32
    return %c0_i32, %c0_i32_0 : i32, i32
  }
  func.func @transform_9(%arg0: i32) -> (i32, i32) {
    %c0_i32 = arith.constant 0 : i32
    %c0_i32_0 = arith.constant 0 : i32
    return %arg0, %c0_i32 : i32, i32
  }
}

</mosaic_0001>

<llo_original>
// kernel: dqn_forward.1
$region0: #{dqn_forward.1}
  #allocation0 [shape = 'u32[]', space=smem, size = 0x4, offset = 0x4, fixed_abs, tag = 'smem constant byte address 0x4 - core index']
  #allocation1 [shape = 'u32[144,128]{1,0:T(1,128)}', space=vmem, size = 0x12000, scoped, tag = 'internal scratch']
  %s0 = inlined_call_operand.vmem [shape: bf16[512,64], index: 0, kind: input, shape index: {}]
  %s1 = inlined_call_operand.vmem [shape: bf16[64,512], index: 1, kind: input, shape index: {}]
  %s2 = inlined_call_operand.vmem [shape: f32[1,512], index: 2, kind: input, shape index: {}]
  %s3 = inlined_call_operand.hbm [shape: bf16[512,640], index: 3, kind: input, shape index: {}]
  %s4 = inlined_call_operand.vmem [shape: f32[1,640], index: 4, kind: input, shape index: {}]
  %s5 = inlined_call_operand.vmem [shape: bf16[640,256], index: 5, kind: input, shape index: {}]
  %s6 = inlined_call_operand.vmem [shape: f32[1,256], index: 6, kind: input, shape index: {}]
  %s7 = inlined_call_operand.vmem [shape: bf16[256,128], index: 7, kind: input, shape index: {}]
  %s8 = inlined_call_operand.vmem [shape: f32[1,128], index: 8, kind: input, shape index: {}]
  %s9 = inlined_call_operand.vmem [shape: bf16[512,128], index: 9, kind: output, shape index: {}]
  %s10 = sld [smem:[#allocation0]]
  $region73: #{dqn_forward.1} parent=0
    _
  %s12 = ssub.s32 1, %s10
  %s13 = scalar_select 0, %s12, %s10
  $region1: #{dqn_forward.1} parent=0
    #allocation2 [shape = 'u8[655360]{0}', space=vmem, size = 0xa0000, scoped, tag = 'input window, operand 3, single buffered']
    #allocation3 [shape = 's32[2]{0}', space=sflag, size = 0x8, scoped, tag = 'scoped memory for dqn_forward.1']
    %14 = vsyncpa [#allocation3], 0
    loop: start=0, step=1, limit=4
    $region2: #{dqn_forward.1} parent=1 // loop_pre_header
      _
    $region3: #{dqn_forward.1} parent=1 // loop_header
      %s16 = sphi 0, %s20
      %p17 = scmp.ge.s32.totalorder %s16, 4
      %s26 = sphi 0, %s28
      %s29 = sphi 0, %s26
      %s30 = sphi 0, %s29
      %s46 = sphi 0, %s30
      %s50 = sphi 0, %s50
      %s52 = sphi 0, %s50
      %s53 = sphi 0, %s52
      %s67 = sphi 0, %s53
      %s71 = sphi 0, %s71
      %s73 = sphi 0, %s71
      %s74 = sphi 0, %s73
      %s88 = sphi 0, %s74
      %s92 = sphi 0, %s92
      %s94 = sphi 0, %s92
      %s95 = sphi 0, %s94
      %s109 = sphi 0, %s95
      %s113 = sphi 0, %s113
      %s115 = sphi 0, %s113
      %s116 = sphi 0, %s115
      %s130 = sphi 0, %s116
      %s134 = sphi 0, %s134
      %s136 = sphi 0, %s134
      %s137 = sphi 0, %s136
      %s151 = sphi 0, %s137
      %s155 = sphi 0, %s155
      %s157 = sphi 0, %s155
      %s158 = sphi 0, %s157
      %s172 = sphi 0, %s158
      %s176 = sphi 0, %s176
      %s178 = sphi 0, %s176
      %s179 = sphi 0, %s178
      %s193 = sphi 0, %s179
      %s197 = sphi 0, %s197
      %s199 = sphi 0, %s197
      %s200 = sphi 0, %s199
      %s214 = sphi 0, %s200
      %s220 = sphi 0, %s222
      %s223 = sphi 0, %s220
      %s224 = sphi 0, %s223
      %s240 = sphi 0, %s224
    $region4: #{dqn_forward.1} parent=1 // loop_header_branch
      %19 = sbr.rel (%p17) target = $region8
    $region5: #{dqn_forward.1} parent=1 // loop_body
      %s21 = ssub.s32 %s16, 1
      %s22 = ssub.s32 %s16, 2
      %s23 = sadd.s32 %s16, 1
      %s24 = ssub.s32 %s16, %s23
      %p25 = scmp.eq.s32.totalorder %s24, 0
      %s27 = sadd.s32 %s26, 1
      %s28 = scalar_select %p25, %s26, %s27
      %p31 = pneg %p25
      %p32 = scmp.eq.s32.totalorder %s16, 1
      %p33 = por %p31, %p32
      %p34 = scmp.ne.s32.totalorder %s26, %s29
      %p35 = scmp.eq.s32.totalorder %s16, 0
      %p36 = por %p34, %p35
      %p37 = scmp.ne.s32.totalorder %s26, %s29
      %p38 = scmp.eq.s32.totalorder %s21, 1
      %p39 = por %p37, %p38
      %p40 = scmp.ne.s32.totalorder %s29, %s30
      %p41 = scmp.eq.s32.totalorder %s21, 0
      %p42 = por %p40, %p41
      %p43 = scmp.ne.s32.totalorder %s29, %s30
      %p44 = scmp.eq.s32.totalorder %s22, 1
      %p45 = por %p43, %p44
      %p47 = scmp.ne.s32.totalorder %s30, %s46
      %p48 = scmp.eq.s32.totalorder %s22, 0
      %p49 = por %p47, %p48
      %s51 = sadd.s32 %s50, 1
      %p54 = scmp.eq.s32.totalorder %s16, 1
      %p55 = scmp.ne.s32.totalorder %s50, %s52
      %p56 = scmp.eq.s32.totalorder %s16, 0
      %p57 = por %p55, %p56
      %p58 = scmp.ne.s32.totalorder %s50, %s52
      %p59 = scmp.eq.s32.totalorder %s21, 1
      %p60 = por %p58, %p59
      %p61 = scmp.ne.s32.totalorder %s52, %s53
      %p62 = scmp.eq.s32.totalorder %s21, 0
      %p63 = por %p61, %p62
      %p64 = scmp.ne.s32.totalorder %s52, %s53
      %p65 = scmp.eq.s32.totalorder %s22, 1
      %p66 = por %p64, %p65
      %p68 = scmp.ne.s32.totalorder %s53, %s67
      %p69 = scmp.eq.s32.totalorder %s22, 0
      %p70 = por %p68, %p69
      %s72 = sadd.s32 %s71, 1
      %p75 = scmp.eq.s32.totalorder %s16, 1
      %p76 = scmp.ne.s32.totalorder %s71, %s73
      %p77 = scmp.eq.s32.totalorder %s16, 0
      %p78 = por %p76, %p77
      %p79 = scmp.ne.s32.totalorder %s71, %s73
      %p80 = scmp.eq.s32.totalorder %s21, 1
      %p81 = por %p79, %p80
      %p82 = scmp.ne.s32.totalorder %s73, %s74
      %p83 = scmp.eq.s32.totalorder %s21, 0
      %p84 = por %p82, %p83
      %p85 = scmp.ne.s32.totalorder %s73, %s74
      %p86 = scmp.eq.s32.totalorder %s22, 1
      %p87 = por %p85, %p86
      %p89 = scmp.ne.s32.totalorder %s74, %s88
      %p90 = scmp.eq.s32.totalorder %s22, 0
      %p91 = por %p89, %p90
      %s93 = sadd.s32 %s92, 1
      %p96 = scmp.eq.s32.totalorder %s16, 1
      %p97 = scmp.ne.s32.totalorder %s92, %s94
      %p98 = scmp.eq.s32.totalorder %s16, 0
      %p99 = por %p97, %p98
      %p100 = scmp.ne.s32.totalorder %s92, %s94
      %p101 = scmp.eq.s32.totalorder %s21, 1
      %p102 = por %p100, %p101
      %p103 = scmp.ne.s32.totalorder %s94, %s95
      %p104 = scmp.eq.s32.totalorder %s21, 0
      %p105 = por %p103, %p104
      %p106 = scmp.ne.s32.totalorder %s94, %s95
      %p107 = scmp.eq.s32.totalorder %s22, 1
      %p108 = por %p106, %p107
      %p110 = scmp.ne.s32.totalorder %s95, %s109
      %p111 = scmp.eq.s32.totalorder %s22, 0
      %p112 = por %p110, %p111
      %s114 = sadd.s32 %s113, 1
      %p117 = scmp.eq.s32.totalorder %s16, 1
      %p118 = scmp.ne.s32.totalorder %s113, %s115
      %p119 = scmp.eq.s32.totalorder %s16, 0
      %p120 = por %p118, %p119
      %p121 = scmp.ne.s32.totalorder %s113, %s115
      %p122 = scmp.eq.s32.totalorder %s21, 1
      %p123 = por %p121, %p122
      %p124 = scmp.ne.s32.totalorder %s115, %s116
      %p125 = scmp.eq.s32.totalorder %s21, 0
      %p126 = por %p124, %p125
      %p127 = scmp.ne.s32.totalorder %s115, %s116
      %p128 = scmp.eq.s32.totalorder %s22, 1
      %p129 = por %p127, %p128
      %p131 = scmp.ne.s32.totalorder %s116, %s130
      %p132 = scmp.eq.s32.totalorder %s22, 0
      %p133 = por %p131, %p132
      %s135 = sadd.s32 %s134, 1
      %p138 = scmp.eq.s32.totalorder %s16, 1
      %p139 = scmp.ne.s32.totalorder %s134, %s136
      %p140 = scmp.eq.s32.totalorder %s16, 0
      %p141 = por %p139, %p140
      %p142 = scmp.ne.s32.totalorder %s134, %s136
      %p143 = scmp.eq.s32.totalorder %s21, 1
      %p144 = por %p142, %p143
      %p145 = scmp.ne.s32.totalorder %s136, %s137
      %p146 = scmp.eq.s32.totalorder %s21, 0
      %p147 = por %p145, %p146
      %p148 = scmp.ne.s32.totalorder %s136, %s137
      %p149 = scmp.eq.s32.totalorder %s22, 1
      %p150 = por %p148, %p149
      %p152 = scmp.ne.s32.totalorder %s137, %s151
      %p153 = scmp.eq.s32.totalorder %s22, 0
      %p154 = por %p152, %p153
      %s156 = sadd.s32 %s155, 1
      %p159 = scmp.eq.s32.totalorder %s16, 1
      %p160 = scmp.ne.s32.totalorder %s155, %s157
      %p161 = scmp.eq.s32.totalorder %s16, 0
      %p162 = por %p160, %p161
      %p163 = scmp.ne.s32.totalorder %s155, %s157
      %p164 = scmp.eq.s32.totalorder %s21, 1
      %p165 = por %p163, %p164
      %p166 = scmp.ne.s32.totalorder %s157, %s158
      %p167 = scmp.eq.s32.totalorder %s21, 0
      %p168 = por %p166, %p167
      %p169 = scmp.ne.s32.totalorder %s157, %s158
      %p170 = scmp.eq.s32.totalorder %s22, 1
      %p171 = por %p169, %p170
      %p173 = scmp.ne.s32.totalorder %s158, %s172
      %p174 = scmp.eq.s32.totalorder %s22, 0
      %p175 = por %p173, %p174
      %s177 = sadd.s32 %s176, 1
      %p180 = scmp.eq.s32.totalorder %s16, 1
      %p181 = scmp.ne.s32.totalorder %s176, %s178
      %p182 = scmp.eq.s32.totalorder %s16, 0
      %p183 = por %p181, %p182
      %p184 = scmp.ne.s32.totalorder %s176, %s178
      %p185 = scmp.eq.s32.totalorder %s21, 1
      %p186 = por %p184, %p185
      %p187 = scmp.ne.s32.totalorder %s178, %s179
      %p188 = scmp.eq.s32.totalorder %s21, 0
      %p189 = por %p187, %p188
      %p190 = scmp.ne.s32.totalorder %s178, %s179
      %p191 = scmp.eq.s32.totalorder %s22, 1
      %p192 = por %p190, %p191
      %p194 = scmp.ne.s32.totalorder %s179, %s193
      %p195 = scmp.eq.s32.totalorder %s22, 0
      %p196 = por %p194, %p195
      %s198 = sadd.s32 %s197, 1
      %p201 = scmp.eq.s32.totalorder %s16, 1
      %p202 = scmp.ne.s32.totalorder %s197, %s199
      %p203 = scmp.eq.s32.totalorder %s16, 0
      %p204 = por %p202, %p203
      %p205 = scmp.ne.s32.totalorder %s197, %s199
      %p206 = scmp.eq.s32.totalorder %s21, 1
      %p207 = por %p205, %p206
      %p208 = scmp.ne.s32.totalorder %s199, %s200
      %p209 = scmp.eq.s32.totalorder %s21, 0
      %p210 = por %p208, %p209
      %p211 = scmp.ne.s32.totalorder %s199, %s200
      %p212 = scmp.eq.s32.totalorder %s22, 1
      %p213 = por %p211, %p212
      %p215 = scmp.ne.s32.totalorder %s200, %s214
      %p216 = scmp.eq.s32.totalorder %s22, 0
      %p217 = por %p215, %p216
      %s218 = ssub.s32 %s16, %s23
      %p219 = scmp.eq.s32.totalorder %s218, 0
      %s221 = sadd.s32 %s220, 1
      %s222 = scalar_select %p219, %s220, %s221
      %p225 = pneg %p219
      %p226 = scmp.eq.s32.totalorder %s16, 1
      %p227 = por %p225, %p226
      %p228 = scmp.ne.s32.totalorder %s220, %s223
      %p229 = scmp.eq.s32.totalorder %s16, 0
      %p230 = por %p228, %p229
      %p231 = scmp.ne.s32.totalorder %s220, %s223
      %p232 = scmp.eq.s32.totalorder %s21, 1
      %p233 = por %p231, %p232
      %p234 = scmp.ne.s32.totalorder %s223, %s224
      %p235 = scmp.eq.s32.totalorder %s21, 0
      %p236 = por %p234, %p235
      %p237 = scmp.ne.s32.totalorder %s223, %s224
      %p238 = scmp.eq.s32.totalorder %s22, 1
      %p239 = por %p237, %p238
      %p241 = scmp.ne.s32.totalorder %s224, %s240
      %p242 = scmp.eq.s32.totalorder %s22, 0
      %p243 = por %p241, %p242
      %p244 = scmp.le.s32.totalorder 1, %s16
      %p245 = scmp.lt.s32.totalorder %s16, 3
      %p246 = pnand %p244, %p245
      %p247 = pneg %p246
      // Predicated region
      $region9: #{dqn_forward.1} parent=5 // pred_check
        _
      $region10: #{dqn_forward.1} parent=5 // pred_check_branch
        %249 = sbr.rel (%p246) target = $region12
      $region11: #{dqn_forward.1} parent=5 // pred_region
        %s250 = ssub.s32 %s16, 1
        // Predicated region
        $region13: #{dqn_forward.1} parent=11 // pred_check
          %p251 = pneg %p63
        $region14: #{dqn_forward.1} parent=11 // pred_check_branch
          %253 = sbr.rel (%p251) target = $region16
        $region15: #{dqn_forward.1} parent=11 // pred_region
          _
        $region16: #{dqn_forward.1} parent=11 // pred_fallthru
          _
        // Predicated region
        $region17: #{dqn_forward.1} parent=11 // pred_check
          %p254 = pneg %p84
        $region18: #{dqn_forward.1} parent=11 // pred_check_branch
          %256 = sbr.rel (%p254) target = $region20
        $region19: #{dqn_forward.1} parent=11 // pred_region
          _
        $region20: #{dqn_forward.1} parent=11 // pred_fallthru
          _
        // Predicated region
        $region21: #{dqn_forward.1} parent=11 // pred_check
          %p257 = pneg %p105
        $region22: #{dqn_forward.1} parent=11 // pred_check_branch
          %259 = sbr.rel (%p257) target = $region24
        $region23: #{dqn_forward.1} parent=11 // pred_region
          %s261 = ssub.s32 20480, 20480
          %262 = vsyncadd [#allocation3], %s261
          %s263 = sshll.u32 [#allocation2], 4
          %s264 = int_to_ptr.vmem [resolvable:$true] %s263
          %269 = dma.hbm_to_vmem [thread:$0]  %s3, 20480, %s264, [#allocation3], 320, 320, 20
        $region24: #{dqn_forward.1} parent=11 // pred_fallthru
          _
        // Predicated region
        $region25: #{dqn_forward.1} parent=11 // pred_check
          %p270 = pneg %p126
        $region26: #{dqn_forward.1} parent=11 // pred_check_branch
          %272 = sbr.rel (%p270) target = $region28
        $region27: #{dqn_forward.1} parent=11 // pred_region
          _
        $region28: #{dqn_forward.1} parent=11 // pred_fallthru
          _
        // Predicated region
        $region29: #{dqn_forward.1} parent=11 // pred_check
          %p273 = pneg %p147
        $region30: #{dqn_forward.1} parent=11 // pred_check_branch
          %275 = sbr.rel (%p273) target = $region32
        $region31: #{dqn_forward.1} parent=11 // pred_region
          _
        $region32: #{dqn_forward.1} parent=11 // pred_fallthru
          _
        // Predicated region
        $region33: #{dqn_forward.1} parent=11 // pred_check
          %p276 = pneg %p168
        $region34: #{dqn_forward.1} parent=11 // pred_check_branch
          %278 = sbr.rel (%p276) target = $region36
        $region35: #{dqn_forward.1} parent=11 // pred_region
          _
        $region36: #{dqn_forward.1} parent=11 // pred_fallthru
          _
        // Predicated region
        $region37: #{dqn_forward.1} parent=11 // pred_check
          %p279 = pneg %p189
        $region38: #{dqn_forward.1} parent=11 // pred_check_branch
          %281 = sbr.rel (%p279) target = $region40
        $region39: #{dqn_forward.1} parent=11 // pred_region
          _
        $region40: #{dqn_forward.1} parent=11 // pred_fallthru
          _
        // Predicated region
        $region41: #{dqn_forward.1} parent=11 // pred_check
          %p282 = pneg %p210
        $region42: #{dqn_forward.1} parent=11 // pred_check_branch
          %284 = sbr.rel (%p282) target = $region44
        $region43: #{dqn_forward.1} parent=11 // pred_region
          _
        $region44: #{dqn_forward.1} parent=11 // pred_fallthru
          _
      $region12: #{dqn_forward.1} parent=5 // pred_fallthru
        _
      %p285 = scmp.lt.s32.totalorder %s16, 2
      // Predicated region
      $region45: #{dqn_forward.1} parent=5 // pred_check
        %p286 = pneg %p285
      $region46: #{dqn_forward.1} parent=5 // pred_check_branch
        %288 = sbr.rel (%p286) target = $region48
      $region47: #{dqn_forward.1} parent=5 // pred_region
        // Predicated region
        $region49: #{dqn_forward.1} parent=47 // pred_check
          %p289 = pneg %p36
        $region50: #{dqn_forward.1} parent=47 // pred_check_branch
          %291 = sbr.rel (%p289) target = $region52
        $region51: #{dqn_forward.1} parent=47 // pred_region
          %s292 = smul.u32 32, %s16
          %p293 = scmp.lt.s32.totalorder %s292, 63
          %s294 = scalar_select %p293, %s292, 63
          %s295 = smul.addr %s294, 4
          %s296 = scalar_lea.vmem %s0, %s295
          %s297 = smul.u32 32, %s16
        $region52: #{dqn_forward.1} parent=47 // pred_fallthru
          _
      $region48: #{dqn_forward.1} parent=5 // pred_fallthru
        _
      %p298 = scmp.le.s32.totalorder 1, %s16
      %p299 = scmp.lt.s32.totalorder %s16, 3
      %p300 = pnand %p298, %p299
      %p301 = pneg %p300
      // Predicated region
      $region53: #{dqn_forward.1} parent=5 // pred_check
        _
      $region54: #{dqn_forward.1} parent=5 // pred_check_branch
        %303 = sbr.rel (%p300) target = $region56
      $region55: #{dqn_forward.1} parent=5 // pred_region
        %s304 = ssub.s32 %s16, 1
        // Predicated region
        $region57: #{dqn_forward.1} parent=55 // pred_check
          %p305 = pneg %p105
        $region58: #{dqn_forward.1} parent=55 // pred_check_branch
          %307 = sbr.rel (%p305) target = $region60
        $region59: #{dqn_forward.1} parent=55 // pred_region
          %308 = dma.done [#allocation3], 20480
        $region60: #{dqn_forward.1} parent=55 // pred_fallthru
          _
        %s309 = smul.u32 32, %s21
        %p310 = scmp.lt.s32.totalorder %s309, 63
        %s311 = scalar_select %p310, %s309, 63
        %s312 = smul.addr %s311, 4
        %s313 = scalar_lea.vmem %s0, %s312
        %p314 = pneg %p42
        %p315 = pneg %p39
        %p316 = pneg %p63
        %p317 = pneg %p60
        %p318 = pneg %p84
        %p319 = pneg %p81
        %p320 = pneg %p105
        %p321 = pneg %p102
        %p322 = pneg %p126
        %p323 = pneg %p123
        %p324 = pneg %p147
        %p325 = pneg %p144
        %p326 = pneg %p168
        %p327 = pneg %p165
        %p328 = pneg %p189
        %p329 = pneg %p186
        %p330 = pneg %p210
        %p331 = pneg %p207
        %p332 = pneg %p236
        %p333 = pneg %p233
        %s334 = smul.u32 32, %s21
        %p335 = scmp.lt.s32.totalorder %s334, 63
        %s336 = scalar_select %p335, %s334, 63
        %s337 = smul.addr %s336, 4
        %s338 = scalar_lea.vmem %s9, %s337
        %s339 = smul.u32 32, %s21
        %p340 = scmp.lt.s32.totalorder %s339, 63
        %s341 = scalar_select %p340, %s339, 63
        %s342 = smul.addr %s341, 4
        %s343 = scalar_lea.vmem %s0, %s342
        %s344 = smul.u32 32, %s21
        %s345 = smul.u32 32, %s21
        %p346 = scmp.lt.s32.totalorder %s345, 63
        %s347 = scalar_select %p346, %s345, 63
        %s348 = smul.addr %s347, 4
        %s349 = scalar_lea.vmem %s9, %s348
        %s350 = smul.u32 32, %s21
        %v352 = vld [vmem:[%s343] sm:$0xf]
        %v353 = vld [vmem:[%s343 + $0x4] sm:$0xf]
        %v354 = vld [vmem:[%s343 + $0x8] sm:$0xf]
        %v355 = vld [vmem:[%s343 + $0xc] sm:$0xf]
        %v356 = vld [vmem:[%s343 + $0x10] sm:$0xf]
        %v357 = vld [vmem:[%s343 + $0x14] sm:$0xf]
        %v358 = vld [vmem:[%s343 + $0x18] sm:$0xf]
        %v359 = vld [vmem:[%s343 + $0x1c] sm:$0xf]
        %v360 = vld [vmem:[%s343 + $0x20] sm:$0xf]
        %v361 = vld [vmem:[%s343 + $0x24] sm:$0xf]
        %v362 = vld [vmem:[%s343 + $0x28] sm:$0xf]
        %v363 = vld [vmem:[%s343 + $0x2c] sm:$0xf]
        %v364 = vld [vmem:[%s343 + $0x30] sm:$0xf]
        %v365 = vld [vmem:[%s343 + $0x34] sm:$0xf]
        %v366 = vld [vmem:[%s343 + $0x38] sm:$0xf]
        %v367 = vld [vmem:[%s343 + $0x3c] sm:$0xf]
        %v368 = vld [vmem:[%s343 + $0x40] sm:$0xf]
        %v369 = vld [vmem:[%s343 + $0x44] sm:$0xf]
        %v370 = vld [vmem:[%s343 + $0x48] sm:$0xf]
        %v371 = vld [vmem:[%s343 + $0x4c] sm:$0xf]
        %v372 = vld [vmem:[%s343 + $0x50] sm:$0xf]
        %v373 = vld [vmem:[%s343 + $0x54] sm:$0xf]
        %v374 = vld [vmem:[%s343 + $0x58] sm:$0xf]
        %v375 = vld [vmem:[%s343 + $0x5c] sm:$0xf]
        %v376 = vld [vmem:[%s343 + $0x60] sm:$0xf]
        %v377 = vld [vmem:[%s343 + $0x64] sm:$0xf]
        %v378 = vld [vmem:[%s343 + $0x68] sm:$0xf]
        %v379 = vld [vmem:[%s343 + $0x6c] sm:$0xf]
        %v380 = vld [vmem:[%s343 + $0x70] sm:$0xf]
        %v381 = vld [vmem:[%s343 + $0x74] sm:$0xf]
        %v382 = vld [vmem:[%s343 + $0x78] sm:$0xf]
        %v383 = vld [vmem:[%s343 + $0x7c] sm:$0xf]
        %v384 = vld [vmem:[%s1] sm:$0xff]
        %v385 = vld [vmem:[%s1 + $0x8] sm:$0xff]
        %v386 = vld [vmem:[%s1 + $0x10] sm:$0xff]
        %v387 = vld [vmem:[%s1 + $0x18] sm:$0xff]
        %v388 = vld [vmem:[%s1 + $0x20] sm:$0xff]
        %v389 = vld [vmem:[%s1 + $0x28] sm:$0xff]
        %v390 = vld [vmem:[%s1 + $0x30] sm:$0xff]
        %v391 = vld [vmem:[%s1 + $0x38] sm:$0xff]
        %v392 = vld [vmem:[%s1 + $0x40] sm:$0xff]
        %v393 = vld [vmem:[%s1 + $0x48] sm:$0xff]
        %v394 = vld [vmem:[%s1 + $0x50] sm:$0xff]
        %v395 = vld [vmem:[%s1 + $0x58] sm:$0xff]
        %v396 = vld [vmem:[%s1 + $0x60] sm:$0xff]
        %v397 = vld [vmem:[%s1 + $0x68] sm:$0xff]
        %v398 = vld [vmem:[%s1 + $0x70] sm:$0xff]
        %v399 = vld [vmem:[%s1 + $0x78] sm:$0xff]
        %v400 = vld [vmem:[%s2] sm:$0xf]
        %v402 = vlaneseq
        %v403 = vshrl.u32 %v402, 7
        %v404 = vsub.s32 0, %v403
        %v405 = vrot.slane %v400, %v404
        %v406 = vlaneseq
        %v407 = vshrl.u32 %v406, 7
        %v408 = vsub.s32 1, %v407
        %v409 = vrot.slane %v400, %v408
        %v410 = vlaneseq
        %v411 = vshrl.u32 %v410, 7
        %v412 = vsub.s32 2, %v411
        %v413 = vrot.slane %v400, %v412
        %v414 = vlaneseq
        %v415 = vshrl.u32 %v414, 7
        %v416 = vsub.s32 3, %v415
        %v417 = vrot.slane %v400, %v416
        %v454 = vunpack.c.l.b16 %v352
        %v455 = vunpack.c.l.b16 %v353
        %v456 = vunpack.c.l.b16 %v354
        %v457 = vunpack.c.l.b16 %v355
        %v458 = vunpack.c.l.b16 %v356
        %v459 = vunpack.c.l.b16 %v357
        %v460 = vunpack.c.l.b16 %v358
        %v461 = vunpack.c.l.b16 %v359
        %v462 = vunpack.c.l.b16 %v360
        %v463 = vunpack.c.l.b16 %v361
        %v464 = vunpack.c.l.b16 %v362
        %v465 = vunpack.c.l.b16 %v363
        %v466 = vunpack.c.l.b16 %v364
        %v467 = vunpack.c.l.b16 %v365
        %v468 = vunpack.c.l.b16 %v366
        %v469 = vunpack.c.l.b16 %v367
        %v470 = vunpack.c.l.b16 %v368
        %v471 = vunpack.c.l.b16 %v369
        %v472 = vunpack.c.l.b16 %v370
        %v473 = vunpack.c.l.b16 %v371
        %v474 = vunpack.c.l.b16 %v372
        %v475 = vunpack.c.l.b16 %v373
        %v476 = vunpack.c.l.b16 %v374
        %v477 = vunpack.c.l.b16 %v375
        %v478 = vunpack.c.l.b16 %v376
        %v479 = vunpack.c.l.b16 %v377
        %v480 = vunpack.c.l.b16 %v378
        %v481 = vunpack.c.l.b16 %v379
        %v482 = vunpack.c.l.b16 %v380
        %v483 = vunpack.c.l.b16 %v381
        %v484 = vunpack.c.l.b16 %v382
        %v485 = vunpack.c.l.b16 %v383
        %v486 = vpack.c.b16 %v455, %v454
        %v487 = vpack.c.b16 %v457, %v456
        %v488 = vpack.c.b16 %v459, %v458
        %v489 = vpack.c.b16 %v461, %v460
        %v490 = vpack.c.b16 %v463, %v462
        %v491 = vpack.c.b16 %v465, %v464
        %v492 = vpack.c.b16 %v467, %v466
        %v493 = vpack.c.b16 %v469, %v468
        %v494 = vpack.c.b16 %v471, %v470
        %v495 = vpack.c.b16 %v473, %v472
        %v496 = vpack.c.b16 %v475, %v474
        %v497 = vpack.c.b16 %v477, %v476
        %v498 = vpack.c.b16 %v479, %v478
        %v499 = vpack.c.b16 %v481, %v480
        %v500 = vpack.c.b16 %v483, %v482
        %v501 = vpack.c.b16 %v485, %v484
        %v518 = vunpack.c.l.b16 %v384
        %v519 = vunpack.c.h.b16 %v384
        %v520 = vunpack.c.l.b16 %v385
        %v521 = vunpack.c.h.b16 %v385
        %v522 = vunpack.c.l.b16 %v386
        %v523 = vunpack.c.h.b16 %v386
        %v524 = vunpack.c.l.b16 %v387
        %v525 = vunpack.c.h.b16 %v387
        %v526 = vunpack.c.l.b16 %v388
        %v527 = vunpack.c.h.b16 %v388
        %v528 = vunpack.c.l.b16 %v389
        %v529 = vunpack.c.h.b16 %v389
        %v530 = vunpack.c.l.b16 %v390
        %v531 = vunpack.c.h.b16 %v390
        %v532 = vunpack.c.l.b16 %v391
        %v533 = vunpack.c.h.b16 %v391
        %v534 = vunpack.c.l.b16 %v392
        %v535 = vunpack.c.h.b16 %v392
        %v536 = vunpack.c.l.b16 %v393
        %v537 = vunpack.c.h.b16 %v393
        %v538 = vunpack.c.l.b16 %v394
        %v539 = vunpack.c.h.b16 %v394
        %v540 = vunpack.c.l.b16 %v395
        %v541 = vunpack.c.h.b16 %v395
        %v542 = vunpack.c.l.b16 %v396
        %v543 = vunpack.c.h.b16 %v396
        %v544 = vunpack.c.l.b16 %v397
        %v545 = vunpack.c.h.b16 %v397
        %v546 = vunpack.c.l.b16 %v398
        %v547 = vunpack.c.h.b16 %v398
        %v548 = vunpack.c.l.b16 %v399
        %v549 = vunpack.c.h.b16 %v399
        %v550 = vpack.c.b16 %v522, %v518
        %v551 = vpack.c.b16 %v523, %v519
        %v552 = vpack.c.b16 %v524, %v520
        %v553 = vpack.c.b16 %v525, %v521
        %v554 = vpack.c.b16 %v530, %v526
        %v555 = vpack.c.b16 %v531, %v527
        %v556 = vpack.c.b16 %v532, %v528
        %v557 = vpack.c.b16 %v533, %v529
        %v558 = vpack.c.b16 %v538, %v534
        %v559 = vpack.c.b16 %v539, %v535
        %v560 = vpack.c.b16 %v540, %v536
        %v561 = vpack.c.b16 %v541, %v537
        %v562 = vpack.c.b16 %v546, %v542
        %v563 = vpack.c.b16 %v547, %v543
        %v564 = vpack.c.b16 %v548, %v544
        %v565 = vpack.c.b16 %v549, %v545
        %vm582 = vcmask 523264
        %v584 = vsel %vm582, %v486, 0
        %v587 = vsel %vm582, %v487, 0
        %v590 = vsel %vm582, %v488, 0
        %v593 = vsel %vm582, %v489, 0
        %v596 = vsel %vm582, %v490, 0
        %v599 = vsel %vm582, %v491, 0
        %v602 = vsel %vm582, %v492, 0
        %v605 = vsel %vm582, %v493, 0
        %v608 = vsel %vm582, %v494, 0
        %v611 = vsel %vm582, %v495, 0
        %v614 = vsel %vm582, %v496, 0
        %v617 = vsel %vm582, %v497, 0
        %v620 = vsel %vm582, %v498, 0
        %v623 = vsel %vm582, %v499, 0
        %v626 = vsel %vm582, %v500, 0
        %v629 = vsel %vm582, %v501, 0
        %631 = vmatprep.subr.bf16.mxu0 %v551
        %632 = vmatpush1.bf16.msra.mxu0 %v550
        %633 = vmatprep.subr.bf16.mxu0 %v555
        %634 = vmatpush1.bf16.msra.mxu0 %v554
        %635 = vmatprep.subr.bf16.mxu0 %v559
        %636 = vmatpush1.bf16.msra.mxu0 %v558
        %637 = vmatprep.subr.bf16.mxu0 %v563
        %638 = vmatpush1.bf16.msra.mxu0 %v562
        %639 = vmatprep.subr.bf16.mxu0 0
        %640 = vmatpush1.bf16.msra.mxu0 0
        %641 = vmatprep.subr.bf16.mxu0 0
        %642 = vmatpush1.bf16.msra.mxu0 0
        %643 = vmatprep.subr.bf16.mxu0 0
        %644 = vmatpush1.bf16.msra.mxu0 0
        %645 = vmatprep.subr.bf16.mxu0 0
        %646 = vmatpush1.bf16.msra.mxu0 0
        %647 = vmatprep.subr.bf16.mxu0 0
        %648 = vmatpush1.bf16.msra.mxu0 0
        %649 = vmatprep.subr.bf16.mxu0 0
        %650 = vmatpush1.bf16.msra.mxu0 0
        %651 = vmatprep.subr.bf16.mxu0 0
        %652 = vmatpush1.bf16.msra.mxu0 0
        %653 = vmatprep.subr.bf16.mxu0 0
        %654 = vmatpush1.bf16.msra.mxu0 0
        %655 = vmatprep.subr.bf16.mxu0 0
        %656 = vmatpush1.bf16.msra.mxu0 0
        %657 = vmatprep.subr.bf16.mxu0 0
        %658 = vmatpush1.bf16.msra.mxu0 0
        %659 = vmatprep.subr.bf16.mxu0 0
        %660 = vmatpush1.bf16.msra.mxu0 0
        %661 = vmatprep.subr.bf16.mxu0 0
        %662 = vmatpush1.bf16.msra.mxu0 0
        %663 = vmatprep.mubr.bf16.mxu0 0
        %664 = vmatmul.mubr.bf16.gmra.mrb[0].mxu0 %v584
        %v665 = vpop.f32.mrb[0].mxu0
        %v666 = vadd.f32 %v405, %v665
        %v667 = vpop.f32.mrb[0].mxu0
        %v668 = vadd.f32 %v409, %v667
        %v669 = vpop.f32.mrb[0].mxu0
        %v670 = vadd.f32 %v405, %v669
        %v671 = vpop.f32.mrb[0].mxu0
        %v672 = vadd.f32 %v409, %v671
        %673 = vmatprep.mubr.bf16.mxu0 0
        %674 = vmatmul.mubr.bf16.gmra.mrb[0].mxu0 %v587
        %v675 = vpop.f32.mrb[0].mxu0
        %v676 = vadd.f32 %v405, %v675
        %v677 = vpop.f32.mrb[0].mxu0
        %v678 = vadd.f32 %v409, %v677
        %v679 = vpop.f32.mrb[0].mxu0
        %v680 = vadd.f32 %v405, %v679
        %v681 = vpop.f32.mrb[0].mxu0
        %v682 = vadd.f32 %v409, %v681
        %683 = vmatprep.mubr.bf16.mxu0 0
        %684 = vmatmul.mubr.bf16.gmra.mrb[0].mxu0 %v590
        %v685 = vpop.f32.mrb[0].mxu0
        %v686 = vadd.f32 %v405, %v685
        %v687 = vpop.f32.mrb[0].mxu0
        %v688 = vadd.f32 %v409, %v687
        %v689 = vpop.f32.mrb[0].mxu0
        %v690 = vadd.f32 %v405, %v689
        %v691 = vpop.f32.mrb[0].mxu0
        %v692 = vadd.f32 %v409, %v691
        %693 = vmatprep.mubr.bf16.mxu0 0
        %694 = vmatmul.mubr.bf16.gmra.mrb[0].mxu0 %v593
        %v695 = vpop.f32.mrb[0].mxu0
        %v696 = vadd.f32 %v405, %v695
        %v697 = vpop.f32.mrb[0].mxu0
        %v698 = vadd.f32 %v409, %v697
        %v699 = vpop.f32.mrb[0].mxu0
        %v700 = vadd.f32 %v405, %v699
        %v701 = vpop.f32.mrb[0].mxu0
        %v702 = vadd.f32 %v409, %v701
        %703 = vmatprep.mubr.bf16.mxu0 0
        %704 = vmatmul.mubr.bf16.gmra.mrb[0].mxu0 %v596
        %v705 = vpop.f32.mrb[0].mxu0
        %v706 = vadd.f32 %v405, %v705
        %v707 = vpop.f32.mrb[0].mxu0
        %v708 = vadd.f32 %v409, %v707
        %v709 = vpop.f32.mrb[0].mxu0
        %v710 = vadd.f32 %v405, %v709
        %v711 = vpop.f32.mrb[0].mxu0
        %v712 = vadd.f32 %v409, %v711
        %713 = vmatprep.mubr.bf16.mxu0 0
        %714 = vmatmul.mubr.bf16.gmra.mrb[0].mxu0 %v599
        %v715 = vpop.f32.mrb[0].mxu0
        %v716 = vadd.f32 %v405, %v715
        %v717 = vpop.f32.mrb[0].mxu0
        %v718 = vadd.f32 %v409, %v717
        %v719 = vpop.f32.mrb[0].mxu0
        %v720 = vadd.f32 %v405, %v719
        %v721 = vpop.f32.mrb[0].mxu0
        %v722 = vadd.f32 %v409, %v721
        %723 = vmatprep.mubr.bf16.mxu0 0
        %724 = vmatmul.mubr.bf16.gmra.mrb[0].mxu0 %v602
        %v725 = vpop.f32.mrb[0].mxu0
        %v726 = vadd.f32 %v405, %v725
        %v727 = vpop.f32.mrb[0].mxu0
        %v728 = vadd.f32 %v409, %v727
        %v729 = vpop.f32.mrb[0].mxu0
        %v730 = vadd.f32 %v405, %v729
        %v731 = vpop.f32.mrb[0].mxu0
        %v732 = vadd.f32 %v409, %v731
        %733 = vmatprep.mubr.bf16.mxu0 0
        %734 = vmatmul.mubr.bf16.gmra.mrb[0].mxu0 %v605
        %v735 = vpop.f32.mrb[0].mxu0
        %v736 = vadd.f32 %v405, %v735
        %v737 = vpop.f32.mrb[0].mxu0
        %v738 = vadd.f32 %v409, %v737
        %v739 = vpop.f32.mrb[0].mxu0
        %v740 = vadd.f32 %v405, %v739
        %v741 = vpop.f32.mrb[0].mxu0
        %v742 = vadd.f32 %v409, %v741
        %743 = vmatprep.mubr.bf16.mxu0 0
        %744 = vmatmul.mubr.bf16.gmra.mrb[0].mxu0 %v608
        %v745 = vpop.f32.mrb[0].mxu0
        %v746 = vadd.f32 %v405, %v745
        %v747 = vpop.f32.mrb[0].mxu0
        %v748 = vadd.f32 %v409, %v747
        %v749 = vpop.f32.mrb[0].mxu0
        %v750 = vadd.f32 %v405, %v749
        %v751 = vpop.f32.mrb[0].mxu0
        %v752 = vadd.f32 %v409, %v751
        %753 = vmatprep.mubr.bf16.mxu0 0
        %754 = vmatmul.mubr.bf16.gmra.mrb[0].mxu0 %v611
        %v755 = vpop.f32.mrb[0].mxu0
        %v756 = vadd.f32 %v405, %v755
        %v757 = vpop.f32.mrb[0].mxu0
        %v758 = vadd.f32 %v409, %v757
        %v759 = vpop.f32.mrb[0].mxu0
        %v760 = vadd.f32 %v405, %v759
        %v761 = vpop.f32.mrb[0].mxu0
        %v762 = vadd.f32 %v409, %v761
        %763 = vmatprep.mubr.bf16.mxu0 0
        %764 = vmatmul.mubr.bf16.gmra.mrb[0].mxu0 %v614
        %v765 = vpop.f32.mrb[0].mxu0
        %v766 = vadd.f32 %v405, %v765
        %v767 = vpop.f32.mrb[0].mxu0
        %v768 = vadd.f32 %v409, %v767
        %v769 = vpop.f32.mrb[0].mxu0
        %v770 = vadd.f32 %v405, %v769
        %v771 = vpop.f32.mrb[0].mxu0
        %v772 = vadd.f32 %v409, %v771
        %773 = vmatprep.mubr.bf16.mxu0 0
        %774 = vmatmul.mubr.bf16.gmra.mrb[0].mxu0 %v617
        %v775 = vpop.f32.mrb[0].mxu0
        %v776 = vadd.f32 %v405, %v775
        %v777 = vpop.f32.mrb[0].mxu0
        %v778 = vadd.f32 %v409, %v777
        %v779 = vpop.f32.mrb[0].mxu0
        %v780 = vadd.f32 %v405, %v779
        %v781 = vpop.f32.mrb[0].mxu0
        %v782 = vadd.f32 %v409, %v781
        %783 = vmatprep.mubr.bf16.mxu0 0
        %784 = vmatmul.mubr.bf16.gmra.mrb[0].mxu0 %v620
        %v785 = vpop.f32.mrb[0].mxu0
        %v786 = vadd.f32 %v405, %v785
        %v787 = vpop.f32.mrb[0].mxu0
        %v788 = vadd.f32 %v409, %v787
        %v789 = vpop.f32.mrb[0].mxu0
        %v790 = vadd.f32 %v405, %v789
        %v791 = vpop.f32.mrb[0].mxu0
        %v792 = vadd.f32 %v409, %v791
        %793 = vmatprep.mubr.bf16.mxu0 0
        %794 = vmatmul.mubr.bf16.gmra.mrb[0].mxu0 %v623
        %v795 = vpop.f32.mrb[0].mxu0
        %v796 = vadd.f32 %v405, %v795
        %v797 = vpop.f32.mrb[0].mxu0
        %v798 = vadd.f32 %v409, %v797
        %v799 = vpop.f32.mrb[0].mxu0
        %v800 = vadd.f32 %v405, %v799
        %v801 = vpop.f32.mrb[0].mxu0
        %v802 = vadd.f32 %v409, %v801
        %803 = vmatprep.mubr.bf16.mxu0 0
        %804 = vmatmul.mubr.bf16.gmra.mrb[0].mxu0 %v626
        %v805 = vpop.f32.mrb[0].mxu0
        %v806 = vadd.f32 %v405, %v805
        %v807 = vpop.f32.mrb[0].mxu0
        %v808 = vadd.f32 %v409, %v807
        %v809 = vpop.f32.mrb[0].mxu0
        %v810 = vadd.f32 %v405, %v809
        %v811 = vpop.f32.mrb[0].mxu0
        %v812 = vadd.f32 %v409, %v811
        %813 = vmatprep.mubr.bf16.mxu0 0
        %814 = vmatmul.mubr.bf16.gmra.mrb[0].mxu0 %v629
        %v815 = vpop.f32.mrb[0].mxu0
        %v816 = vadd.f32 %v405, %v815
        %v817 = vpop.f32.mrb[0].mxu0
        %v818 = vadd.f32 %v409, %v817
        %v819 = vpop.f32.mrb[0].mxu0
        %v820 = vadd.f32 %v405, %v819
        %v821 = vpop.f32.mrb[0].mxu0
        %v822 = vadd.f32 %v409, %v821
        %823 = vdwg.mxu0
        %824 = vmatprep.subr.bf16.mxu0 %v553
        %825 = vmatpush1.bf16.msra.mxu0 %v552
        %826 = vmatprep.subr.bf16.mxu0 %v557
        %827 = vmatpush1.bf16.msra.mxu0 %v556
        %828 = vmatprep.subr.bf16.mxu0 %v561
        %829 = vmatpush1.bf16.msra.mxu0 %v560
        %830 = vmatprep.subr.bf16.mxu0 %v565
        %831 = vmatpush1.bf16.msra.mxu0 %v564
        %832 = vmatprep.subr.bf16.mxu0 0
        %833 = vmatpush1.bf16.msra.mxu0 0
        %834 = vmatprep.subr.bf16.mxu0 0
        %835 = vmatpush1.bf16.msra.mxu0 0
        %836 = vmatprep.subr.bf16.mxu0 0
        %837 = vmatpush1.bf16.msra.mxu0 0
        %838 = vmatprep.subr.bf16.mxu0 0
        %839 = vmatpush1.bf16.msra.mxu0 0
        %840 = vmatprep.subr.bf16.mxu0 0
        %841 = vmatpush1.bf16.msra.mxu0 0
        %842 = vmatprep.subr.bf16.mxu0 0
        %843 = vmatpush1.bf16.msra.mxu0 0
        %844 = vmatprep.subr.bf16.mxu0 0
        %845 = vmatpush1.bf16.msra.mxu0 0
        %846 = vmatprep.subr.bf16.mxu0 0
        %847 = vmatpush1.bf16.msra.mxu0 0
        %848 = vmatprep.subr.bf16.mxu0 0
        %849 = vmatpush1.bf16.msra.mxu0 0
        %850 = vmatprep.subr.bf16.mxu0 0
        %851 = vmatpush1.bf16.msra.mxu0 0
        %852 = vmatprep.subr.bf16.mxu0 0
        %853 = vmatpush1.bf16.msra.mxu0 0
        %854 = vmatprep.subr.bf16.mxu0 0
        %855 = vmatpush1.bf16.msra.mxu0 0
        %856 = vmatprep.mubr.bf16.mxu0 0
        %857 = vmatmul.mubr.bf16.gmra.mrb[0].mxu0 %v584
        %v858 = vpop.f32.mrb[0].mxu0
        %v859 = vadd.f32 %v413, %v858
        %v860 = vpop.f32.mrb[0].mxu0
        %v861 = vadd.f32 %v417, %v860
        %v862 = vpop.f32.mrb[0].mxu0
        %v863 = vadd.f32 %v413, %v862
        %v864 = vpop.f32.mrb[0].mxu0
        %v865 = vadd.f32 %v417, %v864
        %866 = vmatprep.mubr.bf16.mxu0 0
        %867 = vmatmul.mubr.bf16.gmra.mrb[0].mxu0 %v587
        %v868 = vpop.f32.mrb[0].mxu0
        %v869 = vadd.f32 %v413, %v868
        %v870 = vpop.f32.mrb[0].mxu0
        %v871 = vadd.f32 %v417, %v870
        %v872 = vpop.f32.mrb[0].mxu0
        %v873 = vadd.f32 %v413, %v872
        %v874 = vpop.f32.mrb[0].mxu0
        %v875 = vadd.f32 %v417, %v874
        %876 = vmatprep.mubr.bf16.mxu0 0
        %877 = vmatmul.mubr.bf16.gmra.mrb[0].mxu0 %v590
        %v878 = vpop.f32.mrb[0].mxu0
        %v879 = vadd.f32 %v413, %v878
        %v880 = vpop.f32.mrb[0].mxu0
        %v881 = vadd.f32 %v417, %v880
        %v882 = vpop.f32.mrb[0].mxu0
        %v883 = vadd.f32 %v413, %v882
        %v884 = vpop.f32.mrb[0].mxu0
        %v885 = vadd.f32 %v417, %v884
        %886 = vmatprep.mubr.bf16.mxu0 0
        %887 = vmatmul.mubr.bf16.gmra.mrb[0].mxu0 %v593
        %v888 = vpop.f32.mrb[0].mxu0
        %v889 = vadd.f32 %v413, %v888
        %v890 = vpop.f32.mrb[0].mxu0
        %v891 = vadd.f32 %v417, %v890
        %v892 = vpop.f32.mrb[0].mxu0
        %v893 = vadd.f32 %v413, %v892
        %v894 = vpop.f32.mrb[0].mxu0
        %v895 = vadd.f32 %v417, %v894
        %896 = vmatprep.mubr.bf16.mxu0 0
        %897 = vmatmul.mubr.bf16.gmra.mrb[0].mxu0 %v596
        %v898 = vpop.f32.mrb[0].mxu0
        %v899 = vadd.f32 %v413, %v898
        %v900 = vpop.f32.mrb[0].mxu0
        %v901 = vadd.f32 %v417, %v900
        %v902 = vpop.f32.mrb[0].mxu0
        %v903 = vadd.f32 %v413, %v902
        %v904 = vpop.f32.mrb[0].mxu0
        %v905 = vadd.f32 %v417, %v904
        %906 = vmatprep.mubr.bf16.mxu0 0
        %907 = vmatmul.mubr.bf16.gmra.mrb[0].mxu0 %v599
        %v908 = vpop.f32.mrb[0].mxu0
        %v909 = vadd.f32 %v413, %v908
        %v910 = vpop.f32.mrb[0].mxu0
        %v911 = vadd.f32 %v417, %v910
        %v912 = vpop.f32.mrb[0].mxu0
        %v913 = vadd.f32 %v413, %v912
        %v914 = vpop.f32.mrb[0].mxu0
        %v915 = vadd.f32 %v417, %v914
        %916 = vmatprep.mubr.bf16.mxu0 0
        %917 = vmatmul.mubr.bf16.gmra.mrb[0].mxu0 %v602
        %v918 = vpop.f32.mrb[0].mxu0
        %v919 = vadd.f32 %v413, %v918
        %v920 = vpop.f32.mrb[0].mxu0
        %v921 = vadd.f32 %v417, %v920
        %v922 = vpop.f32.mrb[0].mxu0
        %v923 = vadd.f32 %v413, %v922
        %v924 = vpop.f32.mrb[0].mxu0
        %v925 = vadd.f32 %v417, %v924
        %926 = vmatprep.mubr.bf16.mxu0 0
        %927 = vmatmul.mubr.bf16.gmra.mrb[0].mxu0 %v605
        %v928 = vpop.f32.mrb[0].mxu0
        %v929 = vadd.f32 %v413, %v928
        %v930 = vpop.f32.mrb[0].mxu0
        %v931 = vadd.f32 %v417, %v930
        %v932 = vpop.f32.mrb[0].mxu0
        %v933 = vadd.f32 %v413, %v932
        %v934 = vpop.f32.mrb[0].mxu0
        %v935 = vadd.f32 %v417, %v934
        %936 = vmatprep.mubr.bf16.mxu0 0
        %937 = vmatmul.mubr.bf16.gmra.mrb[0].mxu0 %v608
        %v938 = vpop.f32.mrb[0].mxu0
        %v939 = vadd.f32 %v413, %v938
        %v940 = vpop.f32.mrb[0].mxu0
        %v941 = vadd.f32 %v417, %v940
        %v942 = vpop.f32.mrb[0].mxu0
        %v943 = vadd.f32 %v413, %v942
        %v944 = vpop.f32.mrb[0].mxu0
        %v945 = vadd.f32 %v417, %v944
        %946 = vmatprep.mubr.bf16.mxu0 0
        %947 = vmatmul.mubr.bf16.gmra.mrb[0].mxu0 %v611
        %v948 = vpop.f32.mrb[0].mxu0
        %v949 = vadd.f32 %v413, %v948
        %v950 = vpop.f32.mrb[0].mxu0
        %v951 = vadd.f32 %v417, %v950
        %v952 = vpop.f32.mrb[0].mxu0
        %v953 = vadd.f32 %v413, %v952
        %v954 = vpop.f32.mrb[0].mxu0
        %v955 = vadd.f32 %v417, %v954
        %956 = vmatprep.mubr.bf16.mxu0 0
        %957 = vmatmul.mubr.bf16.gmra.mrb[0].mxu0 %v614
        %v958 = vpop.f32.mrb[0].mxu0
        %v959 = vadd.f32 %v413, %v958
        %v960 = vpop.f32.mrb[0].mxu0
        %v961 = vadd.f32 %v417, %v960
        %v962 = vpop.f32.mrb[0].mxu0
        %v963 = vadd.f32 %v413, %v962
        %v964 = vpop.f32.mrb[0].mxu0
        %v965 = vadd.f32 %v417, %v964
        %966 = vmatprep.mubr.bf16.mxu0 0
        %967 = vmatmul.mubr.bf16.gmra.mrb[0].mxu0 %v617
        %v968 = vpop.f32.mrb[0].mxu0
        %v969 = vadd.f32 %v413, %v968
        %v970 = vpop.f32.mrb[0].mxu0
        %v971 = vadd.f32 %v417, %v970
        %v972 = vpop.f32.mrb[0].mxu0
        %v973 = vadd.f32 %v413, %v972
        %v974 = vpop.f32.mrb[0].mxu0
        %v975 = vadd.f32 %v417, %v974
        %976 = vmatprep.mubr.bf16.mxu0 0
        %977 = vmatmul.mubr.bf16.gmra.mrb[0].mxu0 %v620
        %v978 = vpop.f32.mrb[0].mxu0
        %v979 = vadd.f32 %v413, %v978
        %v980 = vpop.f32.mrb[0].mxu0
        %v981 = vadd.f32 %v417, %v980
        %v982 = vpop.f32.mrb[0].mxu0
        %v983 = vadd.f32 %v413, %v982
        %v984 = vpop.f32.mrb[0].mxu0
        %v985 = vadd.f32 %v417, %v984
        %986 = vmatprep.mubr.bf16.mxu0 0
        %987 = vmatmul.mubr.bf16.gmra.mrb[0].mxu0 %v623
        %v988 = vpop.f32.mrb[0].mxu0
        %v989 = vadd.f32 %v413, %v988
        %v990 = vpop.f32.mrb[0].mxu0
        %v991 = vadd.f32 %v417, %v990
        %v992 = vpop.f32.mrb[0].mxu0
        %v993 = vadd.f32 %v413, %v992
        %v994 = vpop.f32.mrb[0].mxu0
        %v995 = vadd.f32 %v417, %v994
        %996 = vmatprep.mubr.bf16.mxu0 0
        %997 = vmatmul.mubr.bf16.gmra.mrb[0].mxu0 %v626
        %v998 = vpop.f32.mrb[0].mxu0
        %v999 = vadd.f32 %v413, %v998
        %v1000 = vpop.f32.mrb[0].mxu0
        %v1001 = vadd.f32 %v417, %v1000
        %v1002 = vpop.f32.mrb[0].mxu0
        %v1003 = vadd.f32 %v413, %v1002
        %v1004 = vpop.f32.mrb[0].mxu0
        %v1005 = vadd.f32 %v417, %v1004
        %1006 = vmatprep.mubr.bf16.mxu0 0
        %1007 = vmatmul.mubr.bf16.gmra.mrb[0].mxu0 %v629
        %v1008 = vpop.f32.mrb[0].mxu0
        %v1009 = vadd.f32 %v413, %v1008
        %v1010 = vpop.f32.mrb[0].mxu0
        %v1011 = vadd.f32 %v417, %v1010
        %v1012 = vpop.f32.mrb[0].mxu0
        %v1013 = vadd.f32 %v413, %v1012
        %v1014 = vpop.f32.mrb[0].mxu0
        %v1015 = vadd.f32 %v417, %v1014
        %1016 = vdwg.mxu0
        %v1017 = vmax.f32 %v666, 0.0
        %v1018 = vmax.f32 %v668, 0.0
        %v1019 = vmax.f32 %v859, 0.0
        %v1020 = vmax.f32 %v861, 0.0
        %v1021 = vmax.f32 %v670, 0.0
        %v1022 = vmax.f32 %v672, 0.0
        %v1023 = vmax.f32 %v863, 0.0
        %v1024 = vmax.f32 %v865, 0.0
        %v1025 = vmax.f32 %v676, 0.0
        %v1026 = vmax.f32 %v678, 0.0
        %v1027 = vmax.f32 %v869, 0.0
        %v1028 = vmax.f32 %v871, 0.0
        %v1029 = vmax.f32 %v680, 0.0
        %v1030 = vmax.f32 %v682, 0.0
        %v1031 = vmax.f32 %v873, 0.0
        %v1032 = vmax.f32 %v875, 0.0
        %v1033 = vmax.f32 %v686, 0.0
        %v1034 = vmax.f32 %v688, 0.0
        %v1035 = vmax.f32 %v879, 0.0
        %v1036 = vmax.f32 %v881, 0.0
        %v1037 = vmax.f32 %v690, 0.0
        %v1038 = vmax.f32 %v692, 0.0
        %v1039 = vmax.f32 %v883, 0.0
        %v1040 = vmax.f32 %v885, 0.0
        %v1041 = vmax.f32 %v696, 0.0
        %v1042 = vmax.f32 %v698, 0.0
        %v1043 = vmax.f32 %v889, 0.0
        %v1044 = vmax.f32 %v891, 0.0
        %v1045 = vmax.f32 %v700, 0.0
        %v1046 = vmax.f32 %v702, 0.0
        %v1047 = vmax.f32 %v893, 0.0
        %v1048 = vmax.f32 %v895, 0.0
        %v1049 = vmax.f32 %v706, 0.0
        %v1050 = vmax.f32 %v708, 0.0
        %v1051 = vmax.f32 %v899, 0.0
        %v1052 = vmax.f32 %v901, 0.0
        %v1053 = vmax.f32 %v710, 0.0
        %v1054 = vmax.f32 %v712, 0.0
        %v1055 = vmax.f32 %v903, 0.0
        %v1056 = vmax.f32 %v905, 0.0
        %v1057 = vmax.f32 %v716, 0.0
        %v1058 = vmax.f32 %v718, 0.0
        %v1059 = vmax.f32 %v909, 0.0
        %v1060 = vmax.f32 %v911, 0.0
        %v1061 = vmax.f32 %v720, 0.0
        %v1062 = vmax.f32 %v722, 0.0
        %v1063 = vmax.f32 %v913, 0.0
        %v1064 = vmax.f32 %v915, 0.0
        %v1065 = vmax.f32 %v726, 0.0
        %v1066 = vmax.f32 %v728, 0.0
        %v1067 = vmax.f32 %v919, 0.0
        %v1068 = vmax.f32 %v921, 0.0
        %v1069 = vmax.f32 %v730, 0.0
        %v1070 = vmax.f32 %v732, 0.0
        %v1071 = vmax.f32 %v923, 0.0
        %v1072 = vmax.f32 %v925, 0.0
        %v1073 = vmax.f32 %v736, 0.0
        %v1074 = vmax.f32 %v738, 0.0
        %v1075 = vmax.f32 %v929, 0.0
        %v1076 = vmax.f32 %v931, 0.0
        %v1077 = vmax.f32 %v740, 0.0
        %v1078 = vmax.f32 %v742, 0.0
        %v1079 = vmax.f32 %v933, 0.0
        %v1080 = vmax.f32 %v935, 0.0
        %v1081 = vmax.f32 %v746, 0.0
        %v1082 = vmax.f32 %v748, 0.0
        %v1083 = vmax.f32 %v939, 0.0
        %v1084 = vmax.f32 %v941, 0.0
        %v1085 = vmax.f32 %v750, 0.0
        %v1086 = vmax.f32 %v752, 0.0
        %v1087 = vmax.f32 %v943, 0.0
        %v1088 = vmax.f32 %v945, 0.0
        %v1089 = vmax.f32 %v756, 0.0
        %v1090 = vmax.f32 %v758, 0.0
        %v1091 = vmax.f32 %v949, 0.0
        %v1092 = vmax.f32 %v951, 0.0
        %v1093 = vmax.f32 %v760, 0.0
        %v1094 = vmax.f32 %v762, 0.0
        %v1095 = vmax.f32 %v953, 0.0
        %v1096 = vmax.f32 %v955, 0.0
        %v1097 = vmax.f32 %v766, 0.0
        %v1098 = vmax.f32 %v768, 0.0
        %v1099 = vmax.f32 %v959, 0.0
        %v1100 = vmax.f32 %v961, 0.0
        %v1101 = vmax.f32 %v770, 0.0
        %v1102 = vmax.f32 %v772, 0.0
        %v1103 = vmax.f32 %v963, 0.0
        %v1104 = vmax.f32 %v965, 0.0
        %v1105 = vmax.f32 %v776, 0.0
        %v1106 = vmax.f32 %v778, 0.0
        %v1107 = vmax.f32 %v969, 0.0
        %v1108 = vmax.f32 %v971, 0.0
        %v1109 = vmax.f32 %v780, 0.0
        %v1110 = vmax.f32 %v782, 0.0
        %v1111 = vmax.f32 %v973, 0.0
        %v1112 = vmax.f32 %v975, 0.0
        %v1113 = vmax.f32 %v786, 0.0
        %v1114 = vmax.f32 %v788, 0.0
        %v1115 = vmax.f32 %v979, 0.0
        %v1116 = vmax.f32 %v981, 0.0
        %v1117 = vmax.f32 %v790, 0.0
        %v1118 = vmax.f32 %v792, 0.0
        %v1119 = vmax.f32 %v983, 0.0
        %v1120 = vmax.f32 %v985, 0.0
        %v1121 = vmax.f32 %v796, 0.0
        %v1122 = vmax.f32 %v798, 0.0
        %v1123 = vmax.f32 %v989, 0.0
        %v1124 = vmax.f32 %v991, 0.0
        %v1125 = vmax.f32 %v800, 0.0
        %v1126 = vmax.f32 %v802, 0.0
        %v1127 = vmax.f32 %v993, 0.0
        %v1128 = vmax.f32 %v995, 0.0
        %v1129 = vmax.f32 %v806, 0.0
        %v1130 = vmax.f32 %v808, 0.0
        %v1131 = vmax.f32 %v999, 0.0
        %v1132 = vmax.f32 %v1001, 0.0
        %v1133 = vmax.f32 %v810, 0.0
        %v1134 = vmax.f32 %v812, 0.0
        %v1135 = vmax.f32 %v1003, 0.0
        %v1136 = vmax.f32 %v1005, 0.0
        %v1137 = vmax.f32 %v816, 0.0
        %v1138 = vmax.f32 %v818, 0.0
        %v1139 = vmax.f32 %v1009, 0.0
        %v1140 = vmax.f32 %v1011, 0.0
        %v1141 = vmax.f32 %v820, 0.0
        %v1142 = vmax.f32 %v822, 0.0
        %v1143 = vmax.f32 %v1013, 0.0
        %v1144 = vmax.f32 %v1015, 0.0
        %v1145 = vpack.c.bf16 %v1021, %v1017
        %v1146 = vpack.c.bf16 %v1022, %v1018
        %v1147 = vpack.c.bf16 %v1023, %v1019
        %v1148 = vpack.c.bf16 %v1024, %v1020
        %v1149 = vpack.c.bf16 %v1029, %v1025
        %v1150 = vpack.c.bf16 %v1030, %v1026
        %v1151 = vpack.c.bf16 %v1031, %v1027
        %v1152 = vpack.c.bf16 %v1032, %v1028
        %v1153 = vpack.c.bf16 %v1037, %v1033
        %v1154 = vpack.c.bf16 %v1038, %v1034
        %v1155 = vpack.c.bf16 %v1039, %v1035
        %v1156 = vpack.c.bf16 %v1040, %v1036
        %v1157 = vpack.c.bf16 %v1045, %v1041
        %v1158 = vpack.c.bf16 %v1046, %v1042
        %v1159 = vpack.c.bf16 %v1047, %v1043
        %v1160 = vpack.c.bf16 %v1048, %v1044
        %v1161 = vpack.c.bf16 %v1053, %v1049
        %v1162 = vpack.c.bf16 %v1054, %v1050
        %v1163 = vpack.c.bf16 %v1055, %v1051
        %v1164 = vpack.c.bf16 %v1056, %v1052
        %v1165 = vpack.c.bf16 %v1061, %v1057
        %v1166 = vpack.c.bf16 %v1062, %v1058
        %v1167 = vpack.c.bf16 %v1063, %v1059
        %v1168 = vpack.c.bf16 %v1064, %v1060
        %v1169 = vpack.c.bf16 %v1069, %v1065
        %v1170 = vpack.c.bf16 %v1070, %v1066
        %v1171 = vpack.c.bf16 %v1071, %v1067
        %v1172 = vpack.c.bf16 %v1072, %v1068
        %v1173 = vpack.c.bf16 %v1077, %v1073
        %v1174 = vpack.c.bf16 %v1078, %v1074
        %v1175 = vpack.c.bf16 %v1079, %v1075
        %v1176 = vpack.c.bf16 %v1080, %v1076
        %v1177 = vpack.c.bf16 %v1085, %v1081
        %v1178 = vpack.c.bf16 %v1086, %v1082
        %v1179 = vpack.c.bf16 %v1087, %v1083
        %v1180 = vpack.c.bf16 %v1088, %v1084
        %v1181 = vpack.c.bf16 %v1093, %v1089
        %v1182 = vpack.c.bf16 %v1094, %v1090
        %v1183 = vpack.c.bf16 %v1095, %v1091
        %v1184 = vpack.c.bf16 %v1096, %v1092
        %v1185 = vpack.c.bf16 %v1101, %v1097
        %v1186 = vpack.c.bf16 %v1102, %v1098
        %v1187 = vpack.c.bf16 %v1103, %v1099
        %v1188 = vpack.c.bf16 %v1104, %v1100
        %v1189 = vpack.c.bf16 %v1109, %v1105
        %v1190 = vpack.c.bf16 %v1110, %v1106
        %v1191 = vpack.c.bf16 %v1111, %v1107
        %v1192 = vpack.c.bf16 %v1112, %v1108
        %v1193 = vpack.c.bf16 %v1117, %v1113
        %v1194 = vpack.c.bf16 %v1118, %v1114
        %v1195 = vpack.c.bf16 %v1119, %v1115
        %v1196 = vpack.c.bf16 %v1120, %v1116
        %v1197 = vpack.c.bf16 %v1125, %v1121
        %v1198 = vpack.c.bf16 %v1126, %v1122
        %v1199 = vpack.c.bf16 %v1127, %v1123
        %v1200 = vpack.c.bf16 %v1128, %v1124
        %v1201 = vpack.c.bf16 %v1133, %v1129
        %v1202 = vpack.c.bf16 %v1134, %v1130
        %v1203 = vpack.c.bf16 %v1135, %v1131
        %v1204 = vpack.c.bf16 %v1136, %v1132
        %v1205 = vpack.c.bf16 %v1141, %v1137
        %v1206 = vpack.c.bf16 %v1142, %v1138
        %v1207 = vpack.c.bf16 %v1143, %v1139
        %v1208 = vpack.c.bf16 %v1144, %v1140
        %v1209 = vld [vmem:[#allocation2] sm:$0xff]
        %v1210 = vld [vmem:[#allocation2 + $0x8] sm:$0xff]
        %v1211 = vld [vmem:[#allocation2 + $0x10] sm:$0xf]
        %v1212 = vld [vmem:[#allocation2 + $0x14] sm:$0xff]
        %v1213 = vld [vmem:[#allocation2 + $0x1c] sm:$0xff]
        %v1214 = vld [vmem:[#allocation2 + $0x24] sm:$0xf]
        %v1215 = vld [vmem:[#allocation2 + $0x28] sm:$0xff]
        %v1216 = vld [vmem:[#allocation2 + $0x30] sm:$0xff]
        %v1217 = vld [vmem:[#allocation2 + $0x38] sm:$0xf]
        %v1218 = vld [vmem:[#allocation2 + $0x3c] sm:$0xff]
        %v1219 = vld [vmem:[#allocation2 + $0x44] sm:$0xff]
        %v1220 = vld [vmem:[#allocation2 + $0x4c] sm:$0xf]
        %v1221 = vld [vmem:[#allocation2 + $0x50] sm:$0xff]
        %v1222 = vld [vmem:[#allocation2 + $0x58] sm:$0xff]
        %v1223 = vld [vmem:[#allocation2 + $0x60] sm:$0xf]
        %v1224 = vld [vmem:[#allocation2 + $0x64] sm:$0xff]
        %v1225 = vld [vmem:[#allocation2 + $0x6c] sm:$0xff]
        %v1226 = vld [vmem:[#allocation2 + $0x74] sm:$0xf]
        %v1227 = vld [vmem:[#allocation2 + $0x78] sm:$0xff]
        %v1228 = vld [vmem:[#allocation2 + $0x80] sm:$0xff]
        %v1229 = vld [vmem:[#allocation2 + $0x88] sm:$0xf]
        %v1230 = vld [vmem:[#allocation2 + $0x8c] sm:$0xff]
        %v1231 = vld [vmem:[#allocation2 + $0x94] sm:$0xff]
        %v1232 = vld [vmem:[#allocation2 + $0x9c] sm:$0xf]
        %v1233 = vld [vmem:[#allocation2 + $0xa0] sm:$0xff]
        %v1234 = vld [vmem:[#allocation2 + $0xa8] sm:$0xff]
        %v1235 = vld [vmem:[#allocation2 + $0xb0] sm:$0xf]
        %v1236 = vld [vmem:[#allocation2 + $0xb4] sm:$0xff]
        %v1237 = vld [vmem:[#allocation2 + $0xbc] sm:$0xff]
        %v1238 = vld [vmem:[#allocation2 + $0xc4] sm:$0xf]
        %v1239 = vld [vmem:[#allocation2 + $0xc8] sm:$0xff]
        %v1240 = vld [vmem:[#allocation2 + $0xd0] sm:$0xff]
        %v1241 = vld [vmem:[#allocation2 + $0xd8] sm:$0xf]
        %v1242 = vld [vmem:[#allocation2 + $0xdc] sm:$0xff]
        %v1243 = vld [vmem:[#allocation2 + $0xe4] sm:$0xff]
        %v1244 = vld [vmem:[#allocation2 + $0xec] sm:$0xf]
        %v1245 = vld [vmem:[#allocation2 + $0xf0] sm:$0xff]
        %v1246 = vld [vmem:[#allocation2 + $0xf8] sm:$0xff]
        %v1247 = vld [vmem:[#allocation2 + $0x100] sm:$0xf]
        %v1248 = vld [vmem:[#allocation2 + $0x104] sm:$0xff]
        %v1249 = vld [vmem:[#allocation2 + $0x10c] sm:$0xff]
        %v1250 = vld [vmem:[#allocation2 + $0x114] sm:$0xf]
        %v1251 = vld [vmem:[#allocation2 + $0x118] sm:$0xff]
        %v1252 = vld [vmem:[#allocation2 + $0x120] sm:$0xff]
        %v1253 = vld [vmem:[#allocation2 + $0x128] sm:$0xf]
        %v1254 = vld [vmem:[#allocation2 + $0x12c] sm:$0xff]
        %v1255 = vld [vmem:[#allocation2 + $0x134] sm:$0xff]
        %v1256 = vld [vmem:[#allocation2 + $0x13c] sm:$0xf]
        %v1257 = vld [vmem:[#allocation2 + $0x140] sm:$0xff]
        %v1258 = vld [vmem:[#allocation2 + $0x148] sm:$0xff]
        %v1259 = vld [vmem:[#allocation2 + $0x150] sm:$0xf]
        %v1260 = vld [vmem:[#allocation2 + $0x154] sm:$0xff]
        %v1261 = vld [vmem:[#allocation2 + $0x15c] sm:$0xff]
        %v1262 = vld [vmem:[#allocation2 + $0x164] sm:$0xf]
        %v1263 = vld [vmem:[#allocation2 + $0x168] sm:$0xff]
        %v1264 = vld [vmem:[#allocation2 + $0x170] sm:$0xff]
        %v1265 = vld [vmem:[#allocation2 + $0x178] sm:$0xf]
        %v1266 = vld [vmem:[#allocation2 + $0x17c] sm:$0xff]
        %v1267 = vld [vmem:[#allocation2 + $0x184] sm:$0xff]
        %v1268 = vld [vmem:[#allocation2 + $0x18c] sm:$0xf]
        %v1269 = vld [vmem:[#allocation2 + $0x190] sm:$0xff]
        %v1270 = vld [vmem:[#allocation2 + $0x198] sm:$0xff]
        %v1271 = vld [vmem:[#allocation2 + $0x1a0] sm:$0xf]
        %v1272 = vld [vmem:[#allocation2 + $0x1a4] sm:$0xff]
        %v1273 = vld [vmem:[#allocation2 + $0x1ac] sm:$0xff]
        %v1274 = vld [vmem:[#allocation2 + $0x1b4] sm:$0xf]
        %v1275 = vld [vmem:[#allocation2 + $0x1b8] sm:$0xff]
        %v1276 = vld [vmem:[#allocation2 + $0x1c0] sm:$0xff]
        %v1277 = vld [vmem:[#allocation2 + $0x1c8] sm:$0xf]
        %v1278 = vld [vmem:[#allocation2 + $0x1cc] sm:$0xff]
        %v1279 = vld [vmem:[#allocation2 + $0x1d4] sm:$0xff]
        %v1280 = vld [vmem:[#allocation2 + $0x1dc] sm:$0xf]
        %v1281 = vld [vmem:[#allocation2 + $0x1e0] sm:$0xff]
        %v1282 = vld [vmem:[#allocation2 + $0x1e8] sm:$0xff]
        %v1283 = vld [vmem:[#allocation2 + $0x1f0] sm:$0xf]
        %v1284 = vld [vmem:[#allocation2 + $0x1f4] sm:$0xff]
        %v1285 = vld [vmem:[#allocation2 + $0x1fc] sm:$0xff]
        %v1286 = vld [vmem:[#allocation2 + $0x204] sm:$0xf]
        %v1287 = vld [vmem:[#allocation2 + $0x208] sm:$0xff]
        %v1288 = vld [vmem:[#allocation2 + $0x210] sm:$0xff]
        %v1289 = vld [vmem:[#allocation2 + $0x218] sm:$0xf]
        %v1290 = vld [vmem:[#allocation2 + $0x21c] sm:$0xff]
        %v1291 = vld [vmem:[#allocation2 + $0x224] sm:$0xff]
        %v1292 = vld [vmem:[#allocation2 + $0x22c] sm:$0xf]
        %v1293 = vld [vmem:[#allocation2 + $0x230] sm:$0xff]
        %v1294 = vld [vmem:[#allocation2 + $0x238] sm:$0xff]
        %v1295 = vld [vmem:[#allocation2 + $0x240] sm:$0xf]
        %v1296 = vld [vmem:[#allocation2 + $0x244] sm:$0xff]
        %v1297 = vld [vmem:[#allocation2 + $0x24c] sm:$0xff]
        %v1298 = vld [vmem:[#allocation2 + $0x254] sm:$0xf]
        %v1299 = vld [vmem:[#allocation2 + $0x258] sm:$0xff]
        %v1300 = vld [vmem:[#allocation2 + $0x260] sm:$0xff]
        %v1301 = vld [vmem:[#allocation2 + $0x268] sm:$0xf]
        %v1302 = vld [vmem:[#allocation2 + $0x26c] sm:$0xff]
        %v1303 = vld [vmem:[#allocation2 + $0x274] sm:$0xff]
        %v1304 = vld [vmem:[#allocation2 + $0x27c] sm:$0xf]
        %v1305 = vld [vmem:[#allocation2 + $0x280] sm:$0xff]
        %v1306 = vld [vmem:[#allocation2 + $0x288] sm:$0xff]
        %v1307 = vld [vmem:[#allocation2 + $0x290] sm:$0xf]
        %v1308 = vld [vmem:[#allocation2 + $0x294] sm:$0xff]
        %v1309 = vld [vmem:[#allocation2 + $0x29c] sm:$0xff]
        %v1310 = vld [vmem:[#allocation2 + $0x2a4] sm:$0xf]
        %v1311 = vld [vmem:[#allocation2 + $0x2a8] sm:$0xff]
        %v1312 = vld [vmem:[#allocation2 + $0x2b0] sm:$0xff]
        %v1313 = vld [vmem:[#allocation2 + $0x2b8] sm:$0xf]
        %v1314 = vld [vmem:[#allocation2 + $0x2bc] sm:$0xff]
        %v1315 = vld [vmem:[#allocation2 + $0x2c4] sm:$0xff]
        %v1316 = vld [vmem:[#allocation2 + $0x2cc] sm:$0xf]
        %v1317 = vld [vmem:[#allocation2 + $0x2d0] sm:$0xff]
        %v1318 = vld [vmem:[#allocation2 + $0x2d8] sm:$0xff]
        %v1319 = vld [vmem:[#allocation2 + $0x2e0] sm:$0xf]
        %v1320 = vld [vmem:[#allocation2 + $0x2e4] sm:$0xff]
        %v1321 = vld [vmem:[#allocation2 + $0x2ec] sm:$0xff]
        %v1322 = vld [vmem:[#allocation2 + $0x2f4] sm:$0xf]
        %v1323 = vld [vmem:[#allocation2 + $0x2f8] sm:$0xff]
        %v1324 = vld [vmem:[#allocation2 + $0x300] sm:$0xff]
        %v1325 = vld [vmem:[#allocation2 + $0x308] sm:$0xf]
        %v1326 = vld [vmem:[#allocation2 + $0x30c] sm:$0xff]
        %v1327 = vld [vmem:[#allocation2 + $0x314] sm:$0xff]
        %v1328 = vld [vmem:[#allocation2 + $0x31c] sm:$0xf]
        %v1329 = vld [vmem:[#allocation2 + $0x320] sm:$0xff]
        %v1330 = vld [vmem:[#allocation2 + $0x328] sm:$0xff]
        %v1331 = vld [vmem:[#allocation2 + $0x330] sm:$0xf]
        %v1332 = vld [vmem:[#allocation2 + $0x334] sm:$0xff]
        %v1333 = vld [vmem:[#allocation2 + $0x33c] sm:$0xff]
        %v1334 = vld [vmem:[#allocation2 + $0x344] sm:$0xf]
        %v1335 = vld [vmem:[#allocation2 + $0x348] sm:$0xff]
        %v1336 = vld [vmem:[#allocation2 + $0x350] sm:$0xff]
        %v1337 = vld [vmem:[#allocation2 + $0x358] sm:$0xf]
        %v1338 = vld [vmem:[#allocation2 + $0x35c] sm:$0xff]
        %v1339 = vld [vmem:[#allocation2 + $0x364] sm:$0xff]
        %v1340 = vld [vmem:[#allocation2 + $0x36c] sm:$0xf]
        %v1341 = vld [vmem:[#allocation2 + $0x370] sm:$0xff]
        %v1342 = vld [vmem:[#allocation2 + $0x378] sm:$0xff]
        %v1343 = vld [vmem:[#allocation2 + $0x380] sm:$0xf]
        %v1344 = vld [vmem:[#allocation2 + $0x384] sm:$0xff]
        %v1345 = vld [vmem:[#allocation2 + $0x38c] sm:$0xff]
        %v1346 = vld [vmem:[#allocation2 + $0x394] sm:$0xf]
        %v1347 = vld [vmem:[#allocation2 + $0x398] sm:$0xff]
        %v1348 = vld [vmem:[#allocation2 + $0x3a0] sm:$0xff]
        %v1349 = vld [vmem:[#allocation2 + $0x3a8] sm:$0xf]
        %v1350 = vld [vmem:[#allocation2 + $0x3ac] sm:$0xff]
        %v1351 = vld [vmem:[#allocation2 + $0x3b4] sm:$0xff]
        %v1352 = vld [vmem:[#allocation2 + $0x3bc] sm:$0xf]
        %v1353 = vld [vmem:[#allocation2 + $0x3c0] sm:$0xff]
        %v1354 = vld [vmem:[#allocation2 + $0x3c8] sm:$0xff]
        %v1355 = vld [vmem:[#allocation2 + $0x3d0] sm:$0xf]
        %v1356 = vld [vmem:[#allocation2 + $0x3d4] sm:$0xff]
        %v1357 = vld [vmem:[#allocation2 + $0x3dc] sm:$0xff]
        %v1358 = vld [vmem:[#allocation2 + $0x3e4] sm:$0xf]
        %v1359 = vld [vmem:[#allocation2 + $0x3e8] sm:$0xff]
        %v1360 = vld [vmem:[#allocation2 + $0x3f0] sm:$0xff]
        %v1361 = vld [vmem:[#allocation2 + $0x3f8] sm:$0xf]
        %v1362 = vld [vmem:[#allocation2 + $0x3fc] sm:$0xff]
        %v1363 = vld [vmem:[#allocation2 + $0x404] sm:$0xff]
        %v1364 = vld [vmem:[#allocation2 + $0x40c] sm:$0xf]
        %v1365 = vld [vmem:[#allocation2 + $0x410] sm:$0xff]
        %v1366 = vld [vmem:[#allocation2 + $0x418] sm:$0xff]
        %v1367 = vld [vmem:[#allocation2 + $0x420] sm:$0xf]
        %v1368 = vld [vmem:[#allocation2 + $0x424] sm:$0xff]
        %v1369 = vld [vmem:[#allocation2 + $0x42c] sm:$0xff]
        %v1370 = vld [vmem:[#allocation2 + $0x434] sm:$0xf]
        %v1371 = vld [vmem:[#allocation2 + $0x438] sm:$0xff]
        %v1372 = vld [vmem:[#allocation2 + $0x440] sm:$0xff]
        %v1373 = vld [vmem:[#allocation2 + $0x448] sm:$0xf]
        %v1374 = vld [vmem:[#allocation2 + $0x44c] sm:$0xff]
        %v1375 = vld [vmem:[#allocation2 + $0x454] sm:$0xff]
        %v1376 = vld [vmem:[#allocation2 + $0x45c] sm:$0xf]
        %v1377 = vld [vmem:[#allocation2 + $0x460] sm:$0xff]
        %v1378 = vld [vmem:[#allocation2 + $0x468] sm:$0xff]
        %v1379 = vld [vmem:[#allocation2 + $0x470] sm:$0xf]
        %v1380 = vld [vmem:[#allocation2 + $0x474] sm:$0xff]
        %v1381 = vld [vmem:[#allocation2 + $0x47c] sm:$0xff]
        %v1382 = vld [vmem:[#allocation2 + $0x484] sm:$0xf]
        %v1383 = vld [vmem:[#allocation2 + $0x488] sm:$0xff]
        %v1384 = vld [vmem:[#allocation2 + $0x490] sm:$0xff]
        %v1385 = vld [vmem:[#allocation2 + $0x498] sm:$0xf]
        %v1386 = vld [vmem:[#allocation2 + $0x49c] sm:$0xff]
        %v1387 = vld [vmem:[#allocation2 + $0x4a4] sm:$0xff]
        %v1388 = vld [vmem:[#allocation2 + $0x4ac] sm:$0xf]
        %v1389 = vld [vmem:[#allocation2 + $0x4b0] sm:$0xff]
        %v1390 = vld [vmem:[#allocation2 + $0x4b8] sm:$0xff]
        %v1391 = vld [vmem:[#allocation2 + $0x4c0] sm:$0xf]
        %v1392 = vld [vmem:[#allocation2 + $0x4c4] sm:$0xff]
        %v1393 = vld [vmem:[#allocation2 + $0x4cc] sm:$0xff]
        %v1394 = vld [vmem:[#allocation2 + $0x4d4] sm:$0xf]
        %v1395 = vld [vmem:[#allocation2 + $0x4d8] sm:$0xff]
        %v1396 = vld [vmem:[#allocation2 + $0x4e0] sm:$0xff]
        %v1397 = vld [vmem:[#allocation2 + $0x4e8] sm:$0xf]
        %v1398 = vld [vmem:[#allocation2 + $0x4ec] sm:$0xff]
        %v1399 = vld [vmem:[#allocation2 + $0x4f4] sm:$0xff]
        %v1400 = vld [vmem:[#allocation2 + $0x4fc] sm:$0xf]
        %v1401 = vld [vmem:[%s4] sm:$0x1f]
        %v1403 = vlaneseq
        %v1404 = vshrl.u32 %v1403, 7
        %v1405 = vsub.s32 0, %v1404
        %v1406 = vrot.slane %v1401, %v1405
        %v1407 = vlaneseq
        %v1408 = vshrl.u32 %v1407, 7
        %v1409 = vsub.s32 1, %v1408
        %v1410 = vrot.slane %v1401, %v1409
        %v1411 = vlaneseq
        %v1412 = vshrl.u32 %v1411, 7
        %v1413 = vsub.s32 2, %v1412
        %v1414 = vrot.slane %v1401, %v1413
        %v1415 = vlaneseq
        %v1416 = vshrl.u32 %v1415, 7
        %v1417 = vsub.s32 3, %v1416
        %v1418 = vrot.slane %v1401, %v1417
        %v1419 = vlaneseq
        %v1420 = vshrl.u32 %v1419, 7
        %v1421 = vsub.s32 4, %v1420
        %v1422 = vrot.slane %v1401, %v1421
        %v1620 = vunpack.c.l.b16 %v1209
        %v1621 = vunpack.c.h.b16 %v1209
        %v1622 = vunpack.c.l.b16 %v1210
        %v1623 = vunpack.c.h.b16 %v1210
        %v1624 = vunpack.c.l.b16 %v1211
        %v1625 = vunpack.c.l.b16 %v1212
        %v1626 = vunpack.c.h.b16 %v1212
        %v1627 = vunpack.c.l.b16 %v1213
        %v1628 = vunpack.c.h.b16 %v1213
        %v1629 = vunpack.c.l.b16 %v1214
        %v1630 = vunpack.c.l.b16 %v1215
        %v1631 = vunpack.c.h.b16 %v1215
        %v1632 = vunpack.c.l.b16 %v1216
        %v1633 = vunpack.c.h.b16 %v1216
        %v1634 = vunpack.c.l.b16 %v1217
        %v1635 = vunpack.c.l.b16 %v1218
        %v1636 = vunpack.c.h.b16 %v1218
        %v1637 = vunpack.c.l.b16 %v1219
        %v1638 = vunpack.c.h.b16 %v1219
        %v1639 = vunpack.c.l.b16 %v1220
        %v1640 = vunpack.c.l.b16 %v1221
        %v1641 = vunpack.c.h.b16 %v1221
        %v1642 = vunpack.c.l.b16 %v1222
        %v1643 = vunpack.c.h.b16 %v1222
        %v1644 = vunpack.c.l.b16 %v1223
        %v1645 = vunpack.c.l.b16 %v1224
        %v1646 = vunpack.c.h.b16 %v1224
        %v1647 = vunpack.c.l.b16 %v1225
        %v1648 = vunpack.c.h.b16 %v1225
        %v1649 = vunpack.c.l.b16 %v1226
        %v1650 = vunpack.c.l.b16 %v1227
        %v1651 = vunpack.c.h.b16 %v1227
        %v1652 = vunpack.c.l.b16 %v1228
        %v1653 = vunpack.c.h.b16 %v1228
        %v1654 = vunpack.c.l.b16 %v1229
        %v1655 = vunpack.c.l.b16 %v1230
        %v1656 = vunpack.c.h.b16 %v1230
        %v1657 = vunpack.c.l.b16 %v1231
        %v1658 = vunpack.c.h.b16 %v1231
        %v1659 = vunpack.c.l.b16 %v1232
        %v1660 = vunpack.c.l.b16 %v1233
        %v1661 = vunpack.c.h.b16 %v1233
        %v1662 = vunpack.c.l.b16 %v1234
        %v1663 = vunpack.c.h.b16 %v1234
        %v1664 = vunpack.c.l.b16 %v1235
        %v1665 = vunpack.c.l.b16 %v1236
        %v1666 = vunpack.c.h.b16 %v1236
        %v1667 = vunpack.c.l.b16 %v1237
        %v1668 = vunpack.c.h.b16 %v1237
        %v1669 = vunpack.c.l.b16 %v1238
        %v1670 = vunpack.c.l.b16 %v1239
        %v1671 = vunpack.c.h.b16 %v1239
        %v1672 = vunpack.c.l.b16 %v1240
        %v1673 = vunpack.c.h.b16 %v1240
        %v1674 = vunpack.c.l.b16 %v1241
        %v1675 = vunpack.c.l.b16 %v1242
        %v1676 = vunpack.c.h.b16 %v1242
        %v1677 = vunpack.c.l.b16 %v1243
        %v1678 = vunpack.c.h.b16 %v1243
        %v1679 = vunpack.c.l.b16 %v1244
        %v1680 = vunpack.c.l.b16 %v1245
        %v1681 = vunpack.c.h.b16 %v1245
        %v1682 = vunpack.c.l.b16 %v1246
        %v1683 = vunpack.c.h.b16 %v1246
        %v1684 = vunpack.c.l.b16 %v1247
        %v1685 = vunpack.c.l.b16 %v1248
        %v1686 = vunpack.c.h.b16 %v1248
        %v1687 = vunpack.c.l.b16 %v1249
        %v1688 = vunpack.c.h.b16 %v1249
        %v1689 = vunpack.c.l.b16 %v1250
        %v1690 = vunpack.c.l.b16 %v1251
        %v1691 = vunpack.c.h.b16 %v1251
        %v1692 = vunpack.c.l.b16 %v1252
        %v1693 = vunpack.c.h.b16 %v1252
        %v1694 = vunpack.c.l.b16 %v1253
        %v1695 = vunpack.c.l.b16 %v1254
        %v1696 = vunpack.c.h.b16 %v1254
        %v1697 = vunpack.c.l.b16 %v1255
        %v1698 = vunpack.c.h.b16 %v1255
        %v1699 = vunpack.c.l.b16 %v1256
        %v1700 = vunpack.c.l.b16 %v1257
        %v1701 = vunpack.c.h.b16 %v1257
        %v1702 = vunpack.c.l.b16 %v1258
        %v1703 = vunpack.c.h.b16 %v1258
        %v1704 = vunpack.c.l.b16 %v1259
        %v1705 = vunpack.c.l.b16 %v1260
        %v1706 = vunpack.c.h.b16 %v1260
        %v1707 = vunpack.c.l.b16 %v1261
        %v1708 = vunpack.c.h.b16 %v1261
        %v1709 = vunpack.c.l.b16 %v1262
        %v1710 = vunpack.c.l.b16 %v1263
        %v1711 = vunpack.c.h.b16 %v1263
        %v1712 = vunpack.c.l.b16 %v1264
        %v1713 = vunpack.c.h.b16 %v1264
        %v1714 = vunpack.c.l.b16 %v1265
        %v1715 = vunpack.c.l.b16 %v1266
        %v1716 = vunpack.c.h.b16 %v1266
        %v1717 = vunpack.c.l.b16 %v1267
        %v1718 = vunpack.c.h.b16 %v1267
        %v1719 = vunpack.c.l.b16 %v1268
        %v1720 = vunpack.c.l.b16 %v1269
        %v1721 = vunpack.c.h.b16 %v1269
        %v1722 = vunpack.c.l.b16 %v1270
        %v1723 = vunpack.c.h.b16 %v1270
        %v1724 = vunpack.c.l.b16 %v1271
        %v1725 = vunpack.c.l.b16 %v1272
        %v1726 = vunpack.c.h.b16 %v1272
        %v1727 = vunpack.c.l.b16 %v1273
        %v1728 = vunpack.c.h.b16 %v1273
        %v1729 = vunpack.c.l.b16 %v1274
        %v1730 = vunpack.c.l.b16 %v1275
        %v1731 = vunpack.c.h.b16 %v1275
        %v1732 = vunpack.c.l.b16 %v1276
        %v1733 = vunpack.c.h.b16 %v1276
        %v1734 = vunpack.c.l.b16 %v1277
        %v1735 = vunpack.c.l.b16 %v1278
        %v1736 = vunpack.c.h.b16 %v1278
        %v1737 = vunpack.c.l.b16 %v1279
        %v1738 = vunpack.c.h.b16 %v1279
        %v1739 = vunpack.c.l.b16 %v1280
        %v1740 = vunpack.c.l.b16 %v1281
        %v1741 = vunpack.c.h.b16 %v1281
        %v1742 = vunpack.c.l.b16 %v1282
        %v1743 = vunpack.c.h.b16 %v1282
        %v1744 = vunpack.c.l.b16 %v1283
        %v1745 = vunpack.c.l.b16 %v1284
        %v1746 = vunpack.c.h.b16 %v1284
        %v1747 = vunpack.c.l.b16 %v1285
        %v1748 = vunpack.c.h.b16 %v1285
        %v1749 = vunpack.c.l.b16 %v1286
        %v1750 = vunpack.c.l.b16 %v1287
        %v1751 = vunpack.c.h.b16 %v1287
        %v1752 = vunpack.c.l.b16 %v1288
        %v1753 = vunpack.c.h.b16 %v1288
        %v1754 = vunpack.c.l.b16 %v1289
        %v1755 = vunpack.c.l.b16 %v1290
        %v1756 = vunpack.c.h.b16 %v1290
        %v1757 = vunpack.c.l.b16 %v1291
        %v1758 = vunpack.c.h.b16 %v1291
        %v1759 = vunpack.c.l.b16 %v1292
        %v1760 = vunpack.c.l.b16 %v1293
        %v1761 = vunpack.c.h.b16 %v1293
        %v1762 = vunpack.c.l.b16 %v1294
        %v1763 = vunpack.c.h.b16 %v1294
        %v1764 = vunpack.c.l.b16 %v1295
        %v1765 = vunpack.c.l.b16 %v1296
        %v1766 = vunpack.c.h.b16 %v1296
        %v1767 = vunpack.c.l.b16 %v1297
        %v1768 = vunpack.c.h.b16 %v1297
        %v1769 = vunpack.c.l.b16 %v1298
        %v1770 = vunpack.c.l.b16 %v1299
        %v1771 = vunpack.c.h.b16 %v1299
        %v1772 = vunpack.c.l.b16 %v1300
        %v1773 = vunpack.c.h.b16 %v1300
        %v1774 = vunpack.c.l.b16 %v1301
        %v1775 = vunpack.c.l.b16 %v1302
        %v1776 = vunpack.c.h.b16 %v1302
        %v1777 = vunpack.c.l.b16 %v1303
        %v1778 = vunpack.c.h.b16 %v1303
        %v1779 = vunpack.c.l.b16 %v1304
        %v1780 = vunpack.c.l.b16 %v1305
        %v1781 = vunpack.c.h.b16 %v1305
        %v1782 = vunpack.c.l.b16 %v1306
        %v1783 = vunpack.c.h.b16 %v1306
        %v1784 = vunpack.c.l.b16 %v1307
        %v1785 = vunpack.c.l.b16 %v1308
        %v1786 = vunpack.c.h.b16 %v1308
        %v1787 = vunpack.c.l.b16 %v1309
        %v1788 = vunpack.c.h.b16 %v1309
        %v1789 = vunpack.c.l.b16 %v1310
        %v1790 = vunpack.c.l.b16 %v1311
        %v1791 = vunpack.c.h.b16 %v1311
        %v1792 = vunpack.c.l.b16 %v1312
        %v1793 = vunpack.c.h.b16 %v1312
        %v1794 = vunpack.c.l.b16 %v1313
        %v1795 = vunpack.c.l.b16 %v1314
        %v1796 = vunpack.c.h.b16 %v1314
        %v1797 = vunpack.c.l.b16 %v1315
        %v1798 = vunpack.c.h.b16 %v1315
        %v1799 = vunpack.c.l.b16 %v1316
        %v1800 = vunpack.c.l.b16 %v1317
        %v1801 = vunpack.c.h.b16 %v1317
        %v1802 = vunpack.c.l.b16 %v1318
        %v1803 = vunpack.c.h.b16 %v1318
        %v1804 = vunpack.c.l.b16 %v1319
        %v1805 = vunpack.c.l.b16 %v1320
        %v1806 = vunpack.c.h.b16 %v1320
        %v1807 = vunpack.c.l.b16 %v1321
        %v1808 = vunpack.c.h.b16 %v1321
        %v1809 = vunpack.c.l.b16 %v1322
        %v1810 = vunpack.c.l.b16 %v1323
        %v1811 = vunpack.c.h.b16 %v1323
        %v1812 = vunpack.c.l.b16 %v1324
        %v1813 = vunpack.c.h.b16 %v1324
        %v1814 = vunpack.c.l.b16 %v1325
        %v1815 = vunpack.c.l.b16 %v1326
        %v1816 = vunpack.c.h.b16 %v1326
        %v1817 = vunpack.c.l.b16 %v1327
        %v1818 = vunpack.c.h.b16 %v1327
        %v1819 = vunpack.c.l.b16 %v1328
        %v1820 = vunpack.c.l.b16 %v1329
        %v1821 = vunpack.c.h.b16 %v1329
        %v1822 = vunpack.c.l.b16 %v1330
        %v1823 = vunpack.c.h.b16 %v1330
        %v1824 = vunpack.c.l.b16 %v1331
        %v1825 = vunpack.c.l.b16 %v1332
        %v1826 = vunpack.c.h.b16 %v1332
        %v1827 = vunpack.c.l.b16 %v1333
        %v1828 = vunpack.c.h.b16 %v1333
        %v1829 = vunpack.c.l.b16 %v1334
        %v1830 = vunpack.c.l.b16 %v1335
        %v1831 = vunpack.c.h.b16 %v1335
        %v1832 = vunpack.c.l.b16 %v1336
        %v1833 = vunpack.c.h.b16 %v1336
        %v1834 = vunpack.c.l.b16 %v1337
        %v1835 = vunpack.c.l.b16 %v1338
        %v1836 = vunpack.c.h.b16 %v1338
        %v1837 = vunpack.c.l.b16 %v1339
        %v1838 = vunpack.c.h.b16 %v1339
        %v1839 = vunpack.c.l.b16 %v1340
        %v1840 = vunpack.c.l.b16 %v1341
        %v1841 = vunpack.c.h.b16 %v1341
        %v1842 = vunpack.c.l.b16 %v1342
        %v1843 = vunpack.c.h.b16 %v1342
        %v1844 = vunpack.c.l.b16 %v1343
        %v1845 = vunpack.c.l.b16 %v1344
        %v1846 = vunpack.c.h.b16 %v1344
        %v1847 = vunpack.c.l.b16 %v1345
        %v1848 = vunpack.c.h.b16 %v1345
        %v1849 = vunpack.c.l.b16 %v1346
        %v1850 = vunpack.c.l.b16 %v1347
        %v1851 = vunpack.c.h.b16 %v1347
        %v1852 = vunpack.c.l.b16 %v1348
        %v1853 = vunpack.c.h.b16 %v1348
        %v1854 = vunpack.c.l.b16 %v1349
        %v1855 = vunpack.c.l.b16 %v1350
        %v1856 = vunpack.c.h.b16 %v1350
        %v1857 = vunpack.c.l.b16 %v1351
        %v1858 = vunpack.c.h.b16 %v1351
        %v1859 = vunpack.c.l.b16 %v1352
        %v1860 = vunpack.c.l.b16 %v1353
        %v1861 = vunpack.c.h.b16 %v1353
        %v1862 = vunpack.c.l.b16 %v1354
        %v1863 = vunpack.c.h.b16 %v1354
        %v1864 = vunpack.c.l.b16 %v1355
        %v1865 = vunpack.c.l.b16 %v1356
        %v1866 = vunpack.c.h.b16 %v1356
        %v1867 = vunpack.c.l.b16 %v1357
        %v1868 = vunpack.c.h.b16 %v1357
        %v1869 = vunpack.c.l.b16 %v1358
        %v1870 = vunpack.c.l.b16 %v1359
        %v1871 = vunpack.c.h.b16 %v1359
        %v1872 = vunpack.c.l.b16 %v1360
        %v1873 = vunpack.c.h.b16 %v1360
        %v1874 = vunpack.c.l.b16 %v1361
        %v1875 = vunpack.c.l.b16 %v1362
        %v1876 = vunpack.c.h.b16 %v1362
        %v1877 = vunpack.c.l.b16 %v1363
        %v1878 = vunpack.c.h.b16 %v1363
        %v1879 = vunpack.c.l.b16 %v1364
        %v1880 = vunpack.c.l.b16 %v1365
        %v1881 = vunpack.c.h.b16 %v1365
        %v1882 = vunpack.c.l.b16 %v1366
        %v1883 = vunpack.c.h.b16 %v1366
        %v1884 = vunpack.c.l.b16 %v1367
        %v1885 = vunpack.c.l.b16 %v1368
        %v1886 = vunpack.c.h.b16 %v1368
        %v1887 = vunpack.c.l.b16 %v1369
        %v1888 = vunpack.c.h.b16 %v1369
        %v1889 = vunpack.c.l.b16 %v1370
        %v1890 = vunpack.c.l.b16 %v1371
        %v1891 = vunpack.c.h.b16 %v1371
        %v1892 = vunpack.c.l.b16 %v1372
        %v1893 = vunpack.c.h.b16 %v1372
        %v1894 = vunpack.c.l.b16 %v1373
        %v1895 = vunpack.c.l.b16 %v1374
        %v1896 = vunpack.c.h.b16 %v1374
        %v1897 = vunpack.c.l.b16 %v1375
        %v1898 = vunpack.c.h.b16 %v1375
        %v1899 = vunpack.c.l.b16 %v1376
        %v1900 = vunpack.c.l.b16 %v1377
        %v1901 = vunpack.c.h.b16 %v1377
        %v1902 = vunpack.c.l.b16 %v1378
        %v1903 = vunpack.c.h.b16 %v1378
        %v1904 = vunpack.c.l.b16 %v1379
        %v1905 = vunpack.c.l.b16 %v1380
        %v1906 = vunpack.c.h.b16 %v1380
        %v1907 = vunpack.c.l.b16 %v1381
        %v1908 = vunpack.c.h.b16 %v1381
        %v1909 = vunpack.c.l.b16 %v1382
        %v1910 = vunpack.c.l.b16 %v1383
        %v1911 = vunpack.c.h.b16 %v1383
        %v1912 = vunpack.c.l.b16 %v1384
        %v1913 = vunpack.c.h.b16 %v1384
        %v1914 = vunpack.c.l.b16 %v1385
        %v1915 = vunpack.c.l.b16 %v1386
        %v1916 = vunpack.c.h.b16 %v1386
        %v1917 = vunpack.c.l.b16 %v1387
        %v1918 = vunpack.c.h.b16 %v1387
        %v1919 = vunpack.c.l.b16 %v1388
        %v1920 = vunpack.c.l.b16 %v1389
        %v1921 = vunpack.c.h.b16 %v1389
        %v1922 = vunpack.c.l.b16 %v1390
        %v1923 = vunpack.c.h.b16 %v1390
        %v1924 = vunpack.c.l.b16 %v1391
        %v1925 = vunpack.c.l.b16 %v1392
        %v1926 = vunpack.c.h.b16 %v1392
        %v1927 = vunpack.c.l.b16 %v1393
        %v1928 = vunpack.c.h.b16 %v1393
        %v1929 = vunpack.c.l.b16 %v1394
        %v1930 = vunpack.c.l.b16 %v1395
        %v1931 = vunpack.c.h.b16 %v1395
        %v1932 = vunpack.c.l.b16 %v1396
        %v1933 = vunpack.c.h.b16 %v1396
        %v1934 = vunpack.c.l.b16 %v1397
        %v1935 = vunpack.c.l.b16 %v1398
        %v1936 = vunpack.c.h.b16 %v1398
        %v1937 = vunpack.c.l.b16 %v1399
        %v1938 = vunpack.c.h.b16 %v1399
        %v1939 = vunpack.c.l.b16 %v1400
        %v1940 = vpack.c.b16 %v1625, %v1620
        %v1941 = vpack.c.b16 %v1626, %v1621
        %v1942 = vpack.c.b16 %v1627, %v1622
        %v1943 = vpack.c.b16 %v1628, %v1623
        %v1944 = vpack.c.b16 %v1629, %v1624
        %v1945 = vpack.c.b16 %v1635, %v1630
        %v1946 = vpack.c.b16 %v1636, %v1631
        %v1947 = vpack.c.b16 %v1637, %v1632
        %v1948 = vpack.c.b16 %v1638, %v1633
        %v1949 = vpack.c.b16 %v1639, %v1634
        %v1950 = vpack.c.b16 %v1645, %v1640
        %v1951 = vpack.c.b16 %v1646, %v1641
        %v1952 = vpack.c.b16 %v1647, %v1642
        %v1953 = vpack.c.b16 %v1648, %v1643
        %v1954 = vpack.c.b16 %v1649, %v1644
        %v1955 = vpack.c.b16 %v1655, %v1650
        %v1956 = vpack.c.b16 %v1656, %v1651
        %v1957 = vpack.c.b16 %v1657, %v1652
        %v1958 = vpack.c.b16 %v1658, %v1653
        %v1959 = vpack.c.b16 %v1659, %v1654
        %v1960 = vpack.c.b16 %v1665, %v1660
        %v1961 = vpack.c.b16 %v1666, %v1661
        %v1962 = vpack.c.b16 %v1667, %v1662
        %v1963 = vpack.c.b16 %v1668, %v1663
        %v1964 = vpack.c.b16 %v1669, %v1664
        %v1965 = vpack.c.b16 %v1675, %v1670
        %v1966 = vpack.c.b16 %v1676, %v1671
        %v1967 = vpack.c.b16 %v1677, %v1672
        %v1968 = vpack.c.b16 %v1678, %v1673
        %v1969 = vpack.c.b16 %v1679, %v1674
        %v1970 = vpack.c.b16 %v1685, %v1680
        %v1971 = vpack.c.b16 %v1686, %v1681
        %v1972 = vpack.c.b16 %v1687, %v1682
        %v1973 = vpack.c.b16 %v1688, %v1683
        %v1974 = vpack.c.b16 %v1689, %v1684
        %v1975 = vpack.c.b16 %v1695, %v1690
        %v1976 = vpack.c.b16 %v1696, %v1691
        %v1977 = vpack.c.b16 %v1697, %v1692
        %v1978 = vpack.c.b16 %v1698, %v1693
        %v1979 = vpack.c.b16 %v1699, %v1694
        %v1980 = vpack.c.b16 %v1705, %v1700
        %v1981 = vpack.c.b16 %v1706, %v1701
        %v1982 = vpack.c.b16 %v1707, %v1702
        %v1983 = vpack.c.b16 %v1708, %v1703
        %v1984 = vpack.c.b16 %v1709, %v1704
        %v1985 = vpack.c.b16 %v1715, %v1710
        %v1986 = vpack.c.b16 %v1716, %v1711
        %v1987 = vpack.c.b16 %v1717, %v1712
        %v1988 = vpack.c.b16 %v1718, %v1713
        %v1989 = vpack.c.b16 %v1719, %v1714
        %v1990 = vpack.c.b16 %v1725, %v1720
        %v1991 = vpack.c.b16 %v1726, %v1721
        %v1992 = vpack.c.b16 %v1727, %v1722
        %v1993 = vpack.c.b16 %v1728, %v1723
        %v1994 = vpack.c.b16 %v1729, %v1724
        %v1995 = vpack.c.b16 %v1735, %v1730
        %v1996 = vpack.c.b16 %v1736, %v1731
        %v1997 = vpack.c.b16 %v1737, %v1732
        %v1998 = vpack.c.b16 %v1738, %v1733
        %v1999 = vpack.c.b16 %v1739, %v1734
        %v2000 = vpack.c.b16 %v1745, %v1740
        %v2001 = vpack.c.b16 %v1746, %v1741
        %v2002 = vpack.c.b16 %v1747, %v1742
        %v2003 = vpack.c.b16 %v1748, %v1743
        %v2004 = vpack.c.b16 %v1749, %v1744
        %v2005 = vpack.c.b16 %v1755, %v1750
        %v2006 = vpack.c.b16 %v1756, %v1751
        %v2007 = vpack.c.b16 %v1757, %v1752
        %v2008 = vpack.c.b16 %v1758, %v1753
        %v2009 = vpack.c.b16 %v1759, %v1754
        %v2010 = vpack.c.b16 %v1765, %v1760
        %v2011 = vpack.c.b16 %v1766, %v1761
        %v2012 = vpack.c.b16 %v1767, %v1762
        %v2013 = vpack.c.b16 %v1768, %v1763
        %v2014 = vpack.c.b16 %v1769, %v1764
        %v2015 = vpack.c.b16 %v1775, %v1770
        %v2016 = vpack.c.b16 %v1776, %v1771
        %v2017 = vpack.c.b16 %v1777, %v1772
        %v2018 = vpack.c.b16 %v1778, %v1773
        %v2019 = vpack.c.b16 %v1779, %v1774
        %v2020 = vpack.c.b16 %v1785, %v1780
        %v2021 = vpack.c.b16 %v1786, %v1781
        %v2022 = vpack.c.b16 %v1787, %v1782
        %v2023 = vpack.c.b16 %v1788, %v1783
        %v2024 = vpack.c.b16 %v1789, %v1784
        %v2025 = vpack.c.b16 %v1795, %v1790
        %v2026 = vpack.c.b16 %v1796, %v1791
        %v2027 = vpack.c.b16 %v1797, %v1792
        %v2028 = vpack.c.b16 %v1798, %v1793
        %v2029 = vpack.c.b16 %v1799, %v1794
        %v2030 = vpack.c.b16 %v1805, %v1800
        %v2031 = vpack.c.b16 %v1806, %v1801
        %v2032 = vpack.c.b16 %v1807, %v1802
        %v2033 = vpack.c.b16 %v1808, %v1803
        %v2034 = vpack.c.b16 %v1809, %v1804
        %v2035 = vpack.c.b16 %v1815, %v1810
        %v2036 = vpack.c.b16 %v1816, %v1811
        %v2037 = vpack.c.b16 %v1817, %v1812
        %v2038 = vpack.c.b16 %v1818, %v1813
        %v2039 = vpack.c.b16 %v1819, %v1814
        %v2040 = vpack.c.b16 %v1825, %v1820
        %v2041 = vpack.c.b16 %v1826, %v1821
        %v2042 = vpack.c.b16 %v1827, %v1822
        %v2043 = vpack.c.b16 %v1828, %v1823
        %v2044 = vpack.c.b16 %v1829, %v1824
        %v2045 = vpack.c.b16 %v1835, %v1830
        %v2046 = vpack.c.b16 %v1836, %v1831
        %v2047 = vpack.c.b16 %v1837, %v1832
        %v2048 = vpack.c.b16 %v1838, %v1833
        %v2049 = vpack.c.b16 %v1839, %v1834
        %v2050 = vpack.c.b16 %v1845, %v1840
        %v2051 = vpack.c.b16 %v1846, %v1841
        %v2052 = vpack.c.b16 %v1847, %v1842
        %v2053 = vpack.c.b16 %v1848, %v1843
        %v2054 = vpack.c.b16 %v1849, %v1844
        %v2055 = vpack.c.b16 %v1855, %v1850
        %v2056 = vpack.c.b16 %v1856, %v1851
        %v2057 = vpack.c.b16 %v1857, %v1852
        %v2058 = vpack.c.b16 %v1858, %v1853
        %v2059 = vpack.c.b16 %v1859, %v1854
        %v2060 = vpack.c.b16 %v1865, %v1860
        %v2061 = vpack.c.b16 %v1866, %v1861
        %v2062 = vpack.c.b16 %v1867, %v1862
        %v2063 = vpack.c.b16 %v1868, %v1863
        %v2064 = vpack.c.b16 %v1869, %v1864
        %v2065 = vpack.c.b16 %v1875, %v1870
        %v2066 = vpack.c.b16 %v1876, %v1871
        %v2067 = vpack.c.b16 %v1877, %v1872
        %v2068 = vpack.c.b16 %v1878, %v1873
        %v2069 = vpack.c.b16 %v1879, %v1874
        %v2070 = vpack.c.b16 %v1885, %v1880
        %v2071 = vpack.c.b16 %v1886, %v1881
        %v2072 = vpack.c.b16 %v1887, %v1882
        %v2073 = vpack.c.b16 %v1888, %v1883
        %v2074 = vpack.c.b16 %v1889, %v1884
        %v2075 = vpack.c.b16 %v1895, %v1890
        %v2076 = vpack.c.b16 %v1896, %v1891
        %v2077 = vpack.c.b16 %v1897, %v1892
        %v2078 = vpack.c.b16 %v1898, %v1893
        %v2079 = vpack.c.b16 %v1899, %v1894
        %v2080 = vpack.c.b16 %v1905, %v1900
        %v2081 = vpack.c.b16 %v1906, %v1901
        %v2082 = vpack.c.b16 %v1907, %v1902
        %v2083 = vpack.c.b16 %v1908, %v1903
        %v2084 = vpack.c.b16 %v1909, %v1904
        %v2085 = vpack.c.b16 %v1915, %v1910
        %v2086 = vpack.c.b16 %v1916, %v1911
        %v2087 = vpack.c.b16 %v1917, %v1912
        %v2088 = vpack.c.b16 %v1918, %v1913
        %v2089 = vpack.c.b16 %v1919, %v1914
        %v2090 = vpack.c.b16 %v1925, %v1920
        %v2091 = vpack.c.b16 %v1926, %v1921
        %v2092 = vpack.c.b16 %v1927, %v1922
        %v2093 = vpack.c.b16 %v1928, %v1923
        %v2094 = vpack.c.b16 %v1929, %v1924
        %v2095 = vpack.c.b16 %v1935, %v1930
        %v2096 = vpack.c.b16 %v1936, %v1931
        %v2097 = vpack.c.b16 %v1937, %v1932
        %v2098 = vpack.c.b16 %v1938, %v1933
        %v2099 = vpack.c.b16 %v1939, %v1934
        %2260 = vmatprep.subr.bf16.mxu0 %v1941
        %2261 = vmatpush1.bf16.msra.mxu0 %v1940
        %2262 = vmatprep.subr.bf16.mxu0 %v1946
        %2263 = vmatpush1.bf16.msra.mxu0 %v1945
        %2264 = vmatprep.subr.bf16.mxu0 %v1951
        %2265 = vmatpush1.bf16.msra.mxu0 %v1950
        %2266 = vmatprep.subr.bf16.mxu0 %v1956
        %2267 = vmatpush1.bf16.msra.mxu0 %v1955
        %2268 = vmatprep.subr.bf16.mxu0 %v1961
        %2269 = vmatpush1.bf16.msra.mxu0 %v1960
        %2270 = vmatprep.subr.bf16.mxu0 %v1966
        %2271 = vmatpush1.bf16.msra.mxu0 %v1965
        %2272 = vmatprep.subr.bf16.mxu0 %v1971
        %2273 = vmatpush1.bf16.msra.mxu0 %v1970
        %2274 = vmatprep.subr.bf16.mxu0 %v1976
        %2275 = vmatpush1.bf16.msra.mxu0 %v1975
        %2276 = vmatprep.subr.bf16.mxu0 %v1981
        %2277 = vmatpush1.bf16.msra.mxu0 %v1980
        %2278 = vmatprep.subr.bf16.mxu0 %v1986
        %2279 = vmatpush1.bf16.msra.mxu0 %v1985
        %2280 = vmatprep.subr.bf16.mxu0 %v1991
        %2281 = vmatpush1.bf16.msra.mxu0 %v1990
        %2282 = vmatprep.subr.bf16.mxu0 %v1996
        %2283 = vmatpush1.bf16.msra.mxu0 %v1995
        %2284 = vmatprep.subr.bf16.mxu0 %v2001
        %2285 = vmatpush1.bf16.msra.mxu0 %v2000
        %2286 = vmatprep.subr.bf16.mxu0 %v2006
        %2287 = vmatpush1.bf16.msra.mxu0 %v2005
        %2288 = vmatprep.subr.bf16.mxu0 %v2011
        %2289 = vmatpush1.bf16.msra.mxu0 %v2010
        %2290 = vmatprep.subr.bf16.mxu0 %v2016
        %2291 = vmatpush1.bf16.msra.mxu0 %v2015
        %2292 = vmatprep.mubr.bf16.mxu0 %v1146
        %2293 = vmatmul.mubr.bf16.gmra.mrb[0].mxu0 %v1145
        %v2294 = vpop.f32.mrb[0].mxu0
        %v2295 = vadd.f32 %v1406, %v2294
        %v2296 = vpop.f32.mrb[0].mxu0
        %v2297 = vadd.f32 %v1410, %v2296
        %v2298 = vpop.f32.mrb[0].mxu0
        %v2299 = vadd.f32 %v1406, %v2298
        %v2300 = vpop.f32.mrb[0].mxu0
        %v2301 = vadd.f32 %v1410, %v2300
        %2302 = vmatprep.mubr.bf16.mxu0 %v1150
        %2303 = vmatmul.mubr.bf16.gmra.mrb[0].mxu0 %v1149
        %v2304 = vpop.f32.mrb[0].mxu0
        %v2305 = vadd.f32 %v1406, %v2304
        %v2306 = vpop.f32.mrb[0].mxu0
        %v2307 = vadd.f32 %v1410, %v2306
        %v2308 = vpop.f32.mrb[0].mxu0
        %v2309 = vadd.f32 %v1406, %v2308
        %v2310 = vpop.f32.mrb[0].mxu0
        %v2311 = vadd.f32 %v1410, %v2310
        %2312 = vmatprep.mubr.bf16.mxu0 %v1154
        %2313 = vmatmul.mubr.bf16.gmra.mrb[0].mxu0 %v1153
        %v2314 = vpop.f32.mrb[0].mxu0
        %v2315 = vadd.f32 %v1406, %v2314
        %v2316 = vpop.f32.mrb[0].mxu0
        %v2317 = vadd.f32 %v1410, %v2316
        %v2318 = vpop.f32.mrb[0].mxu0
        %v2319 = vadd.f32 %v1406, %v2318
        %v2320 = vpop.f32.mrb[0].mxu0
        %v2321 = vadd.f32 %v1410, %v2320
        %2322 = vmatprep.mubr.bf16.mxu0 %v1158
        %2323 = vmatmul.mubr.bf16.gmra.mrb[0].mxu0 %v1157
        %v2324 = vpop.f32.mrb[0].mxu0
        %v2325 = vadd.f32 %v1406, %v2324
        %v2326 = vpop.f32.mrb[0].mxu0
        %v2327 = vadd.f32 %v1410, %v2326
        %v2328 = vpop.f32.mrb[0].mxu0
        %v2329 = vadd.f32 %v1406, %v2328
        %v2330 = vpop.f32.mrb[0].mxu0
        %v2331 = vadd.f32 %v1410, %v2330
        %2332 = vmatprep.mubr.bf16.mxu0 %v1162
        %2333 = vmatmul.mubr.bf16.gmra.mrb[0].mxu0 %v1161
        %v2334 = vpop.f32.mrb[0].mxu0
        %v2335 = vadd.f32 %v1406, %v2334
        %v2336 = vpop.f32.mrb[0].mxu0
        %v2337 = vadd.f32 %v1410, %v2336
        %v2338 = vpop.f32.mrb[0].mxu0
        %v2339 = vadd.f32 %v1406, %v2338
        %v2340 = vpop.f32.mrb[0].mxu0
        %v2341 = vadd.f32 %v1410, %v2340
        %2342 = vmatprep.mubr.bf16.mxu0 %v1166
        %2343 = vmatmul.mubr.bf16.gmra.mrb[0].mxu0 %v1165
        %v2344 = vpop.f32.mrb[0].mxu0
        %v2345 = vadd.f32 %v1406, %v2344
        %v2346 = vpop.f32.mrb[0].mxu0
        %v2347 = vadd.f32 %v1410, %v2346
        %v2348 = vpop.f32.mrb[0].mxu0
        %v2349 = vadd.f32 %v1406, %v2348
        %v2350 = vpop.f32.mrb[0].mxu0
        %v2351 = vadd.f32 %v1410, %v2350
        %2352 = vmatprep.mubr.bf16.mxu0 %v1170
        %2353 = vmatmul.mubr.bf16.gmra.mrb[0].mxu0 %v1169
        %v2354 = vpop.f32.mrb[0].mxu0
        %v2355 = vadd.f32 %v1406, %v2354
        %v2356 = vpop.f32.mrb[0].mxu0
        %v2357 = vadd.f32 %v1410, %v2356
        %v2358 = vpop.f32.mrb[0].mxu0
        %v2359 = vadd.f32 %v1406, %v2358
        %v2360 = vpop.f32.mrb[0].mxu0
        %v2361 = vadd.f32 %v1410, %v2360
        %2362 = vmatprep.mubr.bf16.mxu0 %v1174
        %2363 = vmatmul.mubr.bf16.gmra.mrb[0].mxu0 %v1173
        %v2364 = vpop.f32.mrb[0].mxu0
        %v2365 = vadd.f32 %v1406, %v2364
        %v2366 = vpop.f32.mrb[0].mxu0
        %v2367 = vadd.f32 %v1410, %v2366
        %v2368 = vpop.f32.mrb[0].mxu0
        %v2369 = vadd.f32 %v1406, %v2368
        %v2370 = vpop.f32.mrb[0].mxu0
        %v2371 = vadd.f32 %v1410, %v2370
        %2372 = vmatprep.mubr.bf16.mxu0 %v1178
        %2373 = vmatmul.mubr.bf16.gmra.mrb[0].mxu0 %v1177
        %v2374 = vpop.f32.mrb[0].mxu0
        %v2375 = vadd.f32 %v1406, %v2374
        %v2376 = vpop.f32.mrb[0].mxu0
        %v2377 = vadd.f32 %v1410, %v2376
        %v2378 = vpop.f32.mrb[0].mxu0
        %v2379 = vadd.f32 %v1406, %v2378
        %v2380 = vpop.f32.mrb[0].mxu0
        %v2381 = vadd.f32 %v1410, %v2380
        %2382 = vmatprep.mubr.bf16.mxu0 %v1182
        %2383 = vmatmul.mubr.bf16.gmra.mrb[0].mxu0 %v1181
        %v2384 = vpop.f32.mrb[0].mxu0
        %v2385 = vadd.f32 %v1406, %v2384
        %v2386 = vpop.f32.mrb[0].mxu0
        %v2387 = vadd.f32 %v1410, %v2386
        %v2388 = vpop.f32.mrb[0].mxu0
        %v2389 = vadd.f32 %v1406, %v2388
        %v2390 = vpop.f32.mrb[0].mxu0
        %v2391 = vadd.f32 %v1410, %v2390
        %2392 = vmatprep.mubr.bf16.mxu0 %v1186
        %2393 = vmatmul.mubr.bf16.gmra.mrb[0].mxu0 %v1185
        %v2394 = vpop.f32.mrb[0].mxu0
        %v2395 = vadd.f32 %v1406, %v2394
        %v2396 = vpop.f32.mrb[0].mxu0
        %v2397 = vadd.f32 %v1410, %v2396
        %v2398 = vpop.f32.mrb[0].mxu0
        %v2399 = vadd.f32 %v1406, %v2398
        %v2400 = vpop.f32.mrb[0].mxu0
        %v2401 = vadd.f32 %v1410, %v2400
        %2402 = vmatprep.mubr.bf16.mxu0 %v1190
        %2403 = vmatmul.mubr.bf16.gmra.mrb[0].mxu0 %v1189
        %v2404 = vpop.f32.mrb[0].mxu0
        %v2405 = vadd.f32 %v1406, %v2404
        %v2406 = vpop.f32.mrb[0].mxu0
        %v2407 = vadd.f32 %v1410, %v2406
        %v2408 = vpop.f32.mrb[0].mxu0
        %v2409 = vadd.f32 %v1406, %v2408
        %v2410 = vpop.f32.mrb[0].mxu0
        %v2411 = vadd.f32 %v1410, %v2410
        %2412 = vmatprep.mubr.bf16.mxu0 %v1194
        %2413 = vmatmul.mubr.bf16.gmra.mrb[0].mxu0 %v1193
        %v2414 = vpop.f32.mrb[0].mxu0
        %v2415 = vadd.f32 %v1406, %v2414
        %v2416 = vpop.f32.mrb[0].mxu0
        %v2417 = vadd.f32 %v1410, %v2416
        %v2418 = vpop.f32.mrb[0].mxu0
        %v2419 = vadd.f32 %v1406, %v2418
        %v2420 = vpop.f32.mrb[0].mxu0
        %v2421 = vadd.f32 %v1410, %v2420
        %2422 = vmatprep.mubr.bf16.mxu0 %v1198
        %2423 = vmatmul.mubr.bf16.gmra.mrb[0].mxu0 %v1197
        %v2424 = vpop.f32.mrb[0].mxu0
        %v2425 = vadd.f32 %v1406, %v2424
        %v2426 = vpop.f32.mrb[0].mxu0
        %v2427 = vadd.f32 %v1410, %v2426
        %v2428 = vpop.f32.mrb[0].mxu0
        %v2429 = vadd.f32 %v1406, %v2428
        %v2430 = vpop.f32.mrb[0].mxu0
        %v2431 = vadd.f32 %v1410, %v2430
        %2432 = vmatprep.mubr.bf16.mxu0 %v1202
        %2433 = vmatmul.mubr.bf16.gmra.mrb[0].mxu0 %v1201
        %v2434 = vpop.f32.mrb[0].mxu0
        %v2435 = vadd.f32 %v1406, %v2434
        %v2436 = vpop.f32.mrb[0].mxu0
        %v2437 = vadd.f32 %v1410, %v2436
        %v2438 = vpop.f32.mrb[0].mxu0
        %v2439 = vadd.f32 %v1406, %v2438
        %v2440 = vpop.f32.mrb[0].mxu0
        %v2441 = vadd.f32 %v1410, %v2440
        %2442 = vmatprep.mubr.bf16.mxu0 %v1206
        %2443 = vmatmul.mubr.bf16.gmra.mrb[0].mxu0 %v1205
        %v2444 = vpop.f32.mrb[0].mxu0
        %v2445 = vadd.f32 %v1406, %v2444
        %v2446 = vpop.f32.mrb[0].mxu0
        %v2447 = vadd.f32 %v1410, %v2446
        %v2448 = vpop.f32.mrb[0].mxu0
        %v2449 = vadd.f32 %v1406, %v2448
        %v2450 = vpop.f32.mrb[0].mxu0
        %v2451 = vadd.f32 %v1410, %v2450
        %2452 = vdwg.mxu0
        %2453 = vmatprep.subr.bf16.mxu0 %v2021
        %2454 = vmatpush1.bf16.msra.mxu0 %v2020
        %2455 = vmatprep.subr.bf16.mxu0 %v2026
        %2456 = vmatpush1.bf16.msra.mxu0 %v2025
        %2457 = vmatprep.subr.bf16.mxu0 %v2031
        %2458 = vmatpush1.bf16.msra.mxu0 %v2030
        %2459 = vmatprep.subr.bf16.mxu0 %v2036
        %2460 = vmatpush1.bf16.msra.mxu0 %v2035
        %2461 = vmatprep.subr.bf16.mxu0 %v2041
        %2462 = vmatpush1.bf16.msra.mxu0 %v2040
        %2463 = vmatprep.subr.bf16.mxu0 %v2046
        %2464 = vmatpush1.bf16.msra.mxu0 %v2045
        %2465 = vmatprep.subr.bf16.mxu0 %v2051
        %2466 = vmatpush1.bf16.msra.mxu0 %v2050
        %2467 = vmatprep.subr.bf16.mxu0 %v2056
        %2468 = vmatpush1.bf16.msra.mxu0 %v2055
        %2469 = vmatprep.subr.bf16.mxu0 %v2061
        %2470 = vmatpush1.bf16.msra.mxu0 %v2060
        %2471 = vmatprep.subr.bf16.mxu0 %v2066
        %2472 = vmatpush1.bf16.msra.mxu0 %v2065
        %2473 = vmatprep.subr.bf16.mxu0 %v2071
        %2474 = vmatpush1.bf16.msra.mxu0 %v2070
        %2475 = vmatprep.subr.bf16.mxu0 %v2076
        %2476 = vmatpush1.bf16.msra.mxu0 %v2075
        %2477 = vmatprep.subr.bf16.mxu0 %v2081
        %2478 = vmatpush1.bf16.msra.mxu0 %v2080
        %2479 = vmatprep.subr.bf16.mxu0 %v2086
        %2480 = vmatpush1.bf16.msra.mxu0 %v2085
        %2481 = vmatprep.subr.bf16.mxu0 %v2091
        %2482 = vmatpush1.bf16.msra.mxu0 %v2090
        %2483 = vmatprep.subr.bf16.mxu0 %v2096
        %2484 = vmatpush1.bf16.msra.mxu0 %v2095
        %2485 = vmatprep.mubr.bf16.mxu0 %v1148
        %2486 = vmatmul.mubr.bf16.gmra.mrb[0].mxu0 %v1147
        %v2487 = vpop.f32.mrb[0].mxu0
        %v2488 = vadd.f32 %v2295, %v2487
        %v2489 = vpop.f32.mrb[0].mxu0
        %v2490 = vadd.f32 %v2297, %v2489
        %v2491 = vpop.f32.mrb[0].mxu0
        %v2492 = vadd.f32 %v2299, %v2491
        %v2493 = vpop.f32.mrb[0].mxu0
        %v2494 = vadd.f32 %v2301, %v2493
        %2495 = vmatprep.mubr.bf16.mxu0 %v1152
        %2496 = vmatmul.mubr.bf16.gmra.mrb[0].mxu0 %v1151
        %v2497 = vpop.f32.mrb[0].mxu0
        %v2498 = vadd.f32 %v2305, %v2497
        %v2499 = vpop.f32.mrb[0].mxu0
        %v2500 = vadd.f32 %v2307, %v2499
        %v2501 = vpop.f32.mrb[0].mxu0
        %v2502 = vadd.f32 %v2309, %v2501
        %v2503 = vpop.f32.mrb[0].mxu0
        %v2504 = vadd.f32 %v2311, %v2503
        %2505 = vmatprep.mubr.bf16.mxu0 %v1156
        %2506 = vmatmul.mubr.bf16.gmra.mrb[0].mxu0 %v1155
        %v2507 = vpop.f32.mrb[0].mxu0
        %v2508 = vadd.f32 %v2315, %v2507
        %v2509 = vpop.f32.mrb[0].mxu0
        %v2510 = vadd.f32 %v2317, %v2509
        %v2511 = vpop.f32.mrb[0].mxu0
        %v2512 = vadd.f32 %v2319, %v2511
        %v2513 = vpop.f32.mrb[0].mxu0
        %v2514 = vadd.f32 %v2321, %v2513
        %2515 = vmatprep.mubr.bf16.mxu0 %v1160
        %2516 = vmatmul.mubr.bf16.gmra.mrb[0].mxu0 %v1159
        %v2517 = vpop.f32.mrb[0].mxu0
        %v2518 = vadd.f32 %v2325, %v2517
        %v2519 = vpop.f32.mrb[0].mxu0
        %v2520 = vadd.f32 %v2327, %v2519
        %v2521 = vpop.f32.mrb[0].mxu0
        %v2522 = vadd.f32 %v2329, %v2521
        %v2523 = vpop.f32.mrb[0].mxu0
        %v2524 = vadd.f32 %v2331, %v2523
        %2525 = vmatprep.mubr.bf16.mxu0 %v1164
        %2526 = vmatmul.mubr.bf16.gmra.mrb[0].mxu0 %v1163
        %v2527 = vpop.f32.mrb[0].mxu0
        %v2528 = vadd.f32 %v2335, %v2527
        %v2529 = vpop.f32.mrb[0].mxu0
        %v2530 = vadd.f32 %v2337, %v2529
        %v2531 = vpop.f32.mrb[0].mxu0
        %v2532 = vadd.f32 %v2339, %v2531
        %v2533 = vpop.f32.mrb[0].mxu0
        %v2534 = vadd.f32 %v2341, %v2533
        %2535 = vmatprep.mubr.bf16.mxu0 %v1168
        %2536 = vmatmul.mubr.bf16.gmra.mrb[0].mxu0 %v1167
        %v2537 = vpop.f32.mrb[0].mxu0
        %v2538 = vadd.f32 %v2345, %v2537
        %v2539 = vpop.f32.mrb[0].mxu0
        %v2540 = vadd.f32 %v2347, %v2539
        %v2541 = vpop.f32.mrb[0].mxu0
        %v2542 = vadd.f32 %v2349, %v2541
        %v2543 = vpop.f32.mrb[0].mxu0
        %v2544 = vadd.f32 %v2351, %v2543
        %2545 = vmatprep.mubr.bf16.mxu0 %v1172
        %2546 = vmatmul.mubr.bf16.gmra.mrb[0].mxu0 %v1171
        %v2547 = vpop.f32.mrb[0].mxu0
        %v2548 = vadd.f32 %v2355, %v2547
        %v2549 = vpop.f32.mrb[0].mxu0
        %v2550 = vadd.f32 %v2357, %v2549
        %v2551 = vpop.f32.mrb[0].mxu0
        %v2552 = vadd.f32 %v2359, %v2551
        %v2553 = vpop.f32.mrb[0].mxu0
        %v2554 = vadd.f32 %v2361, %v2553
        %2555 = vmatprep.mubr.bf16.mxu0 %v1176
        %2556 = vmatmul.mubr.bf16.gmra.mrb[0].mxu0 %v1175
        %v2557 = vpop.f32.mrb[0].mxu0
        %v2558 = vadd.f32 %v2365, %v2557
        %v2559 = vpop.f32.mrb[0].mxu0
        %v2560 = vadd.f32 %v2367, %v2559
        %v2561 = vpop.f32.mrb[0].mxu0
        %v2562 = vadd.f32 %v2369, %v2561
        %v2563 = vpop.f32.mrb[0].mxu0
        %v2564 = vadd.f32 %v2371, %v2563
        %2565 = vmatprep.mubr.bf16.mxu0 %v1180
        %2566 = vmatmul.mubr.bf16.gmra.mrb[0].mxu0 %v1179
        %v2567 = vpop.f32.mrb[0].mxu0
        %v2568 = vadd.f32 %v2375, %v2567
        %v2569 = vpop.f32.mrb[0].mxu0
        %v2570 = vadd.f32 %v2377, %v2569
        %v2571 = vpop.f32.mrb[0].mxu0
        %v2572 = vadd.f32 %v2379, %v2571
        %v2573 = vpop.f32.mrb[0].mxu0
        %v2574 = vadd.f32 %v2381, %v2573
        %2575 = vmatprep.mubr.bf16.mxu0 %v1184
        %2576 = vmatmul.mubr.bf16.gmra.mrb[0].mxu0 %v1183
        %v2577 = vpop.f32.mrb[0].mxu0
        %v2578 = vadd.f32 %v2385, %v2577
        %v2579 = vpop.f32.mrb[0].mxu0
        %v2580 = vadd.f32 %v2387, %v2579
        %v2581 = vpop.f32.mrb[0].mxu0
        %v2582 = vadd.f32 %v2389, %v2581
        %v2583 = vpop.f32.mrb[0].mxu0
        %v2584 = vadd.f32 %v2391, %v2583
        %2585 = vmatprep.mubr.bf16.mxu0 %v1188
        %2586 = vmatmul.mubr.bf16.gmra.mrb[0].mxu0 %v1187
        %v2587 = vpop.f32.mrb[0].mxu0
        %v2588 = vadd.f32 %v2395, %v2587
        %v2589 = vpop.f32.mrb[0].mxu0
        %v2590 = vadd.f32 %v2397, %v2589
        %v2591 = vpop.f32.mrb[0].mxu0
        %v2592 = vadd.f32 %v2399, %v2591
        %v2593 = vpop.f32.mrb[0].mxu0
        %v2594 = vadd.f32 %v2401, %v2593
        %2595 = vmatprep.mubr.bf16.mxu0 %v1192
        %2596 = vmatmul.mubr.bf16.gmra.mrb[0].mxu0 %v1191
        %v2597 = vpop.f32.mrb[0].mxu0
        %v2598 = vadd.f32 %v2405, %v2597
        %v2599 = vpop.f32.mrb[0].mxu0
        %v2600 = vadd.f32 %v2407, %v2599
        %v2601 = vpop.f32.mrb[0].mxu0
        %v2602 = vadd.f32 %v2409, %v2601
        %v2603 = vpop.f32.mrb[0].mxu0
        %v2604 = vadd.f32 %v2411, %v2603
        %2605 = vmatprep.mubr.bf16.mxu0 %v1196
        %2606 = vmatmul.mubr.bf16.gmra.mrb[0].mxu0 %v1195
        %v2607 = vpop.f32.mrb[0].mxu0
        %v2608 = vadd.f32 %v2415, %v2607
        %v2609 = vpop.f32.mrb[0].mxu0
        %v2610 = vadd.f32 %v2417, %v2609
        %v2611 = vpop.f32.mrb[0].mxu0
        %v2612 = vadd.f32 %v2419, %v2611
        %v2613 = vpop.f32.mrb[0].mxu0
        %v2614 = vadd.f32 %v2421, %v2613
        %2615 = vmatprep.mubr.bf16.mxu0 %v1200
        %2616 = vmatmul.mubr.bf16.gmra.mrb[0].mxu0 %v1199
        %v2617 = vpop.f32.mrb[0].mxu0
        %v2618 = vadd.f32 %v2425, %v2617
        %v2619 = vpop.f32.mrb[0].mxu0
        %v2620 = vadd.f32 %v2427, %v2619
        %v2621 = vpop.f32.mrb[0].mxu0
        %v2622 = vadd.f32 %v2429, %v2621
        %v2623 = vpop.f32.mrb[0].mxu0
        %v2624 = vadd.f32 %v2431, %v2623
        %2625 = vmatprep.mubr.bf16.mxu0 %v1204
        %2626 = vmatmul.mubr.bf16.gmra.mrb[0].mxu0 %v1203
        %v2627 = vpop.f32.mrb[0].mxu0
        %v2628 = vadd.f32 %v2435, %v2627
        %v2629 = vpop.f32.mrb[0].mxu0
        %v2630 = vadd.f32 %v2437, %v2629
        %v2631 = vpop.f32.mrb[0].mxu0
        %v2632 = vadd.f32 %v2439, %v2631
        %v2633 = vpop.f32.mrb[0].mxu0
        %v2634 = vadd.f32 %v2441, %v2633
        %2635 = vmatprep.mubr.bf16.mxu0 %v1208
        %2636 = vmatmul.mubr.bf16.gmra.mrb[0].mxu0 %v1207
        %v2637 = vpop.f32.mrb[0].mxu0
        %v2638 = vadd.f32 %v2445, %v2637
        %v2639 = vpop.f32.mrb[0].mxu0
        %v2640 = vadd.f32 %v2447, %v2639
        %v2641 = vpop.f32.mrb[0].mxu0
        %v2642 = vadd.f32 %v2449, %v2641
        %v2643 = vpop.f32.mrb[0].mxu0
        %v2644 = vadd.f32 %v2451, %v2643
        %2645 = vdwg.mxu0
        %2646 = vmatprep.subr.bf16.mxu0 %v1943
        %2647 = vmatpush1.bf16.msra.mxu0 %v1942
        %2648 = vmatprep.subr.bf16.mxu0 %v1948
        %2649 = vmatpush1.bf16.msra.mxu0 %v1947
        %2650 = vmatprep.subr.bf16.mxu0 %v1953
        %2651 = vmatpush1.bf16.msra.mxu0 %v1952
        %2652 = vmatprep.subr.bf16.mxu0 %v1958
        %2653 = vmatpush1.bf16.msra.mxu0 %v1957
        %2654 = vmatprep.subr.bf16.mxu0 %v1963
        %2655 = vmatpush1.bf16.msra.mxu0 %v1962
        %2656 = vmatprep.subr.bf16.mxu0 %v1968
        %2657 = vmatpush1.bf16.msra.mxu0 %v1967
        %2658 = vmatprep.subr.bf16.mxu0 %v1973
        %2659 = vmatpush1.bf16.msra.mxu0 %v1972
        %2660 = vmatprep.subr.bf16.mxu0 %v1978
        %2661 = vmatpush1.bf16.msra.mxu0 %v1977
        %2662 = vmatprep.subr.bf16.mxu0 %v1983
        %2663 = vmatpush1.bf16.msra.mxu0 %v1982
        %2664 = vmatprep.subr.bf16.mxu0 %v1988
        %2665 = vmatpush1.bf16.msra.mxu0 %v1987
        %2666 = vmatprep.subr.bf16.mxu0 %v1993
        %2667 = vmatpush1.bf16.msra.mxu0 %v1992
        %2668 = vmatprep.subr.bf16.mxu0 %v1998
        %2669 = vmatpush1.bf16.msra.mxu0 %v1997
        %2670 = vmatprep.subr.bf16.mxu0 %v2003
        %2671 = vmatpush1.bf16.msra.mxu0 %v2002
        %2672 = vmatprep.subr.bf16.mxu0 %v2008
        %2673 = vmatpush1.bf16.msra.mxu0 %v2007
        %2674 = vmatprep.subr.bf16.mxu0 %v2013
        %2675 = vmatpush1.bf16.msra.mxu0 %v2012
        %2676 = vmatprep.subr.bf16.mxu0 %v2018
        %2677 = vmatpush1.bf16.msra.mxu0 %v2017
        %2678 = vmatprep.mubr.bf16.mxu0 %v1146
        %2679 = vmatmul.mubr.bf16.gmra.mrb[0].mxu0 %v1145
        %v2680 = vpop.f32.mrb[0].mxu0
        %v2681 = vadd.f32 %v1414, %v2680
        %v2682 = vpop.f32.mrb[0].mxu0
        %v2683 = vadd.f32 %v1418, %v2682
        %v2684 = vpop.f32.mrb[0].mxu0
        %v2685 = vadd.f32 %v1414, %v2684
        %v2686 = vpop.f32.mrb[0].mxu0
        %v2687 = vadd.f32 %v1418, %v2686
        %2688 = vmatprep.mubr.bf16.mxu0 %v1150
        %2689 = vmatmul.mubr.bf16.gmra.mrb[0].mxu0 %v1149
        %v2690 = vpop.f32.mrb[0].mxu0
        %v2691 = vadd.f32 %v1414, %v2690
        %v2692 = vpop.f32.mrb[0].mxu0
        %v2693 = vadd.f32 %v1418, %v2692
        %v2694 = vpop.f32.mrb[0].mxu0
        %v2695 = vadd.f32 %v1414, %v2694
        %v2696 = vpop.f32.mrb[0].mxu0
        %v2697 = vadd.f32 %v1418, %v2696
        %2698 = vmatprep.mubr.bf16.mxu0 %v1154
        %2699 = vmatmul.mubr.bf16.gmra.mrb[0].mxu0 %v1153
        %v2700 = vpop.f32.mrb[0].mxu0
        %v2701 = vadd.f32 %v1414, %v2700
        %v2702 = vpop.f32.mrb[0].mxu0
        %v2703 = vadd.f32 %v1418, %v2702
        %v2704 = vpop.f32.mrb[0].mxu0
        %v2705 = vadd.f32 %v1414, %v2704
        %v2706 = vpop.f32.mrb[0].mxu0
        %v2707 = vadd.f32 %v1418, %v2706
        %2708 = vmatprep.mubr.bf16.mxu0 %v1158
        %2709 = vmatmul.mubr.bf16.gmra.mrb[0].mxu0 %v1157
        %v2710 = vpop.f32.mrb[0].mxu0
        %v2711 = vadd.f32 %v1414, %v2710
        %v2712 = vpop.f32.mrb[0].mxu0
        %v2713 = vadd.f32 %v1418, %v2712
        %v2714 = vpop.f32.mrb[0].mxu0
        %v2715 = vadd.f32 %v1414, %v2714
        %v2716 = vpop.f32.mrb[0].mxu0
        %v2717 = vadd.f32 %v1418, %v2716
        %2718 = vmatprep.mubr.bf16.mxu0 %v1162
        %2719 = vmatmul.mubr.bf16.gmra.mrb[0].mxu0 %v1161
        %v2720 = vpop.f32.mrb[0].mxu0
        %v2721 = vadd.f32 %v1414, %v2720
        %v2722 = vpop.f32.mrb[0].mxu0
        %v2723 = vadd.f32 %v1418, %v2722
        %v2724 = vpop.f32.mrb[0].mxu0
        %v2725 = vadd.f32 %v1414, %v2724
        %v2726 = vpop.f32.mrb[0].mxu0
        %v2727 = vadd.f32 %v1418, %v2726
        %2728 = vmatprep.mubr.bf16.mxu0 %v1166
        %2729 = vmatmul.mubr.bf16.gmra.mrb[0].mxu0 %v1165
        %v2730 = vpop.f32.mrb[0].mxu0
        %v2731 = vadd.f32 %v1414, %v2730
        %v2732 = vpop.f32.mrb[0].mxu0
        %v2733 = vadd.f32 %v1418, %v2732
        %v2734 = vpop.f32.mrb[0].mxu0
        %v2735 = vadd.f32 %v1414, %v2734
        %v2736 = vpop.f32.mrb[0].mxu0
        %v2737 = vadd.f32 %v1418, %v2736
        %2738 = vmatprep.mubr.bf16.mxu0 %v1170
        %2739 = vmatmul.mubr.bf16.gmra.mrb[0].mxu0 %v1169
        %v2740 = vpop.f32.mrb[0].mxu0
        %v2741 = vadd.f32 %v1414, %v2740
        %v2742 = vpop.f32.mrb[0].mxu0
        %v2743 = vadd.f32 %v1418, %v2742
        %v2744 = vpop.f32.mrb[0].mxu0
        %v2745 = vadd.f32 %v1414, %v2744
        %v2746 = vpop.f32.mrb[0].mxu0
        %v2747 = vadd.f32 %v1418, %v2746
        %2748 = vmatprep.mubr.bf16.mxu0 %v1174
        %2749 = vmatmul.mubr.bf16.gmra.mrb[0].mxu0 %v1173
        %v2750 = vpop.f32.mrb[0].mxu0
        %v2751 = vadd.f32 %v1414, %v2750
        %v2752 = vpop.f32.mrb[0].mxu0
        %v2753 = vadd.f32 %v1418, %v2752
        %v2754 = vpop.f32.mrb[0].mxu0
        %v2755 = vadd.f32 %v1414, %v2754
        %v2756 = vpop.f32.mrb[0].mxu0
        %v2757 = vadd.f32 %v1418, %v2756
        %2758 = vmatprep.mubr.bf16.mxu0 %v1178
        %2759 = vmatmul.mubr.bf16.gmra.mrb[0].mxu0 %v1177
        %v2760 = vpop.f32.mrb[0].mxu0
        %v2761 = vadd.f32 %v1414, %v2760
        %v2762 = vpop.f32.mrb[0].mxu0
        %v2763 = vadd.f32 %v1418, %v2762
        %v2764 = vpop.f32.mrb[0].mxu0
        %v2765 = vadd.f32 %v1414, %v2764
        %v2766 = vpop.f32.mrb[0].mxu0
        %v2767 = vadd.f32 %v1418, %v2766
        %2768 = vmatprep.mubr.bf16.mxu0 %v1182
        %2769 = vmatmul.mubr.bf16.gmra.mrb[0].mxu0 %v1181
        %v2770 = vpop.f32.mrb[0].mxu0
        %v2771 = vadd.f32 %v1414, %v2770
        %v2772 = vpop.f32.mrb[0].mxu0
        %v2773 = vadd.f32 %v1418, %v2772
        %v2774 = vpop.f32.mrb[0].mxu0
        %v2775 = vadd.f32 %v1414, %v2774
        %v2776 = vpop.f32.mrb[0].mxu0
        %v2777 = vadd.f32 %v1418, %v2776
        %2778 = vmatprep.mubr.bf16.mxu0 %v1186
        %2779 = vmatmul.mubr.bf16.gmra.mrb[0].mxu0 %v1185
        %v2780 = vpop.f32.mrb[0].mxu0
        %v2781 = vadd.f32 %v1414, %v2780
        %v2782 = vpop.f32.mrb[0].mxu0
        %v2783 = vadd.f32 %v1418, %v2782
        %v2784 = vpop.f32.mrb[0].mxu0
        %v2785 = vadd.f32 %v1414, %v2784
        %v2786 = vpop.f32.mrb[0].mxu0
        %v2787 = vadd.f32 %v1418, %v2786
        %2788 = vmatprep.mubr.bf16.mxu0 %v1190
        %2789 = vmatmul.mubr.bf16.gmra.mrb[0].mxu0 %v1189
        %v2790 = vpop.f32.mrb[0].mxu0
        %v2791 = vadd.f32 %v1414, %v2790
        %v2792 = vpop.f32.mrb[0].mxu0
        %v2793 = vadd.f32 %v1418, %v2792
        %v2794 = vpop.f32.mrb[0].mxu0
        %v2795 = vadd.f32 %v1414, %v2794
        %v2796 = vpop.f32.mrb[0].mxu0
        %v2797 = vadd.f32 %v1418, %v2796
        %2798 = vmatprep.mubr.bf16.mxu0 %v1194
        %2799 = vmatmul.mubr.bf16.gmra.mrb[0].mxu0 %v1193
        %v2800 = vpop.f32.mrb[0].mxu0
        %v2801 = vadd.f32 %v1414, %v2800
        %v2802 = vpop.f32.mrb[0].mxu0
        %v2803 = vadd.f32 %v1418, %v2802
        %v2804 = vpop.f32.mrb[0].mxu0
        %v2805 = vadd.f32 %v1414, %v2804
        %v2806 = vpop.f32.mrb[0].mxu0
        %v2807 = vadd.f32 %v1418, %v2806
        %2808 = vmatprep.mubr.bf16.mxu0 %v1198
        %2809 = vmatmul.mubr.bf16.gmra.mrb[0].mxu0 %v1197
        %v2810 = vpop.f32.mrb[0].mxu0
        %v2811 = vadd.f32 %v1414, %v2810
        %v2812 = vpop.f32.mrb[0].mxu0
        %v2813 = vadd.f32 %v1418, %v2812
        %v2814 = vpop.f32.mrb[0].mxu0
        %v2815 = vadd.f32 %v1414, %v2814
        %v2816 = vpop.f32.mrb[0].mxu0
        %v2817 = vadd.f32 %v1418, %v2816
        %2818 = vmatprep.mubr.bf16.mxu0 %v1202
        %2819 = vmatmul.mubr.bf16.gmra.mrb[0].mxu0 %v1201
        %v2820 = vpop.f32.mrb[0].mxu0
        %v2821 = vadd.f32 %v1414, %v2820
        %v2822 = vpop.f32.mrb[0].mxu0
        %v2823 = vadd.f32 %v1418, %v2822
        %v2824 = vpop.f32.mrb[0].mxu0
        %v2825 = vadd.f32 %v1414, %v2824
        %v2826 = vpop.f32.mrb[0].mxu0
        %v2827 = vadd.f32 %v1418, %v2826
        %2828 = vmatprep.mubr.bf16.mxu0 %v1206
        %2829 = vmatmul.mubr.bf16.gmra.mrb[0].mxu0 %v1205
        %v2830 = vpop.f32.mrb[0].mxu0
        %v2831 = vadd.f32 %v1414, %v2830
        %v2832 = vpop.f32.mrb[0].mxu0
        %v2833 = vadd.f32 %v1418, %v2832
        %v2834 = vpop.f32.mrb[0].mxu0
        %v2835 = vadd.f32 %v1414, %v2834
        %v2836 = vpop.f32.mrb[0].mxu0
        %v2837 = vadd.f32 %v1418, %v2836
        %2838 = vdwg.mxu0
        %2839 = vmatprep.subr.bf16.mxu0 %v2023
        %2840 = vmatpush1.bf16.msra.mxu0 %v2022
        %2841 = vmatprep.subr.bf16.mxu0 %v2028
        %2842 = vmatpush1.bf16.msra.mxu0 %v2027
        %2843 = vmatprep.subr.bf16.mxu0 %v2033
        %2844 = vmatpush1.bf16.msra.mxu0 %v2032
        %2845 = vmatprep.subr.bf16.mxu0 %v2038
        %2846 = vmatpush1.bf16.msra.mxu0 %v2037
        %2847 = vmatprep.subr.bf16.mxu0 %v2043
        %2848 = vmatpush1.bf16.msra.mxu0 %v2042
        %2849 = vmatprep.subr.bf16.mxu0 %v2048
        %2850 = vmatpush1.bf16.msra.mxu0 %v2047
        %2851 = vmatprep.subr.bf16.mxu0 %v2053
        %2852 = vmatpush1.bf16.msra.mxu0 %v2052
        %2853 = vmatprep.subr.bf16.mxu0 %v2058
        %2854 = vmatpush1.bf16.msra.mxu0 %v2057
        %2855 = vmatprep.subr.bf16.mxu0 %v2063
        %2856 = vmatpush1.bf16.msra.mxu0 %v2062
        %2857 = vmatprep.subr.bf16.mxu0 %v2068
        %2858 = vmatpush1.bf16.msra.mxu0 %v2067
        %2859 = vmatprep.subr.bf16.mxu0 %v2073
        %2860 = vmatpush1.bf16.msra.mxu0 %v2072
        %2861 = vmatprep.subr.bf16.mxu0 %v2078
        %2862 = vmatpush1.bf16.msra.mxu0 %v2077
        %2863 = vmatprep.subr.bf16.mxu0 %v2083
        %2864 = vmatpush1.bf16.msra.mxu0 %v2082
        %2865 = vmatprep.subr.bf16.mxu0 %v2088
        %2866 = vmatpush1.bf16.msra.mxu0 %v2087
        %2867 = vmatprep.subr.bf16.mxu0 %v2093
        %2868 = vmatpush1.bf16.msra.mxu0 %v2092
        %2869 = vmatprep.subr.bf16.mxu0 %v2098
        %2870 = vmatpush1.bf16.msra.mxu0 %v2097
        %2871 = vmatprep.mubr.bf16.mxu0 %v1148
        %2872 = vmatmul.mubr.bf16.gmra.mrb[0].mxu0 %v1147
        %v2873 = vpop.f32.mrb[0].mxu0
        %v2874 = vadd.f32 %v2681, %v2873
        %v2875 = vpop.f32.mrb[0].mxu0
        %v2876 = vadd.f32 %v2683, %v2875
        %v2877 = vpop.f32.mrb[0].mxu0
        %v2878 = vadd.f32 %v2685, %v2877
        %v2879 = vpop.f32.mrb[0].mxu0
        %v2880 = vadd.f32 %v2687, %v2879
        %2881 = vmatprep.mubr.bf16.mxu0 %v1152
        %2882 = vmatmul.mubr.bf16.gmra.mrb[0].mxu0 %v1151
        %v2883 = vpop.f32.mrb[0].mxu0
        %v2884 = vadd.f32 %v2691, %v2883
        %v2885 = vpop.f32.mrb[0].mxu0
        %v2886 = vadd.f32 %v2693, %v2885
        %v2887 = vpop.f32.mrb[0].mxu0
        %v2888 = vadd.f32 %v2695, %v2887
        %v2889 = vpop.f32.mrb[0].mxu0
        %v2890 = vadd.f32 %v2697, %v2889
        %2891 = vmatprep.mubr.bf16.mxu0 %v1156
        %2892 = vmatmul.mubr.bf16.gmra.mrb[0].mxu0 %v1155
        %v2893 = vpop.f32.mrb[0].mxu0
        %v2894 = vadd.f32 %v2701, %v2893
        %v2895 = vpop.f32.mrb[0].mxu0
        %v2896 = vadd.f32 %v2703, %v2895
        %v2897 = vpop.f32.mrb[0].mxu0
        %v2898 = vadd.f32 %v2705, %v2897
        %v2899 = vpop.f32.mrb[0].mxu0
        %v2900 = vadd.f32 %v2707, %v2899
        %2901 = vmatprep.mubr.bf16.mxu0 %v1160
        %2902 = vmatmul.mubr.bf16.gmra.mrb[0].mxu0 %v1159
        %v2903 = vpop.f32.mrb[0].mxu0
        %v2904 = vadd.f32 %v2711, %v2903
        %v2905 = vpop.f32.mrb[0].mxu0
        %v2906 = vadd.f32 %v2713, %v2905
        %v2907 = vpop.f32.mrb[0].mxu0
        %v2908 = vadd.f32 %v2715, %v2907
        %v2909 = vpop.f32.mrb[0].mxu0
        %v2910 = vadd.f32 %v2717, %v2909
        %2911 = vmatprep.mubr.bf16.mxu0 %v1164
        %2912 = vmatmul.mubr.bf16.gmra.mrb[0].mxu0 %v1163
        %v2913 = vpop.f32.mrb[0].mxu0
        %v2914 = vadd.f32 %v2721, %v2913
        %v2915 = vpop.f32.mrb[0].mxu0
        %v2916 = vadd.f32 %v2723, %v2915
        %v2917 = vpop.f32.mrb[0].mxu0
        %v2918 = vadd.f32 %v2725, %v2917
        %v2919 = vpop.f32.mrb[0].mxu0
        %v2920 = vadd.f32 %v2727, %v2919
        %2921 = vmatprep.mubr.bf16.mxu0 %v1168
        %2922 = vmatmul.mubr.bf16.gmra.mrb[0].mxu0 %v1167
        %v2923 = vpop.f32.mrb[0].mxu0
        %v2924 = vadd.f32 %v2731, %v2923
        %v2925 = vpop.f32.mrb[0].mxu0
        %v2926 = vadd.f32 %v2733, %v2925
        %v2927 = vpop.f32.mrb[0].mxu0
        %v2928 = vadd.f32 %v2735, %v2927
        %v2929 = vpop.f32.mrb[0].mxu0
        %v2930 = vadd.f32 %v2737, %v2929
        %2931 = vmatprep.mubr.bf16.mxu0 %v1172
        %2932 = vmatmul.mubr.bf16.gmra.mrb[0].mxu0 %v1171
        %v2933 = vpop.f32.mrb[0].mxu0
        %v2934 = vadd.f32 %v2741, %v2933
        %v2935 = vpop.f32.mrb[0].mxu0
        %v2936 = vadd.f32 %v2743, %v2935
        %v2937 = vpop.f32.mrb[0].mxu0
        %v2938 = vadd.f32 %v2745, %v2937
        %v2939 = vpop.f32.mrb[0].mxu0
        %v2940 = vadd.f32 %v2747, %v2939
        %2941 = vmatprep.mubr.bf16.mxu0 %v1176
        %2942 = vmatmul.mubr.bf16.gmra.mrb[0].mxu0 %v1175
        %v2943 = vpop.f32.mrb[0].mxu0
        %v2944 = vadd.f32 %v2751, %v2943
        %v2945 = vpop.f32.mrb[0].mxu0
        %v2946 = vadd.f32 %v2753, %v2945
        %v2947 = vpop.f32.mrb[0].mxu0
        %v2948 = vadd.f32 %v2755, %v2947
        %v2949 = vpop.f32.mrb[0].mxu0
        %v2950 = vadd.f32 %v2757, %v2949
        %2951 = vmatprep.mubr.bf16.mxu0 %v1180
        %2952 = vmatmul.mubr.bf16.gmra.mrb[0].mxu0 %v1179
        %v2953 = vpop.f32.mrb[0].mxu0
        %v2954 = vadd.f32 %v2761, %v2953
        %v2955 = vpop.f32.mrb[0].mxu0
        %v2956 = vadd.f32 %v2763, %v2955
        %v2957 = vpop.f32.mrb[0].mxu0
        %v2958 = vadd.f32 %v2765, %v2957
        %v2959 = vpop.f32.mrb[0].mxu0
        %v2960 = vadd.f32 %v2767, %v2959
        %2961 = vmatprep.mubr.bf16.mxu0 %v1184
        %2962 = vmatmul.mubr.bf16.gmra.mrb[0].mxu0 %v1183
        %v2963 = vpop.f32.mrb[0].mxu0
        %v2964 = vadd.f32 %v2771, %v2963
        %v2965 = vpop.f32.mrb[0].mxu0
        %v2966 = vadd.f32 %v2773, %v2965
        %v2967 = vpop.f32.mrb[0].mxu0
        %v2968 = vadd.f32 %v2775, %v2967
        %v2969 = vpop.f32.mrb[0].mxu0
        %v2970 = vadd.f32 %v2777, %v2969
        %2971 = vmatprep.mubr.bf16.mxu0 %v1188
        %2972 = vmatmul.mubr.bf16.gmra.mrb[0].mxu0 %v1187
        %v2973 = vpop.f32.mrb[0].mxu0
        %v2974 = vadd.f32 %v2781, %v2973
        %v2975 = vpop.f32.mrb[0].mxu0
        %v2976 = vadd.f32 %v2783, %v2975
        %v2977 = vpop.f32.mrb[0].mxu0
        %v2978 = vadd.f32 %v2785, %v2977
        %v2979 = vpop.f32.mrb[0].mxu0
        %v2980 = vadd.f32 %v2787, %v2979
        %2981 = vmatprep.mubr.bf16.mxu0 %v1192
        %2982 = vmatmul.mubr.bf16.gmra.mrb[0].mxu0 %v1191
        %v2983 = vpop.f32.mrb[0].mxu0
        %v2984 = vadd.f32 %v2791, %v2983
        %v2985 = vpop.f32.mrb[0].mxu0
        %v2986 = vadd.f32 %v2793, %v2985
        %v2987 = vpop.f32.mrb[0].mxu0
        %v2988 = vadd.f32 %v2795, %v2987
        %v2989 = vpop.f32.mrb[0].mxu0
        %v2990 = vadd.f32 %v2797, %v2989
        %2991 = vmatprep.mubr.bf16.mxu0 %v1196
        %2992 = vmatmul.mubr.bf16.gmra.mrb[0].mxu0 %v1195
        %v2993 = vpop.f32.mrb[0].mxu0
        %v2994 = vadd.f32 %v2801, %v2993
        %v2995 = vpop.f32.mrb[0].mxu0
        %v2996 = vadd.f32 %v2803, %v2995
        %v2997 = vpop.f32.mrb[0].mxu0
        %v2998 = vadd.f32 %v2805, %v2997
        %v2999 = vpop.f32.mrb[0].mxu0
        %v3000 = vadd.f32 %v2807, %v2999
        %3001 = vmatprep.mubr.bf16.mxu0 %v1200
        %3002 = vmatmul.mubr.bf16.gmra.mrb[0].mxu0 %v1199
        %v3003 = vpop.f32.mrb[0].mxu0
        %v3004 = vadd.f32 %v2811, %v3003
        %v3005 = vpop.f32.mrb[0].mxu0
        %v3006 = vadd.f32 %v2813, %v3005
        %v3007 = vpop.f32.mrb[0].mxu0
        %v3008 = vadd.f32 %v2815, %v3007
        %v3009 = vpop.f32.mrb[0].mxu0
        %v3010 = vadd.f32 %v2817, %v3009
        %3011 = vmatprep.mubr.bf16.mxu0 %v1204
        %3012 = vmatmul.mubr.bf16.gmra.mrb[0].mxu0 %v1203
        %v3013 = vpop.f32.mrb[0].mxu0
        %v3014 = vadd.f32 %v2821, %v3013
        %v3015 = vpop.f32.mrb[0].mxu0
        %v3016 = vadd.f32 %v2823, %v3015
        %v3017 = vpop.f32.mrb[0].mxu0
        %v3018 = vadd.f32 %v2825, %v3017
        %v3019 = vpop.f32.mrb[0].mxu0
        %v3020 = vadd.f32 %v2827, %v3019
        %3021 = vmatprep.mubr.bf16.mxu0 %v1208
        %3022 = vmatmul.mubr.bf16.gmra.mrb[0].mxu0 %v1207
        %v3023 = vpop.f32.mrb[0].mxu0
        %v3024 = vadd.f32 %v2831, %v3023
        %v3025 = vpop.f32.mrb[0].mxu0
        %v3026 = vadd.f32 %v2833, %v3025
        %v3027 = vpop.f32.mrb[0].mxu0
        %v3028 = vadd.f32 %v2835, %v3027
        %v3029 = vpop.f32.mrb[0].mxu0
        %v3030 = vadd.f32 %v2837, %v3029
        %3031 = vdwg.mxu0
        %3032 = vmatprep.subr.bf16.mxu0 0
        %3033 = vmatpush1.bf16.msra.mxu0 %v1944
        %3034 = vmatprep.subr.bf16.mxu0 0
        %3035 = vmatpush1.bf16.msra.mxu0 %v1949
        %3036 = vmatprep.subr.bf16.mxu0 0
        %3037 = vmatpush1.bf16.msra.mxu0 %v1954
        %3038 = vmatprep.subr.bf16.mxu0 0
        %3039 = vmatpush1.bf16.msra.mxu0 %v1959
        %3040 = vmatprep.subr.bf16.mxu0 0
        %3041 = vmatpush1.bf16.msra.mxu0 %v1964
        %3042 = vmatprep.subr.bf16.mxu0 0
        %3043 = vmatpush1.bf16.msra.mxu0 %v1969
        %3044 = vmatprep.subr.bf16.mxu0 0
        %3045 = vmatpush1.bf16.msra.mxu0 %v1974
        %3046 = vmatprep.subr.bf16.mxu0 0
        %3047 = vmatpush1.bf16.msra.mxu0 %v1979
        %3048 = vmatprep.subr.bf16.mxu0 0
        %3049 = vmatpush1.bf16.msra.mxu0 %v1984
        %3050 = vmatprep.subr.bf16.mxu0 0
        %3051 = vmatpush1.bf16.msra.mxu0 %v1989
        %3052 = vmatprep.subr.bf16.mxu0 0
        %3053 = vmatpush1.bf16.msra.mxu0 %v1994
        %3054 = vmatprep.subr.bf16.mxu0 0
        %3055 = vmatpush1.bf16.msra.mxu0 %v1999
        %3056 = vmatprep.subr.bf16.mxu0 0
        %3057 = vmatpush1.bf16.msra.mxu0 %v2004
        %3058 = vmatprep.subr.bf16.mxu0 0
        %3059 = vmatpush1.bf16.msra.mxu0 %v2009
        %3060 = vmatprep.subr.bf16.mxu0 0
        %3061 = vmatpush1.bf16.msra.mxu0 %v2014
        %3062 = vmatprep.subr.bf16.mxu0 0
        %3063 = vmatpush1.bf16.msra.mxu0 %v2019
        %3064 = vmatprep.mubr.bf16.mxu0 %v1146
        %3065 = vmatmul.mubr.bf16.gmra.mrb[0].mxu0 %v1145
        %v3066 = vpop.f32.mrb[0].mxu0
        %v3067 = vadd.f32 %v1422, %v3066
        %v3068 = vpop.f32.mrb[0].mxu0
        %v3069 = vpop.f32.mrb[0].mxu0
        %v3070 = vadd.f32 %v1422, %v3069
        %v3071 = vpop.f32.mrb[0].mxu0
        %3072 = vmatprep.mubr.bf16.mxu0 %v1150
        %3073 = vmatmul.mubr.bf16.gmra.mrb[0].mxu0 %v1149
        %v3074 = vpop.f32.mrb[0].mxu0
        %v3075 = vadd.f32 %v1422, %v3074
        %v3076 = vpop.f32.mrb[0].mxu0
        %v3077 = vpop.f32.mrb[0].mxu0
        %v3078 = vadd.f32 %v1422, %v3077
        %v3079 = vpop.f32.mrb[0].mxu0
        %3080 = vmatprep.mubr.bf16.mxu0 %v1154
        %3081 = vmatmul.mubr.bf16.gmra.mrb[0].mxu0 %v1153
        %v3082 = vpop.f32.mrb[0].mxu0
        %v3083 = vadd.f32 %v1422, %v3082
        %v3084 = vpop.f32.mrb[0].mxu0
        %v3085 = vpop.f32.mrb[0].mxu0
        %v3086 = vadd.f32 %v1422, %v3085
        %v3087 = vpop.f32.mrb[0].mxu0
        %3088 = vmatprep.mubr.bf16.mxu0 %v1158
        %3089 = vmatmul.mubr.bf16.gmra.mrb[0].mxu0 %v1157
        %v3090 = vpop.f32.mrb[0].mxu0
        %v3091 = vadd.f32 %v1422, %v3090
        %v3092 = vpop.f32.mrb[0].mxu0
        %v3093 = vpop.f32.mrb[0].mxu0
        %v3094 = vadd.f32 %v1422, %v3093
        %v3095 = vpop.f32.mrb[0].mxu0
        %3096 = vmatprep.mubr.bf16.mxu0 %v1162
        %3097 = vmatmul.mubr.bf16.gmra.mrb[0].mxu0 %v1161
        %v3098 = vpop.f32.mrb[0].mxu0
        %v3099 = vadd.f32 %v1422, %v3098
        %v3100 = vpop.f32.mrb[0].mxu0
        %v3101 = vpop.f32.mrb[0].mxu0
        %v3102 = vadd.f32 %v1422, %v3101
        %v3103 = vpop.f32.mrb[0].mxu0
        %3104 = vmatprep.mubr.bf16.mxu0 %v1166
        %3105 = vmatmul.mubr.bf16.gmra.mrb[0].mxu0 %v1165
        %v3106 = vpop.f32.mrb[0].mxu0
        %v3107 = vadd.f32 %v1422, %v3106
        %v3108 = vpop.f32.mrb[0].mxu0
        %v3109 = vpop.f32.mrb[0].mxu0
        %v3110 = vadd.f32 %v1422, %v3109
        %v3111 = vpop.f32.mrb[0].mxu0
        %3112 = vmatprep.mubr.bf16.mxu0 %v1170
        %3113 = vmatmul.mubr.bf16.gmra.mrb[0].mxu0 %v1169
        %v3114 = vpop.f32.mrb[0].mxu0
        %v3115 = vadd.f32 %v1422, %v3114
        %v3116 = vpop.f32.mrb[0].mxu0
        %v3117 = vpop.f32.mrb[0].mxu0
        %v3118 = vadd.f32 %v1422, %v3117
        %v3119 = vpop.f32.mrb[0].mxu0
        %3120 = vmatprep.mubr.bf16.mxu0 %v1174
        %3121 = vmatmul.mubr.bf16.gmra.mrb[0].mxu0 %v1173
        %v3122 = vpop.f32.mrb[0].mxu0
        %v3123 = vadd.f32 %v1422, %v3122
        %v3124 = vpop.f32.mrb[0].mxu0
        %v3125 = vpop.f32.mrb[0].mxu0
        %v3126 = vadd.f32 %v1422, %v3125
        %v3127 = vpop.f32.mrb[0].mxu0
        %3128 = vmatprep.mubr.bf16.mxu0 %v1178
        %3129 = vmatmul.mubr.bf16.gmra.mrb[0].mxu0 %v1177
        %v3130 = vpop.f32.mrb[0].mxu0
        %v3131 = vadd.f32 %v1422, %v3130
        %v3132 = vpop.f32.mrb[0].mxu0
        %v3133 = vpop.f32.mrb[0].mxu0
        %v3134 = vadd.f32 %v1422, %v3133
        %v3135 = vpop.f32.mrb[0].mxu0
        %3136 = vmatprep.mubr.bf16.mxu0 %v1182
        %3137 = vmatmul.mubr.bf16.gmra.mrb[0].mxu0 %v1181
        %v3138 = vpop.f32.mrb[0].mxu0
        %v3139 = vadd.f32 %v1422, %v3138
        %v3140 = vpop.f32.mrb[0].mxu0
        %v3141 = vpop.f32.mrb[0].mxu0
        %v3142 = vadd.f32 %v1422, %v3141
        %v3143 = vpop.f32.mrb[0].mxu0
        %3144 = vmatprep.mubr.bf16.mxu0 %v1186
        %3145 = vmatmul.mubr.bf16.gmra.mrb[0].mxu0 %v1185
        %v3146 = vpop.f32.mrb[0].mxu0
        %v3147 = vadd.f32 %v1422, %v3146
        %v3148 = vpop.f32.mrb[0].mxu0
        %v3149 = vpop.f32.mrb[0].mxu0
        %v3150 = vadd.f32 %v1422, %v3149
        %v3151 = vpop.f32.mrb[0].mxu0
        %3152 = vmatprep.mubr.bf16.mxu0 %v1190
        %3153 = vmatmul.mubr.bf16.gmra.mrb[0].mxu0 %v1189
        %v3154 = vpop.f32.mrb[0].mxu0
        %v3155 = vadd.f32 %v1422, %v3154
        %v3156 = vpop.f32.mrb[0].mxu0
        %v3157 = vpop.f32.mrb[0].mxu0
        %v3158 = vadd.f32 %v1422, %v3157
        %v3159 = vpop.f32.mrb[0].mxu0
        %3160 = vmatprep.mubr.bf16.mxu0 %v1194
        %3161 = vmatmul.mubr.bf16.gmra.mrb[0].mxu0 %v1193
        %v3162 = vpop.f32.mrb[0].mxu0
        %v3163 = vadd.f32 %v1422, %v3162
        %v3164 = vpop.f32.mrb[0].mxu0
        %v3165 = vpop.f32.mrb[0].mxu0
        %v3166 = vadd.f32 %v1422, %v3165
        %v3167 = vpop.f32.mrb[0].mxu0
        %3168 = vmatprep.mubr.bf16.mxu0 %v1198
        %3169 = vmatmul.mubr.bf16.gmra.mrb[0].mxu0 %v1197
        %v3170 = vpop.f32.mrb[0].mxu0
        %v3171 = vadd.f32 %v1422, %v3170
        %v3172 = vpop.f32.mrb[0].mxu0
        %v3173 = vpop.f32.mrb[0].mxu0
        %v3174 = vadd.f32 %v1422, %v3173
        %v3175 = vpop.f32.mrb[0].mxu0
        %3176 = vmatprep.mubr.bf16.mxu0 %v1202
        %3177 = vmatmul.mubr.bf16.gmra.mrb[0].mxu0 %v1201
        %v3178 = vpop.f32.mrb[0].mxu0
        %v3179 = vadd.f32 %v1422, %v3178
        %v3180 = vpop.f32.mrb[0].mxu0
        %v3181 = vpop.f32.mrb[0].mxu0
        %v3182 = vadd.f32 %v1422, %v3181
        %v3183 = vpop.f32.mrb[0].mxu0
        %3184 = vmatprep.mubr.bf16.mxu0 %v1206
        %3185 = vmatmul.mubr.bf16.gmra.mrb[0].mxu0 %v1205
        %v3186 = vpop.f32.mrb[0].mxu0
        %v3187 = vadd.f32 %v1422, %v3186
        %v3188 = vpop.f32.mrb[0].mxu0
        %v3189 = vpop.f32.mrb[0].mxu0
        %v3190 = vadd.f32 %v1422, %v3189
        %v3191 = vpop.f32.mrb[0].mxu0
        %3192 = vdwg.mxu0
        %3193 = vmatprep.subr.bf16.mxu0 0
        %3194 = vmatpush1.bf16.msra.mxu0 %v2024
        %3195 = vmatprep.subr.bf16.mxu0 0
        %3196 = vmatpush1.bf16.msra.mxu0 %v2029
        %3197 = vmatprep.subr.bf16.mxu0 0
        %3198 = vmatpush1.bf16.msra.mxu0 %v2034
        %3199 = vmatprep.subr.bf16.mxu0 0
        %3200 = vmatpush1.bf16.msra.mxu0 %v2039
        %3201 = vmatprep.subr.bf16.mxu0 0
        %3202 = vmatpush1.bf16.msra.mxu0 %v2044
        %3203 = vmatprep.subr.bf16.mxu0 0
        %3204 = vmatpush1.bf16.msra.mxu0 %v2049
        %3205 = vmatprep.subr.bf16.mxu0 0
        %3206 = vmatpush1.bf16.msra.mxu0 %v2054
        %3207 = vmatprep.subr.bf16.mxu0 0
        %3208 = vmatpush1.bf16.msra.mxu0 %v2059
        %3209 = vmatprep.subr.bf16.mxu0 0
        %3210 = vmatpush1.bf16.msra.mxu0 %v2064
        %3211 = vmatprep.subr.bf16.mxu0 0
        %3212 = vmatpush1.bf16.msra.mxu0 %v2069
        %3213 = vmatprep.subr.bf16.mxu0 0
        %3214 = vmatpush1.bf16.msra.mxu0 %v2074
        %3215 = vmatprep.subr.bf16.mxu0 0
        %3216 = vmatpush1.bf16.msra.mxu0 %v2079
        %3217 = vmatprep.subr.bf16.mxu0 0
        %3218 = vmatpush1.bf16.msra.mxu0 %v2084
        %3219 = vmatprep.subr.bf16.mxu0 0
        %3220 = vmatpush1.bf16.msra.mxu0 %v2089
        %3221 = vmatprep.subr.bf16.mxu0 0
        %3222 = vmatpush1.bf16.msra.mxu0 %v2094
        %3223 = vmatprep.subr.bf16.mxu0 0
        %3224 = vmatpush1.bf16.msra.mxu0 %v2099
        %3225 = vmatprep.mubr.bf16.mxu0 %v1148
        %3226 = vmatmul.mubr.bf16.gmra.mrb[0].mxu0 %v1147
        %v3227 = vpop.f32.mrb[0].mxu0
        %v3228 = vadd.f32 %v3067, %v3227
        %v3229 = vpop.f32.mrb[0].mxu0
        %v3230 = vpop.f32.mrb[0].mxu0
        %v3231 = vadd.f32 %v3070, %v3230
        %v3232 = vpop.f32.mrb[0].mxu0
        %3233 = vmatprep.mubr.bf16.mxu0 %v1152
        %3234 = vmatmul.mubr.bf16.gmra.mrb[0].mxu0 %v1151
        %v3235 = vpop.f32.mrb[0].mxu0
        %v3236 = vadd.f32 %v3075, %v3235
        %v3237 = vpop.f32.mrb[0].mxu0
        %v3238 = vpop.f32.mrb[0].mxu0
        %v3239 = vadd.f32 %v3078, %v3238
        %v3240 = vpop.f32.mrb[0].mxu0
        %3241 = vmatprep.mubr.bf16.mxu0 %v1156
        %3242 = vmatmul.mubr.bf16.gmra.mrb[0].mxu0 %v1155
        %v3243 = vpop.f32.mrb[0].mxu0
        %v3244 = vadd.f32 %v3083, %v3243
        %v3245 = vpop.f32.mrb[0].mxu0
        %v3246 = vpop.f32.mrb[0].mxu0
        %v3247 = vadd.f32 %v3086, %v3246
        %v3248 = vpop.f32.mrb[0].mxu0
        %3249 = vmatprep.mubr.bf16.mxu0 %v1160
        %3250 = vmatmul.mubr.bf16.gmra.mrb[0].mxu0 %v1159
        %v3251 = vpop.f32.mrb[0].mxu0
        %v3252 = vadd.f32 %v3091, %v3251
        %v3253 = vpop.f32.mrb[0].mxu0
        %v3254 = vpop.f32.mrb[0].mxu0
        %v3255 = vadd.f32 %v3094, %v3254
        %v3256 = vpop.f32.mrb[0].mxu0
        %3257 = vmatprep.mubr.bf16.mxu0 %v1164
        %3258 = vmatmul.mubr.bf16.gmra.mrb[0].mxu0 %v1163
        %v3259 = vpop.f32.mrb[0].mxu0
        %v3260 = vadd.f32 %v3099, %v3259
        %v3261 = vpop.f32.mrb[0].mxu0
        %v3262 = vpop.f32.mrb[0].mxu0
        %v3263 = vadd.f32 %v3102, %v3262
        %v3264 = vpop.f32.mrb[0].mxu0
        %3265 = vmatprep.mubr.bf16.mxu0 %v1168
        %3266 = vmatmul.mubr.bf16.gmra.mrb[0].mxu0 %v1167
        %v3267 = vpop.f32.mrb[0].mxu0
        %v3268 = vadd.f32 %v3107, %v3267
        %v3269 = vpop.f32.mrb[0].mxu0
        %v3270 = vpop.f32.mrb[0].mxu0
        %v3271 = vadd.f32 %v3110, %v3270
        %v3272 = vpop.f32.mrb[0].mxu0
        %3273 = vmatprep.mubr.bf16.mxu0 %v1172
        %3274 = vmatmul.mubr.bf16.gmra.mrb[0].mxu0 %v1171
        %v3275 = vpop.f32.mrb[0].mxu0
        %v3276 = vadd.f32 %v3115, %v3275
        %v3277 = vpop.f32.mrb[0].mxu0
        %v3278 = vpop.f32.mrb[0].mxu0
        %v3279 = vadd.f32 %v3118, %v3278
        %v3280 = vpop.f32.mrb[0].mxu0
        %3281 = vmatprep.mubr.bf16.mxu0 %v1176
        %3282 = vmatmul.mubr.bf16.gmra.mrb[0].mxu0 %v1175
        %v3283 = vpop.f32.mrb[0].mxu0
        %v3284 = vadd.f32 %v3123, %v3283
        %v3285 = vpop.f32.mrb[0].mxu0
        %v3286 = vpop.f32.mrb[0].mxu0
        %v3287 = vadd.f32 %v3126, %v3286
        %v3288 = vpop.f32.mrb[0].mxu0
        %3289 = vmatprep.mubr.bf16.mxu0 %v1180
        %3290 = vmatmul.mubr.bf16.gmra.mrb[0].mxu0 %v1179
        %v3291 = vpop.f32.mrb[0].mxu0
        %v3292 = vadd.f32 %v3131, %v3291
        %v3293 = vpop.f32.mrb[0].mxu0
        %v3294 = vpop.f32.mrb[0].mxu0
        %v3295 = vadd.f32 %v3134, %v3294
        %v3296 = vpop.f32.mrb[0].mxu0
        %3297 = vmatprep.mubr.bf16.mxu0 %v1184
        %3298 = vmatmul.mubr.bf16.gmra.mrb[0].mxu0 %v1183
        %v3299 = vpop.f32.mrb[0].mxu0
        %v3300 = vadd.f32 %v3139, %v3299
        %v3301 = vpop.f32.mrb[0].mxu0
        %v3302 = vpop.f32.mrb[0].mxu0
        %v3303 = vadd.f32 %v3142, %v3302
        %v3304 = vpop.f32.mrb[0].mxu0
        %3305 = vmatprep.mubr.bf16.mxu0 %v1188
        %3306 = vmatmul.mubr.bf16.gmra.mrb[0].mxu0 %v1187
        %v3307 = vpop.f32.mrb[0].mxu0
        %v3308 = vadd.f32 %v3147, %v3307
        %v3309 = vpop.f32.mrb[0].mxu0
        %v3310 = vpop.f32.mrb[0].mxu0
        %v3311 = vadd.f32 %v3150, %v3310
        %v3312 = vpop.f32.mrb[0].mxu0
        %3313 = vmatprep.mubr.bf16.mxu0 %v1192
        %3314 = vmatmul.mubr.bf16.gmra.mrb[0].mxu0 %v1191
        %v3315 = vpop.f32.mrb[0].mxu0
        %v3316 = vadd.f32 %v3155, %v3315
        %v3317 = vpop.f32.mrb[0].mxu0
        %v3318 = vpop.f32.mrb[0].mxu0
        %v3319 = vadd.f32 %v3158, %v3318
        %v3320 = vpop.f32.mrb[0].mxu0
        %3321 = vmatprep.mubr.bf16.mxu0 %v1196
        %3322 = vmatmul.mubr.bf16.gmra.mrb[0].mxu0 %v1195
        %v3323 = vpop.f32.mrb[0].mxu0
        %v3324 = vadd.f32 %v3163, %v3323
        %v3325 = vpop.f32.mrb[0].mxu0
        %v3326 = vpop.f32.mrb[0].mxu0
        %v3327 = vadd.f32 %v3166, %v3326
        %v3328 = vpop.f32.mrb[0].mxu0
        %3329 = vmatprep.mubr.bf16.mxu0 %v1200
        %3330 = vmatmul.mubr.bf16.gmra.mrb[0].mxu0 %v1199
        %v3331 = vpop.f32.mrb[0].mxu0
        %v3332 = vadd.f32 %v3171, %v3331
        %v3333 = vpop.f32.mrb[0].mxu0
        %v3334 = vpop.f32.mrb[0].mxu0
        %v3335 = vadd.f32 %v3174, %v3334
        %v3336 = vpop.f32.mrb[0].mxu0
        %3337 = vmatprep.mubr.bf16.mxu0 %v1204
        %3338 = vmatmul.mubr.bf16.gmra.mrb[0].mxu0 %v1203
        %v3339 = vpop.f32.mrb[0].mxu0
        %v3340 = vadd.f32 %v3179, %v3339
        %v3341 = vpop.f32.mrb[0].mxu0
        %v3342 = vpop.f32.mrb[0].mxu0
        %v3343 = vadd.f32 %v3182, %v3342
        %v3344 = vpop.f32.mrb[0].mxu0
        %3345 = vmatprep.mubr.bf16.mxu0 %v1208
        %3346 = vmatmul.mubr.bf16.gmra.mrb[0].mxu0 %v1207
        %v3347 = vpop.f32.mrb[0].mxu0
        %v3348 = vadd.f32 %v3187, %v3347
        %v3349 = vpop.f32.mrb[0].mxu0
        %v3350 = vpop.f32.mrb[0].mxu0
        %v3351 = vadd.f32 %v3190, %v3350
        %v3352 = vpop.f32.mrb[0].mxu0
        %3353 = vdwg.mxu0
        %v3354 = vmax.f32 %v2488, 0.0
        %v3355 = vmax.f32 %v2490, 0.0
        %v3356 = vmax.f32 %v2874, 0.0
        %v3357 = vmax.f32 %v2876, 0.0
        %v3358 = vmax.f32 %v3228, 0.0
        %v3359 = vmax.f32 %v2492, 0.0
        %v3360 = vmax.f32 %v2494, 0.0
        %v3361 = vmax.f32 %v2878, 0.0
        %v3362 = vmax.f32 %v2880, 0.0
        %v3363 = vmax.f32 %v3231, 0.0
        %v3364 = vmax.f32 %v2498, 0.0
        %v3365 = vmax.f32 %v2500, 0.0
        %v3366 = vmax.f32 %v2884, 0.0
        %v3367 = vmax.f32 %v2886, 0.0
        %v3368 = vmax.f32 %v3236, 0.0
        %v3369 = vmax.f32 %v2502, 0.0
        %v3370 = vmax.f32 %v2504, 0.0
        %v3371 = vmax.f32 %v2888, 0.0
        %v3372 = vmax.f32 %v2890, 0.0
        %v3373 = vmax.f32 %v3239, 0.0
        %v3374 = vmax.f32 %v2508, 0.0
        %v3375 = vmax.f32 %v2510, 0.0
        %v3376 = vmax.f32 %v2894, 0.0
        %v3377 = vmax.f32 %v2896, 0.0
        %v3378 = vmax.f32 %v3244, 0.0
        %v3379 = vmax.f32 %v2512, 0.0
        %v3380 = vmax.f32 %v2514, 0.0
        %v3381 = vmax.f32 %v2898, 0.0
        %v3382 = vmax.f32 %v2900, 0.0
        %v3383 = vmax.f32 %v3247, 0.0
        %v3384 = vmax.f32 %v2518, 0.0
        %v3385 = vmax.f32 %v2520, 0.0
        %v3386 = vmax.f32 %v2904, 0.0
        %v3387 = vmax.f32 %v2906, 0.0
        %v3388 = vmax.f32 %v3252, 0.0
        %v3389 = vmax.f32 %v2522, 0.0
        %v3390 = vmax.f32 %v2524, 0.0
        %v3391 = vmax.f32 %v2908, 0.0
        %v3392 = vmax.f32 %v2910, 0.0
        %v3393 = vmax.f32 %v3255, 0.0
        %v3394 = vmax.f32 %v2528, 0.0
        %v3395 = vmax.f32 %v2530, 0.0
        %v3396 = vmax.f32 %v2914, 0.0
        %v3397 = vmax.f32 %v2916, 0.0
        %v3398 = vmax.f32 %v3260, 0.0
        %v3399 = vmax.f32 %v2532, 0.0
        %v3400 = vmax.f32 %v2534, 0.0
        %v3401 = vmax.f32 %v2918, 0.0
        %v3402 = vmax.f32 %v2920, 0.0
        %v3403 = vmax.f32 %v3263, 0.0
        %v3404 = vmax.f32 %v2538, 0.0
        %v3405 = vmax.f32 %v2540, 0.0
        %v3406 = vmax.f32 %v2924, 0.0
        %v3407 = vmax.f32 %v2926, 0.0
        %v3408 = vmax.f32 %v3268, 0.0
        %v3409 = vmax.f32 %v2542, 0.0
        %v3410 = vmax.f32 %v2544, 0.0
        %v3411 = vmax.f32 %v2928, 0.0
        %v3412 = vmax.f32 %v2930, 0.0
        %v3413 = vmax.f32 %v3271, 0.0
        %v3414 = vmax.f32 %v2548, 0.0
        %v3415 = vmax.f32 %v2550, 0.0
        %v3416 = vmax.f32 %v2934, 0.0
        %v3417 = vmax.f32 %v2936, 0.0
        %v3418 = vmax.f32 %v3276, 0.0
        %v3419 = vmax.f32 %v2552, 0.0
        %v3420 = vmax.f32 %v2554, 0.0
        %v3421 = vmax.f32 %v2938, 0.0
        %v3422 = vmax.f32 %v2940, 0.0
        %v3423 = vmax.f32 %v3279, 0.0
        %v3424 = vmax.f32 %v2558, 0.0
        %v3425 = vmax.f32 %v2560, 0.0
        %v3426 = vmax.f32 %v2944, 0.0
        %v3427 = vmax.f32 %v2946, 0.0
        %v3428 = vmax.f32 %v3284, 0.0
        %v3429 = vmax.f32 %v2562, 0.0
        %v3430 = vmax.f32 %v2564, 0.0
        %v3431 = vmax.f32 %v2948, 0.0
        %v3432 = vmax.f32 %v2950, 0.0
        %v3433 = vmax.f32 %v3287, 0.0
        %v3434 = vmax.f32 %v2568, 0.0
        %v3435 = vmax.f32 %v2570, 0.0
        %v3436 = vmax.f32 %v2954, 0.0
        %v3437 = vmax.f32 %v2956, 0.0
        %v3438 = vmax.f32 %v3292, 0.0
        %v3439 = vmax.f32 %v2572, 0.0
        %v3440 = vmax.f32 %v2574, 0.0
        %v3441 = vmax.f32 %v2958, 0.0
        %v3442 = vmax.f32 %v2960, 0.0
        %v3443 = vmax.f32 %v3295, 0.0
        %v3444 = vmax.f32 %v2578, 0.0
        %v3445 = vmax.f32 %v2580, 0.0
        %v3446 = vmax.f32 %v2964, 0.0
        %v3447 = vmax.f32 %v2966, 0.0
        %v3448 = vmax.f32 %v3300, 0.0
        %v3449 = vmax.f32 %v2582, 0.0
        %v3450 = vmax.f32 %v2584, 0.0
        %v3451 = vmax.f32 %v2968, 0.0
        %v3452 = vmax.f32 %v2970, 0.0
        %v3453 = vmax.f32 %v3303, 0.0
        %v3454 = vmax.f32 %v2588, 0.0
        %v3455 = vmax.f32 %v2590, 0.0
        %v3456 = vmax.f32 %v2974, 0.0
        %v3457 = vmax.f32 %v2976, 0.0
        %v3458 = vmax.f32 %v3308, 0.0
        %v3459 = vmax.f32 %v2592, 0.0
        %v3460 = vmax.f32 %v2594, 0.0
        %v3461 = vmax.f32 %v2978, 0.0
        %v3462 = vmax.f32 %v2980, 0.0
        %v3463 = vmax.f32 %v3311, 0.0
        %v3464 = vmax.f32 %v2598, 0.0
        %v3465 = vmax.f32 %v2600, 0.0
        %v3466 = vmax.f32 %v2984, 0.0
        %v3467 = vmax.f32 %v2986, 0.0
        %v3468 = vmax.f32 %v3316, 0.0
        %v3469 = vmax.f32 %v2602, 0.0
        %v3470 = vmax.f32 %v2604, 0.0
        %v3471 = vmax.f32 %v2988, 0.0
        %v3472 = vmax.f32 %v2990, 0.0
        %v3473 = vmax.f32 %v3319, 0.0
        %v3474 = vmax.f32 %v2608, 0.0
        %v3475 = vmax.f32 %v2610, 0.0
        %v3476 = vmax.f32 %v2994, 0.0
        %v3477 = vmax.f32 %v2996, 0.0
        %v3478 = vmax.f32 %v3324, 0.0
        %v3479 = vmax.f32 %v2612, 0.0
        %v3480 = vmax.f32 %v2614, 0.0
        %v3481 = vmax.f32 %v2998, 0.0
        %v3482 = vmax.f32 %v3000, 0.0
        %v3483 = vmax.f32 %v3327, 0.0
        %v3484 = vmax.f32 %v2618, 0.0
        %v3485 = vmax.f32 %v2620, 0.0
        %v3486 = vmax.f32 %v3004, 0.0
        %v3487 = vmax.f32 %v3006, 0.0
        %v3488 = vmax.f32 %v3332, 0.0
        %v3489 = vmax.f32 %v2622, 0.0
        %v3490 = vmax.f32 %v2624, 0.0
        %v3491 = vmax.f32 %v3008, 0.0
        %v3492 = vmax.f32 %v3010, 0.0
        %v3493 = vmax.f32 %v3335, 0.0
        %v3494 = vmax.f32 %v2628, 0.0
        %v3495 = vmax.f32 %v2630, 0.0
        %v3496 = vmax.f32 %v3014, 0.0
        %v3497 = vmax.f32 %v3016, 0.0
        %v3498 = vmax.f32 %v3340, 0.0
        %v3499 = vmax.f32 %v2632, 0.0
        %v3500 = vmax.f32 %v2634, 0.0
        %v3501 = vmax.f32 %v3018, 0.0
        %v3502 = vmax.f32 %v3020, 0.0
        %v3503 = vmax.f32 %v3343, 0.0
        %v3504 = vmax.f32 %v2638, 0.0
        %v3505 = vmax.f32 %v2640, 0.0
        %v3506 = vmax.f32 %v3024, 0.0
        %v3507 = vmax.f32 %v3026, 0.0
        %v3508 = vmax.f32 %v3348, 0.0
        %v3509 = vmax.f32 %v2642, 0.0
        %v3510 = vmax.f32 %v2644, 0.0
        %v3511 = vmax.f32 %v3028, 0.0
        %v3512 = vmax.f32 %v3030, 0.0
        %v3513 = vmax.f32 %v3351, 0.0
        %v3514 = vpack.c.bf16 %v3359, %v3354
        %v3515 = vpack.c.bf16 %v3360, %v3355
        %v3516 = vpack.c.bf16 %v3361, %v3356
        %v3517 = vpack.c.bf16 %v3362, %v3357
        %v3518 = vpack.c.bf16 %v3363, %v3358
        %v3519 = vpack.c.bf16 %v3369, %v3364
        %v3520 = vpack.c.bf16 %v3370, %v3365
        %v3521 = vpack.c.bf16 %v3371, %v3366
        %v3522 = vpack.c.bf16 %v3372, %v3367
        %v3523 = vpack.c.bf16 %v3373, %v3368
        %v3524 = vpack.c.bf16 %v3379, %v3374
        %v3525 = vpack.c.bf16 %v3380, %v3375
        %v3526 = vpack.c.bf16 %v3381, %v3376
        %v3527 = vpack.c.bf16 %v3382, %v3377
        %v3528 = vpack.c.bf16 %v3383, %v3378
        %v3529 = vpack.c.bf16 %v3389, %v3384
        %v3530 = vpack.c.bf16 %v3390, %v3385
        %v3531 = vpack.c.bf16 %v3391, %v3386
        %v3532 = vpack.c.bf16 %v3392, %v3387
        %v3533 = vpack.c.bf16 %v3393, %v3388
        %v3534 = vpack.c.bf16 %v3399, %v3394
        %v3535 = vpack.c.bf16 %v3400, %v3395
        %v3536 = vpack.c.bf16 %v3401, %v3396
        %v3537 = vpack.c.bf16 %v3402, %v3397
        %v3538 = vpack.c.bf16 %v3403, %v3398
        %v3539 = vpack.c.bf16 %v3409, %v3404
        %v3540 = vpack.c.bf16 %v3410, %v3405
        %v3541 = vpack.c.bf16 %v3411, %v3406
        %v3542 = vpack.c.bf16 %v3412, %v3407
        %v3543 = vpack.c.bf16 %v3413, %v3408
        %v3544 = vpack.c.bf16 %v3419, %v3414
        %v3545 = vpack.c.bf16 %v3420, %v3415
        %v3546 = vpack.c.bf16 %v3421, %v3416
        %v3547 = vpack.c.bf16 %v3422, %v3417
        %v3548 = vpack.c.bf16 %v3423, %v3418
        %v3549 = vpack.c.bf16 %v3429, %v3424
        %v3550 = vpack.c.bf16 %v3430, %v3425
        %v3551 = vpack.c.bf16 %v3431, %v3426
        %v3552 = vpack.c.bf16 %v3432, %v3427
        %v3553 = vpack.c.bf16 %v3433, %v3428
        %v3554 = vpack.c.bf16 %v3439, %v3434
        %v3555 = vpack.c.bf16 %v3440, %v3435
        %v3556 = vpack.c.bf16 %v3441, %v3436
        %v3557 = vpack.c.bf16 %v3442, %v3437
        %v3558 = vpack.c.bf16 %v3443, %v3438
        %v3559 = vpack.c.bf16 %v3449, %v3444
        %v3560 = vpack.c.bf16 %v3450, %v3445
        %v3561 = vpack.c.bf16 %v3451, %v3446
        %v3562 = vpack.c.bf16 %v3452, %v3447
        %v3563 = vpack.c.bf16 %v3453, %v3448
        %v3564 = vpack.c.bf16 %v3459, %v3454
        %v3565 = vpack.c.bf16 %v3460, %v3455
        %v3566 = vpack.c.bf16 %v3461, %v3456
        %v3567 = vpack.c.bf16 %v3462, %v3457
        %v3568 = vpack.c.bf16 %v3463, %v3458
        %v3569 = vpack.c.bf16 %v3469, %v3464
        %v3570 = vpack.c.bf16 %v3470, %v3465
        %v3571 = vpack.c.bf16 %v3471, %v3466
        %v3572 = vpack.c.bf16 %v3472, %v3467
        %v3573 = vpack.c.bf16 %v3473, %v3468
        %v3574 = vpack.c.bf16 %v3479, %v3474
        %v3575 = vpack.c.bf16 %v3480, %v3475
        %v3576 = vpack.c.bf16 %v3481, %v3476
        %v3577 = vpack.c.bf16 %v3482, %v3477
        %v3578 = vpack.c.bf16 %v3483, %v3478
        %v3579 = vpack.c.bf16 %v3489, %v3484
        %v3580 = vpack.c.bf16 %v3490, %v3485
        %v3581 = vpack.c.bf16 %v3491, %v3486
        %v3582 = vpack.c.bf16 %v3492, %v3487
        %v3583 = vpack.c.bf16 %v3493, %v3488
        %v3584 = vpack.c.bf16 %v3499, %v3494
        %v3585 = vpack.c.bf16 %v3500, %v3495
        %v3586 = vpack.c.bf16 %v3501, %v3496
        %v3587 = vpack.c.bf16 %v3502, %v3497
        %v3588 = vpack.c.bf16 %v3503, %v3498
        %v3589 = vpack.c.bf16 %v3509, %v3504
        %v3590 = vpack.c.bf16 %v3510, %v3505
        %v3591 = vpack.c.bf16 %v3511, %v3506
        %v3592 = vpack.c.bf16 %v3512, %v3507
        %v3593 = vpack.c.bf16 %v3513, %v3508
        %v3594 = vld [vmem:[%s5] sm:$0xff]
        %v3595 = vld [vmem:[%s5 + $0x8] sm:$0xff]
        %v3596 = vld [vmem:[%s5 + $0x10] sm:$0xff]
        %v3597 = vld [vmem:[%s5 + $0x18] sm:$0xff]
        %v3598 = vld [vmem:[%s5 + $0x20] sm:$0xff]
        %v3599 = vld [vmem:[%s5 + $0x28] sm:$0xff]
        %v3600 = vld [vmem:[%s5 + $0x30] sm:$0xff]
        %v3601 = vld [vmem:[%s5 + $0x38] sm:$0xff]
        %v3602 = vld [vmem:[%s5 + $0x40] sm:$0xff]
        %v3603 = vld [vmem:[%s5 + $0x48] sm:$0xff]
        %v3604 = vld [vmem:[%s5 + $0x50] sm:$0xff]
        %v3605 = vld [vmem:[%s5 + $0x58] sm:$0xff]
        %v3606 = vld [vmem:[%s5 + $0x60] sm:$0xff]
        %v3607 = vld [vmem:[%s5 + $0x68] sm:$0xff]
        %v3608 = vld [vmem:[%s5 + $0x70] sm:$0xff]
        %v3609 = vld [vmem:[%s5 + $0x78] sm:$0xff]
        %v3610 = vld [vmem:[%s5 + $0x80] sm:$0xff]
        %v3611 = vld [vmem:[%s5 + $0x88] sm:$0xff]
        %v3612 = vld [vmem:[%s5 + $0x90] sm:$0xff]
        %v3613 = vld [vmem:[%s5 + $0x98] sm:$0xff]
        %v3614 = vld [vmem:[%s5 + $0xa0] sm:$0xff]
        %v3615 = vld [vmem:[%s5 + $0xa8] sm:$0xff]
        %v3616 = vld [vmem:[%s5 + $0xb0] sm:$0xff]
        %v3617 = vld [vmem:[%s5 + $0xb8] sm:$0xff]
        %v3618 = vld [vmem:[%s5 + $0xc0] sm:$0xff]
        %v3619 = vld [vmem:[%s5 + $0xc8] sm:$0xff]
        %v3620 = vld [vmem:[%s5 + $0xd0] sm:$0xff]
        %v3621 = vld [vmem:[%s5 + $0xd8] sm:$0xff]
        %v3622 = vld [vmem:[%s5 + $0xe0] sm:$0xff]
        %v3623 = vld [vmem:[%s5 + $0xe8] sm:$0xff]
        %v3624 = vld [vmem:[%s5 + $0xf0] sm:$0xff]
        %v3625 = vld [vmem:[%s5 + $0xf8] sm:$0xff]
        %v3626 = vld [vmem:[%s5 + $0x100] sm:$0xff]
        %v3627 = vld [vmem:[%s5 + $0x108] sm:$0xff]
        %v3628 = vld [vmem:[%s5 + $0x110] sm:$0xff]
        %v3629 = vld [vmem:[%s5 + $0x118] sm:$0xff]
        %v3630 = vld [vmem:[%s5 + $0x120] sm:$0xff]
        %v3631 = vld [vmem:[%s5 + $0x128] sm:$0xff]
        %v3632 = vld [vmem:[%s5 + $0x130] sm:$0xff]
        %v3633 = vld [vmem:[%s5 + $0x138] sm:$0xff]
        %v3634 = vld [vmem:[%s5 + $0x140] sm:$0xff]
        %v3635 = vld [vmem:[%s5 + $0x148] sm:$0xff]
        %v3636 = vld [vmem:[%s5 + $0x150] sm:$0xff]
        %v3637 = vld [vmem:[%s5 + $0x158] sm:$0xff]
        %v3638 = vld [vmem:[%s5 + $0x160] sm:$0xff]
        %v3639 = vld [vmem:[%s5 + $0x168] sm:$0xff]
        %v3640 = vld [vmem:[%s5 + $0x170] sm:$0xff]
        %v3641 = vld [vmem:[%s5 + $0x178] sm:$0xff]
        %v3642 = vld [vmem:[%s5 + $0x180] sm:$0xff]
        %v3643 = vld [vmem:[%s5 + $0x188] sm:$0xff]
        %v3644 = vld [vmem:[%s5 + $0x190] sm:$0xff]
        %v3645 = vld [vmem:[%s5 + $0x198] sm:$0xff]
        %v3646 = vld [vmem:[%s5 + $0x1a0] sm:$0xff]
        %v3647 = vld [vmem:[%s5 + $0x1a8] sm:$0xff]
        %v3648 = vld [vmem:[%s5 + $0x1b0] sm:$0xff]
        %v3649 = vld [vmem:[%s5 + $0x1b8] sm:$0xff]
        %v3650 = vld [vmem:[%s5 + $0x1c0] sm:$0xff]
        %v3651 = vld [vmem:[%s5 + $0x1c8] sm:$0xff]
        %v3652 = vld [vmem:[%s5 + $0x1d0] sm:$0xff]
        %v3653 = vld [vmem:[%s5 + $0x1d8] sm:$0xff]
        %v3654 = vld [vmem:[%s5 + $0x1e0] sm:$0xff]
        %v3655 = vld [vmem:[%s5 + $0x1e8] sm:$0xff]
        %v3656 = vld [vmem:[%s5 + $0x1f0] sm:$0xff]
        %v3657 = vld [vmem:[%s5 + $0x1f8] sm:$0xff]
        %v3658 = vld [vmem:[%s5 + $0x200] sm:$0xff]
        %v3659 = vld [vmem:[%s5 + $0x208] sm:$0xff]
        %v3660 = vld [vmem:[%s5 + $0x210] sm:$0xff]
        %v3661 = vld [vmem:[%s5 + $0x218] sm:$0xff]
        %v3662 = vld [vmem:[%s5 + $0x220] sm:$0xff]
        %v3663 = vld [vmem:[%s5 + $0x228] sm:$0xff]
        %v3664 = vld [vmem:[%s5 + $0x230] sm:$0xff]
        %v3665 = vld [vmem:[%s5 + $0x238] sm:$0xff]
        %v3666 = vld [vmem:[%s5 + $0x240] sm:$0xff]
        %v3667 = vld [vmem:[%s5 + $0x248] sm:$0xff]
        %v3668 = vld [vmem:[%s5 + $0x250] sm:$0xff]
        %v3669 = vld [vmem:[%s5 + $0x258] sm:$0xff]
        %v3670 = vld [vmem:[%s5 + $0x260] sm:$0xff]
        %v3671 = vld [vmem:[%s5 + $0x268] sm:$0xff]
        %v3672 = vld [vmem:[%s5 + $0x270] sm:$0xff]
        %v3673 = vld [vmem:[%s5 + $0x278] sm:$0xff]
        %v3674 = vld [vmem:[%s6] sm:$0x3]
        %v3676 = vlaneseq
        %v3677 = vshrl.u32 %v3676, 7
        %v3678 = vsub.s32 0, %v3677
        %v3679 = vrot.slane %v3674, %v3678
        %v3680 = vlaneseq
        %v3681 = vshrl.u32 %v3680, 7
        %v3682 = vsub.s32 1, %v3681
        %v3683 = vrot.slane %v3674, %v3682
        %v3766 = vunpack.c.l.b16 %v3594
        %v3767 = vunpack.c.h.b16 %v3594
        %v3768 = vunpack.c.l.b16 %v3595
        %v3769 = vunpack.c.h.b16 %v3595
        %v3770 = vunpack.c.l.b16 %v3596
        %v3771 = vunpack.c.h.b16 %v3596
        %v3772 = vunpack.c.l.b16 %v3597
        %v3773 = vunpack.c.h.b16 %v3597
        %v3774 = vunpack.c.l.b16 %v3598
        %v3775 = vunpack.c.h.b16 %v3598
        %v3776 = vunpack.c.l.b16 %v3599
        %v3777 = vunpack.c.h.b16 %v3599
        %v3778 = vunpack.c.l.b16 %v3600
        %v3779 = vunpack.c.h.b16 %v3600
        %v3780 = vunpack.c.l.b16 %v3601
        %v3781 = vunpack.c.h.b16 %v3601
        %v3782 = vunpack.c.l.b16 %v3602
        %v3783 = vunpack.c.h.b16 %v3602
        %v3784 = vunpack.c.l.b16 %v3603
        %v3785 = vunpack.c.h.b16 %v3603
        %v3786 = vunpack.c.l.b16 %v3604
        %v3787 = vunpack.c.h.b16 %v3604
        %v3788 = vunpack.c.l.b16 %v3605
        %v3789 = vunpack.c.h.b16 %v3605
        %v3790 = vunpack.c.l.b16 %v3606
        %v3791 = vunpack.c.h.b16 %v3606
        %v3792 = vunpack.c.l.b16 %v3607
        %v3793 = vunpack.c.h.b16 %v3607
        %v3794 = vunpack.c.l.b16 %v3608
        %v3795 = vunpack.c.h.b16 %v3608
        %v3796 = vunpack.c.l.b16 %v3609
        %v3797 = vunpack.c.h.b16 %v3609
        %v3798 = vunpack.c.l.b16 %v3610
        %v3799 = vunpack.c.h.b16 %v3610
        %v3800 = vunpack.c.l.b16 %v3611
        %v3801 = vunpack.c.h.b16 %v3611
        %v3802 = vunpack.c.l.b16 %v3612
        %v3803 = vunpack.c.h.b16 %v3612
        %v3804 = vunpack.c.l.b16 %v3613
        %v3805 = vunpack.c.h.b16 %v3613
        %v3806 = vunpack.c.l.b16 %v3614
        %v3807 = vunpack.c.h.b16 %v3614
        %v3808 = vunpack.c.l.b16 %v3615
        %v3809 = vunpack.c.h.b16 %v3615
        %v3810 = vunpack.c.l.b16 %v3616
        %v3811 = vunpack.c.h.b16 %v3616
        %v3812 = vunpack.c.l.b16 %v3617
        %v3813 = vunpack.c.h.b16 %v3617
        %v3814 = vunpack.c.l.b16 %v3618
        %v3815 = vunpack.c.h.b16 %v3618
        %v3816 = vunpack.c.l.b16 %v3619
        %v3817 = vunpack.c.h.b16 %v3619
        %v3818 = vunpack.c.l.b16 %v3620
        %v3819 = vunpack.c.h.b16 %v3620
        %v3820 = vunpack.c.l.b16 %v3621
        %v3821 = vunpack.c.h.b16 %v3621
        %v3822 = vunpack.c.l.b16 %v3622
        %v3823 = vunpack.c.h.b16 %v3622
        %v3824 = vunpack.c.l.b16 %v3623
        %v3825 = vunpack.c.h.b16 %v3623
        %v3826 = vunpack.c.l.b16 %v3624
        %v3827 = vunpack.c.h.b16 %v3624
        %v3828 = vunpack.c.l.b16 %v3625
        %v3829 = vunpack.c.h.b16 %v3625
        %v3830 = vunpack.c.l.b16 %v3626
        %v3831 = vunpack.c.h.b16 %v3626
        %v3832 = vunpack.c.l.b16 %v3627
        %v3833 = vunpack.c.h.b16 %v3627
        %v3834 = vunpack.c.l.b16 %v3628
        %v3835 = vunpack.c.h.b16 %v3628
        %v3836 = vunpack.c.l.b16 %v3629
        %v3837 = vunpack.c.h.b16 %v3629
        %v3838 = vunpack.c.l.b16 %v3630
        %v3839 = vunpack.c.h.b16 %v3630
        %v3840 = vunpack.c.l.b16 %v3631
        %v3841 = vunpack.c.h.b16 %v3631
        %v3842 = vunpack.c.l.b16 %v3632
        %v3843 = vunpack.c.h.b16 %v3632
        %v3844 = vunpack.c.l.b16 %v3633
        %v3845 = vunpack.c.h.b16 %v3633
        %v3846 = vunpack.c.l.b16 %v3634
        %v3847 = vunpack.c.h.b16 %v3634
        %v3848 = vunpack.c.l.b16 %v3635
        %v3849 = vunpack.c.h.b16 %v3635
        %v3850 = vunpack.c.l.b16 %v3636
        %v3851 = vunpack.c.h.b16 %v3636
        %v3852 = vunpack.c.l.b16 %v3637
        %v3853 = vunpack.c.h.b16 %v3637
        %v3854 = vunpack.c.l.b16 %v3638
        %v3855 = vunpack.c.h.b16 %v3638
        %v3856 = vunpack.c.l.b16 %v3639
        %v3857 = vunpack.c.h.b16 %v3639
        %v3858 = vunpack.c.l.b16 %v3640
        %v3859 = vunpack.c.h.b16 %v3640
        %v3860 = vunpack.c.l.b16 %v3641
        %v3861 = vunpack.c.h.b16 %v3641
        %v3862 = vunpack.c.l.b16 %v3642
        %v3863 = vunpack.c.h.b16 %v3642
        %v3864 = vunpack.c.l.b16 %v3643
        %v3865 = vunpack.c.h.b16 %v3643
        %v3866 = vunpack.c.l.b16 %v3644
        %v3867 = vunpack.c.h.b16 %v3644
        %v3868 = vunpack.c.l.b16 %v3645
        %v3869 = vunpack.c.h.b16 %v3645
        %v3870 = vunpack.c.l.b16 %v3646
        %v3871 = vunpack.c.h.b16 %v3646
        %v3872 = vunpack.c.l.b16 %v3647
        %v3873 = vunpack.c.h.b16 %v3647
        %v3874 = vunpack.c.l.b16 %v3648
        %v3875 = vunpack.c.h.b16 %v3648
        %v3876 = vunpack.c.l.b16 %v3649
        %v3877 = vunpack.c.h.b16 %v3649
        %v3878 = vunpack.c.l.b16 %v3650
        %v3879 = vunpack.c.h.b16 %v3650
        %v3880 = vunpack.c.l.b16 %v3651
        %v3881 = vunpack.c.h.b16 %v3651
        %v3882 = vunpack.c.l.b16 %v3652
        %v3883 = vunpack.c.h.b16 %v3652
        %v3884 = vunpack.c.l.b16 %v3653
        %v3885 = vunpack.c.h.b16 %v3653
        %v3886 = vunpack.c.l.b16 %v3654
        %v3887 = vunpack.c.h.b16 %v3654
        %v3888 = vunpack.c.l.b16 %v3655
        %v3889 = vunpack.c.h.b16 %v3655
        %v3890 = vunpack.c.l.b16 %v3656
        %v3891 = vunpack.c.h.b16 %v3656
        %v3892 = vunpack.c.l.b16 %v3657
        %v3893 = vunpack.c.h.b16 %v3657
        %v3894 = vunpack.c.l.b16 %v3658
        %v3895 = vunpack.c.h.b16 %v3658
        %v3896 = vunpack.c.l.b16 %v3659
        %v3897 = vunpack.c.h.b16 %v3659
        %v3898 = vunpack.c.l.b16 %v3660
        %v3899 = vunpack.c.h.b16 %v3660
        %v3900 = vunpack.c.l.b16 %v3661
        %v3901 = vunpack.c.h.b16 %v3661
        %v3902 = vunpack.c.l.b16 %v3662
        %v3903 = vunpack.c.h.b16 %v3662
        %v3904 = vunpack.c.l.b16 %v3663
        %v3905 = vunpack.c.h.b16 %v3663
        %v3906 = vunpack.c.l.b16 %v3664
        %v3907 = vunpack.c.h.b16 %v3664
        %v3908 = vunpack.c.l.b16 %v3665
        %v3909 = vunpack.c.h.b16 %v3665
        %v3910 = vunpack.c.l.b16 %v3666
        %v3911 = vunpack.c.h.b16 %v3666
        %v3912 = vunpack.c.l.b16 %v3667
        %v3913 = vunpack.c.h.b16 %v3667
        %v3914 = vunpack.c.l.b16 %v3668
        %v3915 = vunpack.c.h.b16 %v3668
        %v3916 = vunpack.c.l.b16 %v3669
        %v3917 = vunpack.c.h.b16 %v3669
        %v3918 = vunpack.c.l.b16 %v3670
        %v3919 = vunpack.c.h.b16 %v3670
        %v3920 = vunpack.c.l.b16 %v3671
        %v3921 = vunpack.c.h.b16 %v3671
        %v3922 = vunpack.c.l.b16 %v3672
        %v3923 = vunpack.c.h.b16 %v3672
        %v3924 = vunpack.c.l.b16 %v3673
        %v3925 = vunpack.c.h.b16 %v3673
        %v3926 = vpack.c.b16 %v3768, %v3766
        %v3927 = vpack.c.b16 %v3769, %v3767
        %v3928 = vpack.c.b16 %v3772, %v3770
        %v3929 = vpack.c.b16 %v3773, %v3771
        %v3930 = vpack.c.b16 %v3776, %v3774
        %v3931 = vpack.c.b16 %v3777, %v3775
        %v3932 = vpack.c.b16 %v3780, %v3778
        %v3933 = vpack.c.b16 %v3781, %v3779
        %v3934 = vpack.c.b16 %v3784, %v3782
        %v3935 = vpack.c.b16 %v3785, %v3783
        %v3936 = vpack.c.b16 %v3788, %v3786
        %v3937 = vpack.c.b16 %v3789, %v3787
        %v3938 = vpack.c.b16 %v3792, %v3790
        %v3939 = vpack.c.b16 %v3793, %v3791
        %v3940 = vpack.c.b16 %v3796, %v3794
        %v3941 = vpack.c.b16 %v3797, %v3795
        %v3942 = vpack.c.b16 %v3800, %v3798
        %v3943 = vpack.c.b16 %v3801, %v3799
        %v3944 = vpack.c.b16 %v3804, %v3802
        %v3945 = vpack.c.b16 %v3805, %v3803
        %v3946 = vpack.c.b16 %v3808, %v3806
        %v3947 = vpack.c.b16 %v3809, %v3807
        %v3948 = vpack.c.b16 %v3812, %v3810
        %v3949 = vpack.c.b16 %v3813, %v3811
        %v3950 = vpack.c.b16 %v3816, %v3814
        %v3951 = vpack.c.b16 %v3817, %v3815
        %v3952 = vpack.c.b16 %v3820, %v3818
        %v3953 = vpack.c.b16 %v3821, %v3819
        %v3954 = vpack.c.b16 %v3824, %v3822
        %v3955 = vpack.c.b16 %v3825, %v3823
        %v3956 = vpack.c.b16 %v3828, %v3826
        %v3957 = vpack.c.b16 %v3829, %v3827
        %v3958 = vpack.c.b16 %v3832, %v3830
        %v3959 = vpack.c.b16 %v3833, %v3831
        %v3960 = vpack.c.b16 %v3836, %v3834
        %v3961 = vpack.c.b16 %v3837, %v3835
        %v3962 = vpack.c.b16 %v3840, %v3838
        %v3963 = vpack.c.b16 %v3841, %v3839
        %v3964 = vpack.c.b16 %v3844, %v3842
        %v3965 = vpack.c.b16 %v3845, %v3843
        %v3966 = vpack.c.b16 %v3848, %v3846
        %v3967 = vpack.c.b16 %v3849, %v3847
        %v3968 = vpack.c.b16 %v3852, %v3850
        %v3969 = vpack.c.b16 %v3853, %v3851
        %v3970 = vpack.c.b16 %v3856, %v3854
        %v3971 = vpack.c.b16 %v3857, %v3855
        %v3972 = vpack.c.b16 %v3860, %v3858
        %v3973 = vpack.c.b16 %v3861, %v3859
        %v3974 = vpack.c.b16 %v3864, %v3862
        %v3975 = vpack.c.b16 %v3865, %v3863
        %v3976 = vpack.c.b16 %v3868, %v3866
        %v3977 = vpack.c.b16 %v3869, %v3867
        %v3978 = vpack.c.b16 %v3872, %v3870
        %v3979 = vpack.c.b16 %v3873, %v3871
        %v3980 = vpack.c.b16 %v3876, %v3874
        %v3981 = vpack.c.b16 %v3877, %v3875
        %v3982 = vpack.c.b16 %v3880, %v3878
        %v3983 = vpack.c.b16 %v3881, %v3879
        %v3984 = vpack.c.b16 %v3884, %v3882
        %v3985 = vpack.c.b16 %v3885, %v3883
        %v3986 = vpack.c.b16 %v3888, %v3886
        %v3987 = vpack.c.b16 %v3889, %v3887
        %v3988 = vpack.c.b16 %v3892, %v3890
        %v3989 = vpack.c.b16 %v3893, %v3891
        %v3990 = vpack.c.b16 %v3896, %v3894
        %v3991 = vpack.c.b16 %v3897, %v3895
        %v3992 = vpack.c.b16 %v3900, %v3898
        %v3993 = vpack.c.b16 %v3901, %v3899
        %v3994 = vpack.c.b16 %v3904, %v3902
        %v3995 = vpack.c.b16 %v3905, %v3903
        %v3996 = vpack.c.b16 %v3908, %v3906
        %v3997 = vpack.c.b16 %v3909, %v3907
        %v3998 = vpack.c.b16 %v3912, %v3910
        %v3999 = vpack.c.b16 %v3913, %v3911
        %v4000 = vpack.c.b16 %v3916, %v3914
        %v4001 = vpack.c.b16 %v3917, %v3915
        %v4002 = vpack.c.b16 %v3920, %v3918
        %v4003 = vpack.c.b16 %v3921, %v3919
        %v4004 = vpack.c.b16 %v3924, %v3922
        %v4005 = vpack.c.b16 %v3925, %v3923
        %4086 = vmatprep.subr.bf16.mxu0 %v3927
        %4087 = vmatpush1.bf16.msra.mxu0 %v3926
        %4088 = vmatprep.subr.bf16.mxu0 %v3929
        %4089 = vmatpush1.bf16.msra.mxu0 %v3928
        %4090 = vmatprep.subr.bf16.mxu0 %v3931
        %4091 = vmatpush1.bf16.msra.mxu0 %v3930
        %4092 = vmatprep.subr.bf16.mxu0 %v3933
        %4093 = vmatpush1.bf16.msra.mxu0 %v3932
        %4094 = vmatprep.subr.bf16.mxu0 %v3935
        %4095 = vmatpush1.bf16.msra.mxu0 %v3934
        %4096 = vmatprep.subr.bf16.mxu0 %v3937
        %4097 = vmatpush1.bf16.msra.mxu0 %v3936
        %4098 = vmatprep.subr.bf16.mxu0 %v3939
        %4099 = vmatpush1.bf16.msra.mxu0 %v3938
        %4100 = vmatprep.subr.bf16.mxu0 %v3941
        %4101 = vmatpush1.bf16.msra.mxu0 %v3940
        %4102 = vmatprep.subr.bf16.mxu0 %v3943
        %4103 = vmatpush1.bf16.msra.mxu0 %v3942
        %4104 = vmatprep.subr.bf16.mxu0 %v3945
        %4105 = vmatpush1.bf16.msra.mxu0 %v3944
        %4106 = vmatprep.subr.bf16.mxu0 %v3947
        %4107 = vmatpush1.bf16.msra.mxu0 %v3946
        %4108 = vmatprep.subr.bf16.mxu0 %v3949
        %4109 = vmatpush1.bf16.msra.mxu0 %v3948
        %4110 = vmatprep.subr.bf16.mxu0 %v3951
        %4111 = vmatpush1.bf16.msra.mxu0 %v3950
        %4112 = vmatprep.subr.bf16.mxu0 %v3953
        %4113 = vmatpush1.bf16.msra.mxu0 %v3952
        %4114 = vmatprep.subr.bf16.mxu0 %v3955
        %4115 = vmatpush1.bf16.msra.mxu0 %v3954
        %4116 = vmatprep.subr.bf16.mxu0 %v3957
        %4117 = vmatpush1.bf16.msra.mxu0 %v3956
        %4118 = vmatprep.mubr.bf16.mxu0 %v3515
        %4119 = vmatmul.mubr.bf16.gmra.mrb[0].mxu0 %v3514
        %v4120 = vpop.f32.mrb[0].mxu0
        %v4121 = vadd.f32 %v3679, %v4120
        %v4122 = vpop.f32.mrb[0].mxu0
        %v4123 = vadd.f32 %v3683, %v4122
        %v4124 = vpop.f32.mrb[0].mxu0
        %v4125 = vadd.f32 %v3679, %v4124
        %v4126 = vpop.f32.mrb[0].mxu0
        %v4127 = vadd.f32 %v3683, %v4126
        %4128 = vmatprep.mubr.bf16.mxu0 %v3520
        %4129 = vmatmul.mubr.bf16.gmra.mrb[0].mxu0 %v3519
        %v4130 = vpop.f32.mrb[0].mxu0
        %v4131 = vadd.f32 %v3679, %v4130
        %v4132 = vpop.f32.mrb[0].mxu0
        %v4133 = vadd.f32 %v3683, %v4132
        %v4134 = vpop.f32.mrb[0].mxu0
        %v4135 = vadd.f32 %v3679, %v4134
        %v4136 = vpop.f32.mrb[0].mxu0
        %v4137 = vadd.f32 %v3683, %v4136
        %4138 = vmatprep.mubr.bf16.mxu0 %v3525
        %4139 = vmatmul.mubr.bf16.gmra.mrb[0].mxu0 %v3524
        %v4140 = vpop.f32.mrb[0].mxu0
        %v4141 = vadd.f32 %v3679, %v4140
        %v4142 = vpop.f32.mrb[0].mxu0
        %v4143 = vadd.f32 %v3683, %v4142
        %v4144 = vpop.f32.mrb[0].mxu0
        %v4145 = vadd.f32 %v3679, %v4144
        %v4146 = vpop.f32.mrb[0].mxu0
        %v4147 = vadd.f32 %v3683, %v4146
        %4148 = vmatprep.mubr.bf16.mxu0 %v3530
        %4149 = vmatmul.mubr.bf16.gmra.mrb[0].mxu0 %v3529
        %v4150 = vpop.f32.mrb[0].mxu0
        %v4151 = vadd.f32 %v3679, %v4150
        %v4152 = vpop.f32.mrb[0].mxu0
        %v4153 = vadd.f32 %v3683, %v4152
        %v4154 = vpop.f32.mrb[0].mxu0
        %v4155 = vadd.f32 %v3679, %v4154
        %v4156 = vpop.f32.mrb[0].mxu0
        %v4157 = vadd.f32 %v3683, %v4156
        %4158 = vmatprep.mubr.bf16.mxu0 %v3535
        %4159 = vmatmul.mubr.bf16.gmra.mrb[0].mxu0 %v3534
        %v4160 = vpop.f32.mrb[0].mxu0
        %v4161 = vadd.f32 %v3679, %v4160
        %v4162 = vpop.f32.mrb[0].mxu0
        %v4163 = vadd.f32 %v3683, %v4162
        %v4164 = vpop.f32.mrb[0].mxu0
        %v4165 = vadd.f32 %v3679, %v4164
        %v4166 = vpop.f32.mrb[0].mxu0
        %v4167 = vadd.f32 %v3683, %v4166
        %4168 = vmatprep.mubr.bf16.mxu0 %v3540
        %4169 = vmatmul.mubr.bf16.gmra.mrb[0].mxu0 %v3539
        %v4170 = vpop.f32.mrb[0].mxu0
        %v4171 = vadd.f32 %v3679, %v4170
        %v4172 = vpop.f32.mrb[0].mxu0
        %v4173 = vadd.f32 %v3683, %v4172
        %v4174 = vpop.f32.mrb[0].mxu0
        %v4175 = vadd.f32 %v3679, %v4174
        %v4176 = vpop.f32.mrb[0].mxu0
        %v4177 = vadd.f32 %v3683, %v4176
        %4178 = vmatprep.mubr.bf16.mxu0 %v3545
        %4179 = vmatmul.mubr.bf16.gmra.mrb[0].mxu0 %v3544
        %v4180 = vpop.f32.mrb[0].mxu0
        %v4181 = vadd.f32 %v3679, %v4180
        %v4182 = vpop.f32.mrb[0].mxu0
        %v4183 = vadd.f32 %v3683, %v4182
        %v4184 = vpop.f32.mrb[0].mxu0
        %v4185 = vadd.f32 %v3679, %v4184
        %v4186 = vpop.f32.mrb[0].mxu0
        %v4187 = vadd.f32 %v3683, %v4186
        %4188 = vmatprep.mubr.bf16.mxu0 %v3550
        %4189 = vmatmul.mubr.bf16.gmra.mrb[0].mxu0 %v3549
        %v4190 = vpop.f32.mrb[0].mxu0
        %v4191 = vadd.f32 %v3679, %v4190
        %v4192 = vpop.f32.mrb[0].mxu0
        %v4193 = vadd.f32 %v3683, %v4192
        %v4194 = vpop.f32.mrb[0].mxu0
        %v4195 = vadd.f32 %v3679, %v4194
        %v4196 = vpop.f32.mrb[0].mxu0
        %v4197 = vadd.f32 %v3683, %v4196
        %4198 = vmatprep.mubr.bf16.mxu0 %v3555
        %4199 = vmatmul.mubr.bf16.gmra.mrb[0].mxu0 %v3554
        %v4200 = vpop.f32.mrb[0].mxu0
        %v4201 = vadd.f32 %v3679, %v4200
        %v4202 = vpop.f32.mrb[0].mxu0
        %v4203 = vadd.f32 %v3683, %v4202
        %v4204 = vpop.f32.mrb[0].mxu0
        %v4205 = vadd.f32 %v3679, %v4204
        %v4206 = vpop.f32.mrb[0].mxu0
        %v4207 = vadd.f32 %v3683, %v4206
        %4208 = vmatprep.mubr.bf16.mxu0 %v3560
        %4209 = vmatmul.mubr.bf16.gmra.mrb[0].mxu0 %v3559
        %v4210 = vpop.f32.mrb[0].mxu0
        %v4211 = vadd.f32 %v3679, %v4210
        %v4212 = vpop.f32.mrb[0].mxu0
        %v4213 = vadd.f32 %v3683, %v4212
        %v4214 = vpop.f32.mrb[0].mxu0
        %v4215 = vadd.f32 %v3679, %v4214
        %v4216 = vpop.f32.mrb[0].mxu0
        %v4217 = vadd.f32 %v3683, %v4216
        %4218 = vmatprep.mubr.bf16.mxu0 %v3565
        %4219 = vmatmul.mubr.bf16.gmra.mrb[0].mxu0 %v3564
        %v4220 = vpop.f32.mrb[0].mxu0
        %v4221 = vadd.f32 %v3679, %v4220
        %v4222 = vpop.f32.mrb[0].mxu0
        %v4223 = vadd.f32 %v3683, %v4222
        %v4224 = vpop.f32.mrb[0].mxu0
        %v4225 = vadd.f32 %v3679, %v4224
        %v4226 = vpop.f32.mrb[0].mxu0
        %v4227 = vadd.f32 %v3683, %v4226
        %4228 = vmatprep.mubr.bf16.mxu0 %v3570
        %4229 = vmatmul.mubr.bf16.gmra.mrb[0].mxu0 %v3569
        %v4230 = vpop.f32.mrb[0].mxu0
        %v4231 = vadd.f32 %v3679, %v4230
        %v4232 = vpop.f32.mrb[0].mxu0
        %v4233 = vadd.f32 %v3683, %v4232
        %v4234 = vpop.f32.mrb[0].mxu0
        %v4235 = vadd.f32 %v3679, %v4234
        %v4236 = vpop.f32.mrb[0].mxu0
        %v4237 = vadd.f32 %v3683, %v4236
        %4238 = vmatprep.mubr.bf16.mxu0 %v3575
        %4239 = vmatmul.mubr.bf16.gmra.mrb[0].mxu0 %v3574
        %v4240 = vpop.f32.mrb[0].mxu0
        %v4241 = vadd.f32 %v3679, %v4240
        %v4242 = vpop.f32.mrb[0].mxu0
        %v4243 = vadd.f32 %v3683, %v4242
        %v4244 = vpop.f32.mrb[0].mxu0
        %v4245 = vadd.f32 %v3679, %v4244
        %v4246 = vpop.f32.mrb[0].mxu0
        %v4247 = vadd.f32 %v3683, %v4246
        %4248 = vmatprep.mubr.bf16.mxu0 %v3580
        %4249 = vmatmul.mubr.bf16.gmra.mrb[0].mxu0 %v3579
        %v4250 = vpop.f32.mrb[0].mxu0
        %v4251 = vadd.f32 %v3679, %v4250
        %v4252 = vpop.f32.mrb[0].mxu0
        %v4253 = vadd.f32 %v3683, %v4252
        %v4254 = vpop.f32.mrb[0].mxu0
        %v4255 = vadd.f32 %v3679, %v4254
        %v4256 = vpop.f32.mrb[0].mxu0
        %v4257 = vadd.f32 %v3683, %v4256
        %4258 = vmatprep.mubr.bf16.mxu0 %v3585
        %4259 = vmatmul.mubr.bf16.gmra.mrb[0].mxu0 %v3584
        %v4260 = vpop.f32.mrb[0].mxu0
        %v4261 = vadd.f32 %v3679, %v4260
        %v4262 = vpop.f32.mrb[0].mxu0
        %v4263 = vadd.f32 %v3683, %v4262
        %v4264 = vpop.f32.mrb[0].mxu0
        %v4265 = vadd.f32 %v3679, %v4264
        %v4266 = vpop.f32.mrb[0].mxu0
        %v4267 = vadd.f32 %v3683, %v4266
        %4268 = vmatprep.mubr.bf16.mxu0 %v3590
        %4269 = vmatmul.mubr.bf16.gmra.mrb[0].mxu0 %v3589
        %v4270 = vpop.f32.mrb[0].mxu0
        %v4271 = vadd.f32 %v3679, %v4270
        %v4272 = vpop.f32.mrb[0].mxu0
        %v4273 = vadd.f32 %v3683, %v4272
        %v4274 = vpop.f32.mrb[0].mxu0
        %v4275 = vadd.f32 %v3679, %v4274
        %v4276 = vpop.f32.mrb[0].mxu0
        %v4277 = vadd.f32 %v3683, %v4276
        %4278 = vdwg.mxu0
        %4279 = vmatprep.subr.bf16.mxu0 %v3959
        %4280 = vmatpush1.bf16.msra.mxu0 %v3958
        %4281 = vmatprep.subr.bf16.mxu0 %v3961
        %4282 = vmatpush1.bf16.msra.mxu0 %v3960
        %4283 = vmatprep.subr.bf16.mxu0 %v3963
        %4284 = vmatpush1.bf16.msra.mxu0 %v3962
        %4285 = vmatprep.subr.bf16.mxu0 %v3965
        %4286 = vmatpush1.bf16.msra.mxu0 %v3964
        %4287 = vmatprep.subr.bf16.mxu0 %v3967
        %4288 = vmatpush1.bf16.msra.mxu0 %v3966
        %4289 = vmatprep.subr.bf16.mxu0 %v3969
        %4290 = vmatpush1.bf16.msra.mxu0 %v3968
        %4291 = vmatprep.subr.bf16.mxu0 %v3971
        %4292 = vmatpush1.bf16.msra.mxu0 %v3970
        %4293 = vmatprep.subr.bf16.mxu0 %v3973
        %4294 = vmatpush1.bf16.msra.mxu0 %v3972
        %4295 = vmatprep.subr.bf16.mxu0 %v3975
        %4296 = vmatpush1.bf16.msra.mxu0 %v3974
        %4297 = vmatprep.subr.bf16.mxu0 %v3977
        %4298 = vmatpush1.bf16.msra.mxu0 %v3976
        %4299 = vmatprep.subr.bf16.mxu0 %v3979
        %4300 = vmatpush1.bf16.msra.mxu0 %v3978
        %4301 = vmatprep.subr.bf16.mxu0 %v3981
        %4302 = vmatpush1.bf16.msra.mxu0 %v3980
        %4303 = vmatprep.subr.bf16.mxu0 %v3983
        %4304 = vmatpush1.bf16.msra.mxu0 %v3982
        %4305 = vmatprep.subr.bf16.mxu0 %v3985
        %4306 = vmatpush1.bf16.msra.mxu0 %v3984
        %4307 = vmatprep.subr.bf16.mxu0 %v3987
        %4308 = vmatpush1.bf16.msra.mxu0 %v3986
        %4309 = vmatprep.subr.bf16.mxu0 %v3989
        %4310 = vmatpush1.bf16.msra.mxu0 %v3988
        %4311 = vmatprep.mubr.bf16.mxu0 %v3517
        %4312 = vmatmul.mubr.bf16.gmra.mrb[0].mxu0 %v3516
        %v4313 = vpop.f32.mrb[0].mxu0
        %v4314 = vadd.f32 %v4121, %v4313
        %v4315 = vpop.f32.mrb[0].mxu0
        %v4316 = vadd.f32 %v4123, %v4315
        %v4317 = vpop.f32.mrb[0].mxu0
        %v4318 = vadd.f32 %v4125, %v4317
        %v4319 = vpop.f32.mrb[0].mxu0
        %v4320 = vadd.f32 %v4127, %v4319
        %4321 = vmatprep.mubr.bf16.mxu0 %v3522
        %4322 = vmatmul.mubr.bf16.gmra.mrb[0].mxu0 %v3521
        %v4323 = vpop.f32.mrb[0].mxu0
        %v4324 = vadd.f32 %v4131, %v4323
        %v4325 = vpop.f32.mrb[0].mxu0
        %v4326 = vadd.f32 %v4133, %v4325
        %v4327 = vpop.f32.mrb[0].mxu0
        %v4328 = vadd.f32 %v4135, %v4327
        %v4329 = vpop.f32.mrb[0].mxu0
        %v4330 = vadd.f32 %v4137, %v4329
        %4331 = vmatprep.mubr.bf16.mxu0 %v3527
        %4332 = vmatmul.mubr.bf16.gmra.mrb[0].mxu0 %v3526
        %v4333 = vpop.f32.mrb[0].mxu0
        %v4334 = vadd.f32 %v4141, %v4333
        %v4335 = vpop.f32.mrb[0].mxu0
        %v4336 = vadd.f32 %v4143, %v4335
        %v4337 = vpop.f32.mrb[0].mxu0
        %v4338 = vadd.f32 %v4145, %v4337
        %v4339 = vpop.f32.mrb[0].mxu0
        %v4340 = vadd.f32 %v4147, %v4339
        %4341 = vmatprep.mubr.bf16.mxu0 %v3532
        %4342 = vmatmul.mubr.bf16.gmra.mrb[0].mxu0 %v3531
        %v4343 = vpop.f32.mrb[0].mxu0
        %v4344 = vadd.f32 %v4151, %v4343
        %v4345 = vpop.f32.mrb[0].mxu0
        %v4346 = vadd.f32 %v4153, %v4345
        %v4347 = vpop.f32.mrb[0].mxu0
        %v4348 = vadd.f32 %v4155, %v4347
        %v4349 = vpop.f32.mrb[0].mxu0
        %v4350 = vadd.f32 %v4157, %v4349
        %4351 = vmatprep.mubr.bf16.mxu0 %v3537
        %4352 = vmatmul.mubr.bf16.gmra.mrb[0].mxu0 %v3536
        %v4353 = vpop.f32.mrb[0].mxu0
        %v4354 = vadd.f32 %v4161, %v4353
        %v4355 = vpop.f32.mrb[0].mxu0
        %v4356 = vadd.f32 %v4163, %v4355
        %v4357 = vpop.f32.mrb[0].mxu0
        %v4358 = vadd.f32 %v4165, %v4357
        %v4359 = vpop.f32.mrb[0].mxu0
        %v4360 = vadd.f32 %v4167, %v4359
        %4361 = vmatprep.mubr.bf16.mxu0 %v3542
        %4362 = vmatmul.mubr.bf16.gmra.mrb[0].mxu0 %v3541
        %v4363 = vpop.f32.mrb[0].mxu0
        %v4364 = vadd.f32 %v4171, %v4363
        %v4365 = vpop.f32.mrb[0].mxu0
        %v4366 = vadd.f32 %v4173, %v4365
        %v4367 = vpop.f32.mrb[0].mxu0
        %v4368 = vadd.f32 %v4175, %v4367
        %v4369 = vpop.f32.mrb[0].mxu0
        %v4370 = vadd.f32 %v4177, %v4369
        %4371 = vmatprep.mubr.bf16.mxu0 %v3547
        %4372 = vmatmul.mubr.bf16.gmra.mrb[0].mxu0 %v3546
        %v4373 = vpop.f32.mrb[0].mxu0
        %v4374 = vadd.f32 %v4181, %v4373
        %v4375 = vpop.f32.mrb[0].mxu0
        %v4376 = vadd.f32 %v4183, %v4375
        %v4377 = vpop.f32.mrb[0].mxu0
        %v4378 = vadd.f32 %v4185, %v4377
        %v4379 = vpop.f32.mrb[0].mxu0
        %v4380 = vadd.f32 %v4187, %v4379
        %4381 = vmatprep.mubr.bf16.mxu0 %v3552
        %4382 = vmatmul.mubr.bf16.gmra.mrb[0].mxu0 %v3551
        %v4383 = vpop.f32.mrb[0].mxu0
        %v4384 = vadd.f32 %v4191, %v4383
        %v4385 = vpop.f32.mrb[0].mxu0
        %v4386 = vadd.f32 %v4193, %v4385
        %v4387 = vpop.f32.mrb[0].mxu0
        %v4388 = vadd.f32 %v4195, %v4387
        %v4389 = vpop.f32.mrb[0].mxu0
        %v4390 = vadd.f32 %v4197, %v4389
        %4391 = vmatprep.mubr.bf16.mxu0 %v3557
        %4392 = vmatmul.mubr.bf16.gmra.mrb[0].mxu0 %v3556
        %v4393 = vpop.f32.mrb[0].mxu0
        %v4394 = vadd.f32 %v4201, %v4393
        %v4395 = vpop.f32.mrb[0].mxu0
        %v4396 = vadd.f32 %v4203, %v4395
        %v4397 = vpop.f32.mrb[0].mxu0
        %v4398 = vadd.f32 %v4205, %v4397
        %v4399 = vpop.f32.mrb[0].mxu0
        %v4400 = vadd.f32 %v4207, %v4399
        %4401 = vmatprep.mubr.bf16.mxu0 %v3562
        %4402 = vmatmul.mubr.bf16.gmra.mrb[0].mxu0 %v3561
        %v4403 = vpop.f32.mrb[0].mxu0
        %v4404 = vadd.f32 %v4211, %v4403
        %v4405 = vpop.f32.mrb[0].mxu0
        %v4406 = vadd.f32 %v4213, %v4405
        %v4407 = vpop.f32.mrb[0].mxu0
        %v4408 = vadd.f32 %v4215, %v4407
        %v4409 = vpop.f32.mrb[0].mxu0
        %v4410 = vadd.f32 %v4217, %v4409
        %4411 = vmatprep.mubr.bf16.mxu0 %v3567
        %4412 = vmatmul.mubr.bf16.gmra.mrb[0].mxu0 %v3566
        %v4413 = vpop.f32.mrb[0].mxu0
        %v4414 = vadd.f32 %v4221, %v4413
        %v4415 = vpop.f32.mrb[0].mxu0
        %v4416 = vadd.f32 %v4223, %v4415
        %v4417 = vpop.f32.mrb[0].mxu0
        %v4418 = vadd.f32 %v4225, %v4417
        %v4419 = vpop.f32.mrb[0].mxu0
        %v4420 = vadd.f32 %v4227, %v4419
        %4421 = vmatprep.mubr.bf16.mxu0 %v3572
        %4422 = vmatmul.mubr.bf16.gmra.mrb[0].mxu0 %v3571
        %v4423 = vpop.f32.mrb[0].mxu0
        %v4424 = vadd.f32 %v4231, %v4423
        %v4425 = vpop.f32.mrb[0].mxu0
        %v4426 = vadd.f32 %v4233, %v4425
        %v4427 = vpop.f32.mrb[0].mxu0
        %v4428 = vadd.f32 %v4235, %v4427
        %v4429 = vpop.f32.mrb[0].mxu0
        %v4430 = vadd.f32 %v4237, %v4429
        %4431 = vmatprep.mubr.bf16.mxu0 %v3577
        %4432 = vmatmul.mubr.bf16.gmra.mrb[0].mxu0 %v3576
        %v4433 = vpop.f32.mrb[0].mxu0
        %v4434 = vadd.f32 %v4241, %v4433
        %v4435 = vpop.f32.mrb[0].mxu0
        %v4436 = vadd.f32 %v4243, %v4435
        %v4437 = vpop.f32.mrb[0].mxu0
        %v4438 = vadd.f32 %v4245, %v4437
        %v4439 = vpop.f32.mrb[0].mxu0
        %v4440 = vadd.f32 %v4247, %v4439
        %4441 = vmatprep.mubr.bf16.mxu0 %v3582
        %4442 = vmatmul.mubr.bf16.gmra.mrb[0].mxu0 %v3581
        %v4443 = vpop.f32.mrb[0].mxu0
        %v4444 = vadd.f32 %v4251, %v4443
        %v4445 = vpop.f32.mrb[0].mxu0
        %v4446 = vadd.f32 %v4253, %v4445
        %v4447 = vpop.f32.mrb[0].mxu0
        %v4448 = vadd.f32 %v4255, %v4447
        %v4449 = vpop.f32.mrb[0].mxu0
        %v4450 = vadd.f32 %v4257, %v4449
        %4451 = vmatprep.mubr.bf16.mxu0 %v3587
        %4452 = vmatmul.mubr.bf16.gmra.mrb[0].mxu0 %v3586
        %v4453 = vpop.f32.mrb[0].mxu0
        %v4454 = vadd.f32 %v4261, %v4453
        %v4455 = vpop.f32.mrb[0].mxu0
        %v4456 = vadd.f32 %v4263, %v4455
        %v4457 = vpop.f32.mrb[0].mxu0
        %v4458 = vadd.f32 %v4265, %v4457
        %v4459 = vpop.f32.mrb[0].mxu0
        %v4460 = vadd.f32 %v4267, %v4459
        %4461 = vmatprep.mubr.bf16.mxu0 %v3592
        %4462 = vmatmul.mubr.bf16.gmra.mrb[0].mxu0 %v3591
        %v4463 = vpop.f32.mrb[0].mxu0
        %v4464 = vadd.f32 %v4271, %v4463
        %v4465 = vpop.f32.mrb[0].mxu0
        %v4466 = vadd.f32 %v4273, %v4465
        %v4467 = vpop.f32.mrb[0].mxu0
        %v4468 = vadd.f32 %v4275, %v4467
        %v4469 = vpop.f32.mrb[0].mxu0
        %v4470 = vadd.f32 %v4277, %v4469
        %4471 = vdwg.mxu0
        %4472 = vmatprep.subr.bf16.mxu0 %v3991
        %4473 = vmatpush1.bf16.msra.mxu0 %v3990
        %4474 = vmatprep.subr.bf16.mxu0 %v3993
        %4475 = vmatpush1.bf16.msra.mxu0 %v3992
        %4476 = vmatprep.subr.bf16.mxu0 %v3995
        %4477 = vmatpush1.bf16.msra.mxu0 %v3994
        %4478 = vmatprep.subr.bf16.mxu0 %v3997
        %4479 = vmatpush1.bf16.msra.mxu0 %v3996
        %4480 = vmatprep.subr.bf16.mxu0 %v3999
        %4481 = vmatpush1.bf16.msra.mxu0 %v3998
        %4482 = vmatprep.subr.bf16.mxu0 %v4001
        %4483 = vmatpush1.bf16.msra.mxu0 %v4000
        %4484 = vmatprep.subr.bf16.mxu0 %v4003
        %4485 = vmatpush1.bf16.msra.mxu0 %v4002
        %4486 = vmatprep.subr.bf16.mxu0 %v4005
        %4487 = vmatpush1.bf16.msra.mxu0 %v4004
        %4488 = vmatprep.subr.bf16.mxu0 0
        %4489 = vmatpush1.bf16.msra.mxu0 0
        %4490 = vmatprep.subr.bf16.mxu0 0
        %4491 = vmatpush1.bf16.msra.mxu0 0
        %4492 = vmatprep.subr.bf16.mxu0 0
        %4493 = vmatpush1.bf16.msra.mxu0 0
        %4494 = vmatprep.subr.bf16.mxu0 0
        %4495 = vmatpush1.bf16.msra.mxu0 0
        %4496 = vmatprep.subr.bf16.mxu0 0
        %4497 = vmatpush1.bf16.msra.mxu0 0
        %4498 = vmatprep.subr.bf16.mxu0 0
        %4499 = vmatpush1.bf16.msra.mxu0 0
        %4500 = vmatprep.subr.bf16.mxu0 0
        %4501 = vmatpush1.bf16.msra.mxu0 0
        %4502 = vmatprep.subr.bf16.mxu0 0
        %4503 = vmatpush1.bf16.msra.mxu0 0
        %4504 = vmatprep.mubr.bf16.mxu0 0
        %4505 = vmatmul.mubr.bf16.gmra.mrb[0].mxu0 %v3518
        %v4506 = vpop.f32.mrb[0].mxu0
        %v4507 = vadd.f32 %v4314, %v4506
        %v4508 = vpop.f32.mrb[0].mxu0
        %v4509 = vadd.f32 %v4316, %v4508
        %v4510 = vpop.f32.mrb[0].mxu0
        %v4511 = vadd.f32 %v4318, %v4510
        %v4512 = vpop.f32.mrb[0].mxu0
        %v4513 = vadd.f32 %v4320, %v4512
        %4514 = vmatprep.mubr.bf16.mxu0 0
        %4515 = vmatmul.mubr.bf16.gmra.mrb[0].mxu0 %v3523
        %v4516 = vpop.f32.mrb[0].mxu0
        %v4517 = vadd.f32 %v4324, %v4516
        %v4518 = vpop.f32.mrb[0].mxu0
        %v4519 = vadd.f32 %v4326, %v4518
        %v4520 = vpop.f32.mrb[0].mxu0
        %v4521 = vadd.f32 %v4328, %v4520
        %v4522 = vpop.f32.mrb[0].mxu0
        %v4523 = vadd.f32 %v4330, %v4522
        %4524 = vmatprep.mubr.bf16.mxu0 0
        %4525 = vmatmul.mubr.bf16.gmra.mrb[0].mxu0 %v3528
        %v4526 = vpop.f32.mrb[0].mxu0
        %v4527 = vadd.f32 %v4334, %v4526
        %v4528 = vpop.f32.mrb[0].mxu0
        %v4529 = vadd.f32 %v4336, %v4528
        %v4530 = vpop.f32.mrb[0].mxu0
        %v4531 = vadd.f32 %v4338, %v4530
        %v4532 = vpop.f32.mrb[0].mxu0
        %v4533 = vadd.f32 %v4340, %v4532
        %4534 = vmatprep.mubr.bf16.mxu0 0
        %4535 = vmatmul.mubr.bf16.gmra.mrb[0].mxu0 %v3533
        %v4536 = vpop.f32.mrb[0].mxu0
        %v4537 = vadd.f32 %v4344, %v4536
        %v4538 = vpop.f32.mrb[0].mxu0
        %v4539 = vadd.f32 %v4346, %v4538
        %v4540 = vpop.f32.mrb[0].mxu0
        %v4541 = vadd.f32 %v4348, %v4540
        %v4542 = vpop.f32.mrb[0].mxu0
        %v4543 = vadd.f32 %v4350, %v4542
        %4544 = vmatprep.mubr.bf16.mxu0 0
        %4545 = vmatmul.mubr.bf16.gmra.mrb[0].mxu0 %v3538
        %v4546 = vpop.f32.mrb[0].mxu0
        %v4547 = vadd.f32 %v4354, %v4546
        %v4548 = vpop.f32.mrb[0].mxu0
        %v4549 = vadd.f32 %v4356, %v4548
        %v4550 = vpop.f32.mrb[0].mxu0
        %v4551 = vadd.f32 %v4358, %v4550
        %v4552 = vpop.f32.mrb[0].mxu0
        %v4553 = vadd.f32 %v4360, %v4552
        %4554 = vmatprep.mubr.bf16.mxu0 0
        %4555 = vmatmul.mubr.bf16.gmra.mrb[0].mxu0 %v3543
        %v4556 = vpop.f32.mrb[0].mxu0
        %v4557 = vadd.f32 %v4364, %v4556
        %v4558 = vpop.f32.mrb[0].mxu0
        %v4559 = vadd.f32 %v4366, %v4558
        %v4560 = vpop.f32.mrb[0].mxu0
        %v4561 = vadd.f32 %v4368, %v4560
        %v4562 = vpop.f32.mrb[0].mxu0
        %v4563 = vadd.f32 %v4370, %v4562
        %4564 = vmatprep.mubr.bf16.mxu0 0
        %4565 = vmatmul.mubr.bf16.gmra.mrb[0].mxu0 %v3548
        %v4566 = vpop.f32.mrb[0].mxu0
        %v4567 = vadd.f32 %v4374, %v4566
        %v4568 = vpop.f32.mrb[0].mxu0
        %v4569 = vadd.f32 %v4376, %v4568
        %v4570 = vpop.f32.mrb[0].mxu0
        %v4571 = vadd.f32 %v4378, %v4570
        %v4572 = vpop.f32.mrb[0].mxu0
        %v4573 = vadd.f32 %v4380, %v4572
        %4574 = vmatprep.mubr.bf16.mxu0 0
        %4575 = vmatmul.mubr.bf16.gmra.mrb[0].mxu0 %v3553
        %v4576 = vpop.f32.mrb[0].mxu0
        %v4577 = vadd.f32 %v4384, %v4576
        %v4578 = vpop.f32.mrb[0].mxu0
        %v4579 = vadd.f32 %v4386, %v4578
        %v4580 = vpop.f32.mrb[0].mxu0
        %v4581 = vadd.f32 %v4388, %v4580
        %v4582 = vpop.f32.mrb[0].mxu0
        %v4583 = vadd.f32 %v4390, %v4582
        %4584 = vmatprep.mubr.bf16.mxu0 0
        %4585 = vmatmul.mubr.bf16.gmra.mrb[0].mxu0 %v3558
        %v4586 = vpop.f32.mrb[0].mxu0
        %v4587 = vadd.f32 %v4394, %v4586
        %v4588 = vpop.f32.mrb[0].mxu0
        %v4589 = vadd.f32 %v4396, %v4588
        %v4590 = vpop.f32.mrb[0].mxu0
        %v4591 = vadd.f32 %v4398, %v4590
        %v4592 = vpop.f32.mrb[0].mxu0
        %v4593 = vadd.f32 %v4400, %v4592
        %4594 = vmatprep.mubr.bf16.mxu0 0
        %4595 = vmatmul.mubr.bf16.gmra.mrb[0].mxu0 %v3563
        %v4596 = vpop.f32.mrb[0].mxu0
        %v4597 = vadd.f32 %v4404, %v4596
        %v4598 = vpop.f32.mrb[0].mxu0
        %v4599 = vadd.f32 %v4406, %v4598
        %v4600 = vpop.f32.mrb[0].mxu0
        %v4601 = vadd.f32 %v4408, %v4600
        %v4602 = vpop.f32.mrb[0].mxu0
        %v4603 = vadd.f32 %v4410, %v4602
        %4604 = vmatprep.mubr.bf16.mxu0 0
        %4605 = vmatmul.mubr.bf16.gmra.mrb[0].mxu0 %v3568
        %v4606 = vpop.f32.mrb[0].mxu0
        %v4607 = vadd.f32 %v4414, %v4606
        %v4608 = vpop.f32.mrb[0].mxu0
        %v4609 = vadd.f32 %v4416, %v4608
        %v4610 = vpop.f32.mrb[0].mxu0
        %v4611 = vadd.f32 %v4418, %v4610
        %v4612 = vpop.f32.mrb[0].mxu0
        %v4613 = vadd.f32 %v4420, %v4612
        %4614 = vmatprep.mubr.bf16.mxu0 0
        %4615 = vmatmul.mubr.bf16.gmra.mrb[0].mxu0 %v3573
        %v4616 = vpop.f32.mrb[0].mxu0
        %v4617 = vadd.f32 %v4424, %v4616
        %v4618 = vpop.f32.mrb[0].mxu0
        %v4619 = vadd.f32 %v4426, %v4618
        %v4620 = vpop.f32.mrb[0].mxu0
        %v4621 = vadd.f32 %v4428, %v4620
        %v4622 = vpop.f32.mrb[0].mxu0
        %v4623 = vadd.f32 %v4430, %v4622
        %4624 = vmatprep.mubr.bf16.mxu0 0
        %4625 = vmatmul.mubr.bf16.gmra.mrb[0].mxu0 %v3578
        %v4626 = vpop.f32.mrb[0].mxu0
        %v4627 = vadd.f32 %v4434, %v4626
        %v4628 = vpop.f32.mrb[0].mxu0
        %v4629 = vadd.f32 %v4436, %v4628
        %v4630 = vpop.f32.mrb[0].mxu0
        %v4631 = vadd.f32 %v4438, %v4630
        %v4632 = vpop.f32.mrb[0].mxu0
        %v4633 = vadd.f32 %v4440, %v4632
        %4634 = vmatprep.mubr.bf16.mxu0 0
        %4635 = vmatmul.mubr.bf16.gmra.mrb[0].mxu0 %v3583
        %v4636 = vpop.f32.mrb[0].mxu0
        %v4637 = vadd.f32 %v4444, %v4636
        %v4638 = vpop.f32.mrb[0].mxu0
        %v4639 = vadd.f32 %v4446, %v4638
        %v4640 = vpop.f32.mrb[0].mxu0
        %v4641 = vadd.f32 %v4448, %v4640
        %v4642 = vpop.f32.mrb[0].mxu0
        %v4643 = vadd.f32 %v4450, %v4642
        %4644 = vmatprep.mubr.bf16.mxu0 0
        %4645 = vmatmul.mubr.bf16.gmra.mrb[0].mxu0 %v3588
        %v4646 = vpop.f32.mrb[0].mxu0
        %v4647 = vadd.f32 %v4454, %v4646
        %v4648 = vpop.f32.mrb[0].mxu0
        %v4649 = vadd.f32 %v4456, %v4648
        %v4650 = vpop.f32.mrb[0].mxu0
        %v4651 = vadd.f32 %v4458, %v4650
        %v4652 = vpop.f32.mrb[0].mxu0
        %v4653 = vadd.f32 %v4460, %v4652
        %4654 = vmatprep.mubr.bf16.mxu0 0
        %4655 = vmatmul.mubr.bf16.gmra.mrb[0].mxu0 %v3593
        %v4656 = vpop.f32.mrb[0].mxu0
        %v4657 = vadd.f32 %v4464, %v4656
        %v4658 = vpop.f32.mrb[0].mxu0
        %v4659 = vadd.f32 %v4466, %v4658
        %v4660 = vpop.f32.mrb[0].mxu0
        %v4661 = vadd.f32 %v4468, %v4660
        %v4662 = vpop.f32.mrb[0].mxu0
        %v4663 = vadd.f32 %v4470, %v4662
        %4664 = vdwg.mxu0
        %v4665 = vmax.f32 %v4507, 0.0
        %v4666 = vmax.f32 %v4509, 0.0
        %v4667 = vmax.f32 %v4511, 0.0
        %v4668 = vmax.f32 %v4513, 0.0
        %v4669 = vmax.f32 %v4517, 0.0
        %v4670 = vmax.f32 %v4519, 0.0
        %v4671 = vmax.f32 %v4521, 0.0
        %v4672 = vmax.f32 %v4523, 0.0
        %v4673 = vmax.f32 %v4527, 0.0
        %v4674 = vmax.f32 %v4529, 0.0
        %v4675 = vmax.f32 %v4531, 0.0
        %v4676 = vmax.f32 %v4533, 0.0
        %v4677 = vmax.f32 %v4537, 0.0
        %v4678 = vmax.f32 %v4539, 0.0
        %v4679 = vmax.f32 %v4541, 0.0
        %v4680 = vmax.f32 %v4543, 0.0
        %v4681 = vmax.f32 %v4547, 0.0
        %v4682 = vmax.f32 %v4549, 0.0
        %v4683 = vmax.f32 %v4551, 0.0
        %v4684 = vmax.f32 %v4553, 0.0
        %v4685 = vmax.f32 %v4557, 0.0
        %v4686 = vmax.f32 %v4559, 0.0
        %v4687 = vmax.f32 %v4561, 0.0
        %v4688 = vmax.f32 %v4563, 0.0
        %v4689 = vmax.f32 %v4567, 0.0
        %v4690 = vmax.f32 %v4569, 0.0
        %v4691 = vmax.f32 %v4571, 0.0
        %v4692 = vmax.f32 %v4573, 0.0
        %v4693 = vmax.f32 %v4577, 0.0
        %v4694 = vmax.f32 %v4579, 0.0
        %v4695 = vmax.f32 %v4581, 0.0
        %v4696 = vmax.f32 %v4583, 0.0
        %v4697 = vmax.f32 %v4587, 0.0
        %v4698 = vmax.f32 %v4589, 0.0
        %v4699 = vmax.f32 %v4591, 0.0
        %v4700 = vmax.f32 %v4593, 0.0
        %v4701 = vmax.f32 %v4597, 0.0
        %v4702 = vmax.f32 %v4599, 0.0
        %v4703 = vmax.f32 %v4601, 0.0
        %v4704 = vmax.f32 %v4603, 0.0
        %v4705 = vmax.f32 %v4607, 0.0
        %v4706 = vmax.f32 %v4609, 0.0
        %v4707 = vmax.f32 %v4611, 0.0
        %v4708 = vmax.f32 %v4613, 0.0
        %v4709 = vmax.f32 %v4617, 0.0
        %v4710 = vmax.f32 %v4619, 0.0
        %v4711 = vmax.f32 %v4621, 0.0
        %v4712 = vmax.f32 %v4623, 0.0
        %v4713 = vmax.f32 %v4627, 0.0
        %v4714 = vmax.f32 %v4629, 0.0
        %v4715 = vmax.f32 %v4631, 0.0
        %v4716 = vmax.f32 %v4633, 0.0
        %v4717 = vmax.f32 %v4637, 0.0
        %v4718 = vmax.f32 %v4639, 0.0
        %v4719 = vmax.f32 %v4641, 0.0
        %v4720 = vmax.f32 %v4643, 0.0
        %v4721 = vmax.f32 %v4647, 0.0
        %v4722 = vmax.f32 %v4649, 0.0
        %v4723 = vmax.f32 %v4651, 0.0
        %v4724 = vmax.f32 %v4653, 0.0
        %v4725 = vmax.f32 %v4657, 0.0
        %v4726 = vmax.f32 %v4659, 0.0
        %v4727 = vmax.f32 %v4661, 0.0
        %v4728 = vmax.f32 %v4663, 0.0
        %v4729 = vpack.c.bf16 %v4667, %v4665
        %v4730 = vpack.c.bf16 %v4668, %v4666
        %v4731 = vpack.c.bf16 %v4671, %v4669
        %v4732 = vpack.c.bf16 %v4672, %v4670
        %v4733 = vpack.c.bf16 %v4675, %v4673
        %v4734 = vpack.c.bf16 %v4676, %v4674
        %v4735 = vpack.c.bf16 %v4679, %v4677
        %v4736 = vpack.c.bf16 %v4680, %v4678
        %v4737 = vpack.c.bf16 %v4683, %v4681
        %v4738 = vpack.c.bf16 %v4684, %v4682
        %v4739 = vpack.c.bf16 %v4687, %v4685
        %v4740 = vpack.c.bf16 %v4688, %v4686
        %v4741 = vpack.c.bf16 %v4691, %v4689
        %v4742 = vpack.c.bf16 %v4692, %v4690
        %v4743 = vpack.c.bf16 %v4695, %v4693
        %v4744 = vpack.c.bf16 %v4696, %v4694
        %v4745 = vpack.c.bf16 %v4699, %v4697
        %v4746 = vpack.c.bf16 %v4700, %v4698
        %v4747 = vpack.c.bf16 %v4703, %v4701
        %v4748 = vpack.c.bf16 %v4704, %v4702
        %v4749 = vpack.c.bf16 %v4707, %v4705
        %v4750 = vpack.c.bf16 %v4708, %v4706
        %v4751 = vpack.c.bf16 %v4711, %v4709
        %v4752 = vpack.c.bf16 %v4712, %v4710
        %v4753 = vpack.c.bf16 %v4715, %v4713
        %v4754 = vpack.c.bf16 %v4716, %v4714
        %v4755 = vpack.c.bf16 %v4719, %v4717
        %v4756 = vpack.c.bf16 %v4720, %v4718
        %v4757 = vpack.c.bf16 %v4723, %v4721
        %v4758 = vpack.c.bf16 %v4724, %v4722
        %v4759 = vpack.c.bf16 %v4727, %v4725
        %v4760 = vpack.c.bf16 %v4728, %v4726
        %v4761 = vld [vmem:[%s7] sm:$0xf]
        %v4762 = vld [vmem:[%s7 + $0x4] sm:$0xf]
        %v4763 = vld [vmem:[%s7 + $0x8] sm:$0xf]
        %v4764 = vld [vmem:[%s7 + $0xc] sm:$0xf]
        %v4765 = vld [vmem:[%s7 + $0x10] sm:$0xf]
        %v4766 = vld [vmem:[%s7 + $0x14] sm:$0xf]
        %v4767 = vld [vmem:[%s7 + $0x18] sm:$0xf]
        %v4768 = vld [vmem:[%s7 + $0x1c] sm:$0xf]
        %v4769 = vld [vmem:[%s7 + $0x20] sm:$0xf]
        %v4770 = vld [vmem:[%s7 + $0x24] sm:$0xf]
        %v4771 = vld [vmem:[%s7 + $0x28] sm:$0xf]
        %v4772 = vld [vmem:[%s7 + $0x2c] sm:$0xf]
        %v4773 = vld [vmem:[%s7 + $0x30] sm:$0xf]
        %v4774 = vld [vmem:[%s7 + $0x34] sm:$0xf]
        %v4775 = vld [vmem:[%s7 + $0x38] sm:$0xf]
        %v4776 = vld [vmem:[%s7 + $0x3c] sm:$0xf]
        %v4777 = vld [vmem:[%s7 + $0x40] sm:$0xf]
        %v4778 = vld [vmem:[%s7 + $0x44] sm:$0xf]
        %v4779 = vld [vmem:[%s7 + $0x48] sm:$0xf]
        %v4780 = vld [vmem:[%s7 + $0x4c] sm:$0xf]
        %v4781 = vld [vmem:[%s7 + $0x50] sm:$0xf]
        %v4782 = vld [vmem:[%s7 + $0x54] sm:$0xf]
        %v4783 = vld [vmem:[%s7 + $0x58] sm:$0xf]
        %v4784 = vld [vmem:[%s7 + $0x5c] sm:$0xf]
        %v4785 = vld [vmem:[%s7 + $0x60] sm:$0xf]
        %v4786 = vld [vmem:[%s7 + $0x64] sm:$0xf]
        %v4787 = vld [vmem:[%s7 + $0x68] sm:$0xf]
        %v4788 = vld [vmem:[%s7 + $0x6c] sm:$0xf]
        %v4789 = vld [vmem:[%s7 + $0x70] sm:$0xf]
        %v4790 = vld [vmem:[%s7 + $0x74] sm:$0xf]
        %v4791 = vld [vmem:[%s7 + $0x78] sm:$0xf]
        %v4792 = vld [vmem:[%s7 + $0x7c] sm:$0xf]
        %v4793 = vld [vmem:[%s8] sm:$0x1]
        %v4795 = vlaneseq
        %v4796 = vshrl.u32 %v4795, 7
        %v4797 = vsub.s32 0, %v4796
        %v4798 = vrot.slane %v4793, %v4797
        %v4832 = vunpack.c.l.b16 %v4761
        %v4833 = vunpack.c.l.b16 %v4762
        %v4834 = vunpack.c.l.b16 %v4763
        %v4835 = vunpack.c.l.b16 %v4764
        %v4836 = vunpack.c.l.b16 %v4765
        %v4837 = vunpack.c.l.b16 %v4766
        %v4838 = vunpack.c.l.b16 %v4767
        %v4839 = vunpack.c.l.b16 %v4768
        %v4840 = vunpack.c.l.b16 %v4769
        %v4841 = vunpack.c.l.b16 %v4770
        %v4842 = vunpack.c.l.b16 %v4771
        %v4843 = vunpack.c.l.b16 %v4772
        %v4844 = vunpack.c.l.b16 %v4773
        %v4845 = vunpack.c.l.b16 %v4774
        %v4846 = vunpack.c.l.b16 %v4775
        %v4847 = vunpack.c.l.b16 %v4776
        %v4848 = vunpack.c.l.b16 %v4777
        %v4849 = vunpack.c.l.b16 %v4778
        %v4850 = vunpack.c.l.b16 %v4779
        %v4851 = vunpack.c.l.b16 %v4780
        %v4852 = vunpack.c.l.b16 %v4781
        %v4853 = vunpack.c.l.b16 %v4782
        %v4854 = vunpack.c.l.b16 %v4783
        %v4855 = vunpack.c.l.b16 %v4784
        %v4856 = vunpack.c.l.b16 %v4785
        %v4857 = vunpack.c.l.b16 %v4786
        %v4858 = vunpack.c.l.b16 %v4787
        %v4859 = vunpack.c.l.b16 %v4788
        %v4860 = vunpack.c.l.b16 %v4789
        %v4861 = vunpack.c.l.b16 %v4790
        %v4862 = vunpack.c.l.b16 %v4791
        %v4863 = vunpack.c.l.b16 %v4792
        %v4864 = vpack.c.b16 %v4833, %v4832
        %v4865 = vpack.c.b16 %v4835, %v4834
        %v4866 = vpack.c.b16 %v4837, %v4836
        %v4867 = vpack.c.b16 %v4839, %v4838
        %v4868 = vpack.c.b16 %v4841, %v4840
        %v4869 = vpack.c.b16 %v4843, %v4842
        %v4870 = vpack.c.b16 %v4845, %v4844
        %v4871 = vpack.c.b16 %v4847, %v4846
        %v4872 = vpack.c.b16 %v4849, %v4848
        %v4873 = vpack.c.b16 %v4851, %v4850
        %v4874 = vpack.c.b16 %v4853, %v4852
        %v4875 = vpack.c.b16 %v4855, %v4854
        %v4876 = vpack.c.b16 %v4857, %v4856
        %v4877 = vpack.c.b16 %v4859, %v4858
        %v4878 = vpack.c.b16 %v4861, %v4860
        %v4879 = vpack.c.b16 %v4863, %v4862
        %4896 = vmatprep.subr.bf16.mxu0 0
        %4897 = vmatpush1.bf16.msra.mxu0 %v4864
        %4898 = vmatprep.subr.bf16.mxu0 0
        %4899 = vmatpush1.bf16.msra.mxu0 %v4865
        %4900 = vmatprep.subr.bf16.mxu0 0
        %4901 = vmatpush1.bf16.msra.mxu0 %v4866
        %4902 = vmatprep.subr.bf16.mxu0 0
        %4903 = vmatpush1.bf16.msra.mxu0 %v4867
        %4904 = vmatprep.subr.bf16.mxu0 0
        %4905 = vmatpush1.bf16.msra.mxu0 %v4868
        %4906 = vmatprep.subr.bf16.mxu0 0
        %4907 = vmatpush1.bf16.msra.mxu0 %v4869
        %4908 = vmatprep.subr.bf16.mxu0 0
        %4909 = vmatpush1.bf16.msra.mxu0 %v4870
        %4910 = vmatprep.subr.bf16.mxu0 0
        %4911 = vmatpush1.bf16.msra.mxu0 %v4871
        %4912 = vmatprep.subr.bf16.mxu0 0
        %4913 = vmatpush1.bf16.msra.mxu0 %v4872
        %4914 = vmatprep.subr.bf16.mxu0 0
        %4915 = vmatpush1.bf16.msra.mxu0 %v4873
        %4916 = vmatprep.subr.bf16.mxu0 0
        %4917 = vmatpush1.bf16.msra.mxu0 %v4874
        %4918 = vmatprep.subr.bf16.mxu0 0
        %4919 = vmatpush1.bf16.msra.mxu0 %v4875
        %4920 = vmatprep.subr.bf16.mxu0 0
        %4921 = vmatpush1.bf16.msra.mxu0 %v4876
        %4922 = vmatprep.subr.bf16.mxu0 0
        %4923 = vmatpush1.bf16.msra.mxu0 %v4877
        %4924 = vmatprep.subr.bf16.mxu0 0
        %4925 = vmatpush1.bf16.msra.mxu0 %v4878
        %4926 = vmatprep.subr.bf16.mxu0 0
        %4927 = vmatpush1.bf16.msra.mxu0 %v4879
        %4928 = vmatprep.mubr.bf16.mxu0 %v4730
        %4929 = vmatmul.mubr.bf16.gmra.mrb[0].mxu0 %v4729
        %v4930 = vpop.f32.mrb[0].mxu0
        %v4931 = vadd.f32 %v4798, %v4930
        %v4932 = vpop.f32.mrb[0].mxu0
        %v4933 = vpop.f32.mrb[0].mxu0
        %v4934 = vadd.f32 %v4798, %v4933
        %v4935 = vpop.f32.mrb[0].mxu0
        %4936 = vmatprep.mubr.bf16.mxu0 %v4732
        %4937 = vmatmul.mubr.bf16.gmra.mrb[0].mxu0 %v4731
        %v4938 = vpop.f32.mrb[0].mxu0
        %v4939 = vadd.f32 %v4798, %v4938
        %v4940 = vpop.f32.mrb[0].mxu0
        %v4941 = vpop.f32.mrb[0].mxu0
        %v4942 = vadd.f32 %v4798, %v4941
        %v4943 = vpop.f32.mrb[0].mxu0
        %4944 = vmatprep.mubr.bf16.mxu0 %v4734
        %4945 = vmatmul.mubr.bf16.gmra.mrb[0].mxu0 %v4733
        %v4946 = vpop.f32.mrb[0].mxu0
        %v4947 = vadd.f32 %v4798, %v4946
        %v4948 = vpop.f32.mrb[0].mxu0
        %v4949 = vpop.f32.mrb[0].mxu0
        %v4950 = vadd.f32 %v4798, %v4949
        %v4951 = vpop.f32.mrb[0].mxu0
        %4952 = vmatprep.mubr.bf16.mxu0 %v4736
        %4953 = vmatmul.mubr.bf16.gmra.mrb[0].mxu0 %v4735
        %v4954 = vpop.f32.mrb[0].mxu0
        %v4955 = vadd.f32 %v4798, %v4954
        %v4956 = vpop.f32.mrb[0].mxu0
        %v4957 = vpop.f32.mrb[0].mxu0
        %v4958 = vadd.f32 %v4798, %v4957
        %v4959 = vpop.f32.mrb[0].mxu0
        %4960 = vmatprep.mubr.bf16.mxu0 %v4738
        %4961 = vmatmul.mubr.bf16.gmra.mrb[0].mxu0 %v4737
        %v4962 = vpop.f32.mrb[0].mxu0
        %v4963 = vadd.f32 %v4798, %v4962
        %v4964 = vpop.f32.mrb[0].mxu0
        %v4965 = vpop.f32.mrb[0].mxu0
        %v4966 = vadd.f32 %v4798, %v4965
        %v4967 = vpop.f32.mrb[0].mxu0
        %4968 = vmatprep.mubr.bf16.mxu0 %v4740
        %4969 = vmatmul.mubr.bf16.gmra.mrb[0].mxu0 %v4739
        %v4970 = vpop.f32.mrb[0].mxu0
        %v4971 = vadd.f32 %v4798, %v4970
        %v4972 = vpop.f32.mrb[0].mxu0
        %v4973 = vpop.f32.mrb[0].mxu0
        %v4974 = vadd.f32 %v4798, %v4973
        %v4975 = vpop.f32.mrb[0].mxu0
        %4976 = vmatprep.mubr.bf16.mxu0 %v4742
        %4977 = vmatmul.mubr.bf16.gmra.mrb[0].mxu0 %v4741
        %v4978 = vpop.f32.mrb[0].mxu0
        %v4979 = vadd.f32 %v4798, %v4978
        %v4980 = vpop.f32.mrb[0].mxu0
        %v4981 = vpop.f32.mrb[0].mxu0
        %v4982 = vadd.f32 %v4798, %v4981
        %v4983 = vpop.f32.mrb[0].mxu0
        %4984 = vmatprep.mubr.bf16.mxu0 %v4744
        %4985 = vmatmul.mubr.bf16.gmra.mrb[0].mxu0 %v4743
        %v4986 = vpop.f32.mrb[0].mxu0
        %v4987 = vadd.f32 %v4798, %v4986
        %v4988 = vpop.f32.mrb[0].mxu0
        %v4989 = vpop.f32.mrb[0].mxu0
        %v4990 = vadd.f32 %v4798, %v4989
        %v4991 = vpop.f32.mrb[0].mxu0
        %4992 = vmatprep.mubr.bf16.mxu0 %v4746
        %4993 = vmatmul.mubr.bf16.gmra.mrb[0].mxu0 %v4745
        %v4994 = vpop.f32.mrb[0].mxu0
        %v4995 = vadd.f32 %v4798, %v4994
        %v4996 = vpop.f32.mrb[0].mxu0
        %v4997 = vpop.f32.mrb[0].mxu0
        %v4998 = vadd.f32 %v4798, %v4997
        %v4999 = vpop.f32.mrb[0].mxu0
        %5000 = vmatprep.mubr.bf16.mxu0 %v4748
        %5001 = vmatmul.mubr.bf16.gmra.mrb[0].mxu0 %v4747
        %v5002 = vpop.f32.mrb[0].mxu0
        %v5003 = vadd.f32 %v4798, %v5002
        %v5004 = vpop.f32.mrb[0].mxu0
        %v5005 = vpop.f32.mrb[0].mxu0
        %v5006 = vadd.f32 %v4798, %v5005
        %v5007 = vpop.f32.mrb[0].mxu0
        %5008 = vmatprep.mubr.bf16.mxu0 %v4750
        %5009 = vmatmul.mubr.bf16.gmra.mrb[0].mxu0 %v4749
        %v5010 = vpop.f32.mrb[0].mxu0
        %v5011 = vadd.f32 %v4798, %v5010
        %v5012 = vpop.f32.mrb[0].mxu0
        %v5013 = vpop.f32.mrb[0].mxu0
        %v5014 = vadd.f32 %v4798, %v5013
        %v5015 = vpop.f32.mrb[0].mxu0
        %5016 = vmatprep.mubr.bf16.mxu0 %v4752
        %5017 = vmatmul.mubr.bf16.gmra.mrb[0].mxu0 %v4751
        %v5018 = vpop.f32.mrb[0].mxu0
        %v5019 = vadd.f32 %v4798, %v5018
        %v5020 = vpop.f32.mrb[0].mxu0
        %v5021 = vpop.f32.mrb[0].mxu0
        %v5022 = vadd.f32 %v4798, %v5021
        %v5023 = vpop.f32.mrb[0].mxu0
        %5024 = vmatprep.mubr.bf16.mxu0 %v4754
        %5025 = vmatmul.mubr.bf16.gmra.mrb[0].mxu0 %v4753
        %v5026 = vpop.f32.mrb[0].mxu0
        %v5027 = vadd.f32 %v4798, %v5026
        %v5028 = vpop.f32.mrb[0].mxu0
        %v5029 = vpop.f32.mrb[0].mxu0
        %v5030 = vadd.f32 %v4798, %v5029
        %v5031 = vpop.f32.mrb[0].mxu0
        %5032 = vmatprep.mubr.bf16.mxu0 %v4756
        %5033 = vmatmul.mubr.bf16.gmra.mrb[0].mxu0 %v4755
        %v5034 = vpop.f32.mrb[0].mxu0
        %v5035 = vadd.f32 %v4798, %v5034
        %v5036 = vpop.f32.mrb[0].mxu0
        %v5037 = vpop.f32.mrb[0].mxu0
        %v5038 = vadd.f32 %v4798, %v5037
        %v5039 = vpop.f32.mrb[0].mxu0
        %5040 = vmatprep.mubr.bf16.mxu0 %v4758
        %5041 = vmatmul.mubr.bf16.gmra.mrb[0].mxu0 %v4757
        %v5042 = vpop.f32.mrb[0].mxu0
        %v5043 = vadd.f32 %v4798, %v5042
        %v5044 = vpop.f32.mrb[0].mxu0
        %v5045 = vpop.f32.mrb[0].mxu0
        %v5046 = vadd.f32 %v4798, %v5045
        %v5047 = vpop.f32.mrb[0].mxu0
        %5048 = vmatprep.mubr.bf16.mxu0 %v4760
        %5049 = vmatmul.mubr.bf16.gmra.mrb[0].mxu0 %v4759
        %v5050 = vpop.f32.mrb[0].mxu0
        %v5051 = vadd.f32 %v4798, %v5050
        %v5052 = vpop.f32.mrb[0].mxu0
        %v5053 = vpop.f32.mrb[0].mxu0
        %v5054 = vadd.f32 %v4798, %v5053
        %v5055 = vpop.f32.mrb[0].mxu0
        %5056 = vdwg.mxu0
        %v5057 = vmax.f32 %v4931, 0.0
        %v5058 = vmax.f32 %v4934, 0.0
        %v5059 = vmax.f32 %v4939, 0.0
        %v5060 = vmax.f32 %v4942, 0.0
        %v5061 = vmax.f32 %v4947, 0.0
        %v5062 = vmax.f32 %v4950, 0.0
        %v5063 = vmax.f32 %v4955, 0.0
        %v5064 = vmax.f32 %v4958, 0.0
        %v5065 = vmax.f32 %v4963, 0.0
        %v5066 = vmax.f32 %v4966, 0.0
        %v5067 = vmax.f32 %v4971, 0.0
        %v5068 = vmax.f32 %v4974, 0.0
        %v5069 = vmax.f32 %v4979, 0.0
        %v5070 = vmax.f32 %v4982, 0.0
        %v5071 = vmax.f32 %v4987, 0.0
        %v5072 = vmax.f32 %v4990, 0.0
        %v5073 = vmax.f32 %v4995, 0.0
        %v5074 = vmax.f32 %v4998, 0.0
        %v5075 = vmax.f32 %v5003, 0.0
        %v5076 = vmax.f32 %v5006, 0.0
        %v5077 = vmax.f32 %v5011, 0.0
        %v5078 = vmax.f32 %v5014, 0.0
        %v5079 = vmax.f32 %v5019, 0.0
        %v5080 = vmax.f32 %v5022, 0.0
        %v5081 = vmax.f32 %v5027, 0.0
        %v5082 = vmax.f32 %v5030, 0.0
        %v5083 = vmax.f32 %v5035, 0.0
        %v5084 = vmax.f32 %v5038, 0.0
        %v5085 = vmax.f32 %v5043, 0.0
        %v5086 = vmax.f32 %v5046, 0.0
        %v5087 = vmax.f32 %v5051, 0.0
        %v5088 = vmax.f32 %v5054, 0.0
        %v5089 = vpack.c.bf16 %v5058, %v5057
        %v5090 = vpack.c.bf16 %v5060, %v5059
        %v5091 = vpack.c.bf16 %v5062, %v5061
        %v5092 = vpack.c.bf16 %v5064, %v5063
        %v5093 = vpack.c.bf16 %v5066, %v5065
        %v5094 = vpack.c.bf16 %v5068, %v5067
        %v5095 = vpack.c.bf16 %v5070, %v5069
        %v5096 = vpack.c.bf16 %v5072, %v5071
        %v5097 = vpack.c.bf16 %v5074, %v5073
        %v5098 = vpack.c.bf16 %v5076, %v5075
        %v5099 = vpack.c.bf16 %v5078, %v5077
        %v5100 = vpack.c.bf16 %v5080, %v5079
        %v5101 = vpack.c.bf16 %v5082, %v5081
        %v5102 = vpack.c.bf16 %v5084, %v5083
        %v5103 = vpack.c.bf16 %v5086, %v5085
        %v5104 = vpack.c.bf16 %v5088, %v5087
        %v5121 = vunpack.c.l.b16 %v5089
        %v5122 = vunpack.c.h.b16 %v5089
        %v5123 = vunpack.c.l.b16 %v5090
        %v5124 = vunpack.c.h.b16 %v5090
        %v5125 = vunpack.c.l.b16 %v5091
        %v5126 = vunpack.c.h.b16 %v5091
        %v5127 = vunpack.c.l.b16 %v5092
        %v5128 = vunpack.c.h.b16 %v5092
        %v5129 = vunpack.c.l.b16 %v5093
        %v5130 = vunpack.c.h.b16 %v5093
        %v5131 = vunpack.c.l.b16 %v5094
        %v5132 = vunpack.c.h.b16 %v5094
        %v5133 = vunpack.c.l.b16 %v5095
        %v5134 = vunpack.c.h.b16 %v5095
        %v5135 = vunpack.c.l.b16 %v5096
        %v5136 = vunpack.c.h.b16 %v5096
        %v5137 = vunpack.c.l.b16 %v5097
        %v5138 = vunpack.c.h.b16 %v5097
        %v5139 = vunpack.c.l.b16 %v5098
        %v5140 = vunpack.c.h.b16 %v5098
        %v5141 = vunpack.c.l.b16 %v5099
        %v5142 = vunpack.c.h.b16 %v5099
        %v5143 = vunpack.c.l.b16 %v5100
        %v5144 = vunpack.c.h.b16 %v5100
        %v5145 = vunpack.c.l.b16 %v5101
        %v5146 = vunpack.c.h.b16 %v5101
        %v5147 = vunpack.c.l.b16 %v5102
        %v5148 = vunpack.c.h.b16 %v5102
        %v5149 = vunpack.c.l.b16 %v5103
        %v5150 = vunpack.c.h.b16 %v5103
        %v5151 = vunpack.c.l.b16 %v5104
        %v5152 = vunpack.c.h.b16 %v5104
        %v5153 = vpack.c.b16 %v5121, %v5121
        %v5154 = vpack.c.b16 %v5122, %v5122
        %v5155 = vpack.c.b16 %v5123, %v5123
        %v5156 = vpack.c.b16 %v5124, %v5124
        %v5157 = vpack.c.b16 %v5125, %v5125
        %v5158 = vpack.c.b16 %v5126, %v5126
        %v5159 = vpack.c.b16 %v5127, %v5127
        %v5160 = vpack.c.b16 %v5128, %v5128
        %v5161 = vpack.c.b16 %v5129, %v5129
        %v5162 = vpack.c.b16 %v5130, %v5130
        %v5163 = vpack.c.b16 %v5131, %v5131
        %v5164 = vpack.c.b16 %v5132, %v5132
        %v5165 = vpack.c.b16 %v5133, %v5133
        %v5166 = vpack.c.b16 %v5134, %v5134
        %v5167 = vpack.c.b16 %v5135, %v5135
        %v5168 = vpack.c.b16 %v5136, %v5136
        %v5169 = vpack.c.b16 %v5137, %v5137
        %v5170 = vpack.c.b16 %v5138, %v5138
        %v5171 = vpack.c.b16 %v5139, %v5139
        %v5172 = vpack.c.b16 %v5140, %v5140
        %v5173 = vpack.c.b16 %v5141, %v5141
        %v5174 = vpack.c.b16 %v5142, %v5142
        %v5175 = vpack.c.b16 %v5143, %v5143
        %v5176 = vpack.c.b16 %v5144, %v5144
        %v5177 = vpack.c.b16 %v5145, %v5145
        %v5178 = vpack.c.b16 %v5146, %v5146
        %v5179 = vpack.c.b16 %v5147, %v5147
        %v5180 = vpack.c.b16 %v5148, %v5148
        %v5181 = vpack.c.b16 %v5149, %v5149
        %v5182 = vpack.c.b16 %v5150, %v5150
        %v5183 = vpack.c.b16 %v5151, %v5151
        %v5184 = vpack.c.b16 %v5152, %v5152
        %5217 = vst [vmem:[%s349] sm:$0xf] %v5153
        %5218 = vst [vmem:[%s349 + $0x4] sm:$0xf] %v5154
        %5219 = vst [vmem:[%s349 + $0x8] sm:$0xf] %v5155
        %5220 = vst [vmem:[%s349 + $0xc] sm:$0xf] %v5156
        %5221 = vst [vmem:[%s349 + $0x10] sm:$0xf] %v5157
        %5222 = vst [vmem:[%s349 + $0x14] sm:$0xf] %v5158
        %5223 = vst [vmem:[%s349 + $0x18] sm:$0xf] %v5159
        %5224 = vst [vmem:[%s349 + $0x1c] sm:$0xf] %v5160
        %5225 = vst [vmem:[%s349 + $0x20] sm:$0xf] %v5161
        %5226 = vst [vmem:[%s349 + $0x24] sm:$0xf] %v5162
        %5227 = vst [vmem:[%s349 + $0x28] sm:$0xf] %v5163
        %5228 = vst [vmem:[%s349 + $0x2c] sm:$0xf] %v5164
        %5229 = vst [vmem:[%s349 + $0x30] sm:$0xf] %v5165
        %5230 = vst [vmem:[%s349 + $0x34] sm:$0xf] %v5166
        %5231 = vst [vmem:[%s349 + $0x38] sm:$0xf] %v5167
        %5232 = vst [vmem:[%s349 + $0x3c] sm:$0xf] %v5168
        %5233 = vst [vmem:[%s349 + $0x40] sm:$0xf] %v5169
        %5234 = vst [vmem:[%s349 + $0x44] sm:$0xf] %v5170
        %5235 = vst [vmem:[%s349 + $0x48] sm:$0xf] %v5171
        %5236 = vst [vmem:[%s349 + $0x4c] sm:$0xf] %v5172
        %5237 = vst [vmem:[%s349 + $0x50] sm:$0xf] %v5173
        %5238 = vst [vmem:[%s349 + $0x54] sm:$0xf] %v5174
        %5239 = vst [vmem:[%s349 + $0x58] sm:$0xf] %v5175
        %5240 = vst [vmem:[%s349 + $0x5c] sm:$0xf] %v5176
        %5241 = vst [vmem:[%s349 + $0x60] sm:$0xf] %v5177
        %5242 = vst [vmem:[%s349 + $0x64] sm:$0xf] %v5178
        %5243 = vst [vmem:[%s349 + $0x68] sm:$0xf] %v5179
        %5244 = vst [vmem:[%s349 + $0x6c] sm:$0xf] %v5180
        %5245 = vst [vmem:[%s349 + $0x70] sm:$0xf] %v5181
        %5246 = vst [vmem:[%s349 + $0x74] sm:$0xf] %v5182
        %5247 = vst [vmem:[%s349 + $0x78] sm:$0xf] %v5183
        %5248 = vst [vmem:[%s349 + $0x7c] sm:$0xf] %v5184
        %s5249 = smul.u32 32, %s21
        %p5250 = scmp.lt.s32.totalorder %s5249, 63
        %s5251 = scalar_select %p5250, %s5249, 63
        %s5252 = smul.addr %s5251, 4
        %s5253 = scalar_lea.vmem %s9, %s5252
        // Predicated region
        $region61: #{dqn_forward.1} parent=55 // pred_check
          %p5254 = pneg %p233
        $region62: #{dqn_forward.1} parent=55 // pred_check_branch
          %5256 = sbr.rel (%p5254) target = $region64
        $region63: #{dqn_forward.1} parent=55 // pred_region
          %s5257 = smul.u32 32, %s21
        $region64: #{dqn_forward.1} parent=55 // pred_fallthru
          _
      $region56: #{dqn_forward.1} parent=5 // pred_fallthru
        _
      %p5258 = scmp.le.s32.totalorder 2, %s16
      // Predicated region
      $region65: #{dqn_forward.1} parent=5 // pred_check
        %p5259 = pneg %p5258
      $region66: #{dqn_forward.1} parent=5 // pred_check_branch
        %5261 = sbr.rel (%p5259) target = $region68
      $region67: #{dqn_forward.1} parent=5 // pred_region
        %s5262 = ssub.s32 %s16, 2
        // Predicated region
        $region69: #{dqn_forward.1} parent=67 // pred_check
          %p5263 = pneg %p239
        $region70: #{dqn_forward.1} parent=67 // pred_check_branch
          %5265 = sbr.rel (%p5263) target = $region72
        $region71: #{dqn_forward.1} parent=67 // pred_region
          %s5266 = smul.u32 32, %s22
          %p5267 = scmp.lt.s32.totalorder %s5266, 63
          %s5268 = scalar_select %p5267, %s5266, 63
          %s5269 = smul.addr %s5268, 4
          %s5270 = scalar_lea.vmem %s9, %s5269
        $region72: #{dqn_forward.1} parent=67 // pred_fallthru
          _
      $region68: #{dqn_forward.1} parent=5 // pred_fallthru
        _
    $region6: #{dqn_forward.1} parent=1 // loop_footer
      %s20 = sadd.s32 1, %s16
    $region7: #{dqn_forward.1} parent=1 // loop_footer_branch
      %15 = sbr.rel target = $region3
    $region8: #{dqn_forward.1} parent=1 // loop_exit
      _
    %5271 = vsyncpa [#allocation3], 1
    %s5272 = scalar_lea.sflag [#allocation3], 1
    %5273 = vsyncpa %s5272, 1

</llo_original>
